<compile_context>
chip_gen: v5e
topology: v5e:2x2
jax: 0.10.0
libtpu: 0.0.40
codegen_flags: <defaults>
</compile_context>

<pallas_src>
import jax
import jax.numpy as jnp
from jax import lax
from jax.experimental import pallas as pl
from jax.experimental.pallas import tpu as pltpu


def _round_up(x, m):
    return (x + m - 1) // m * m


# ----------------------------- Pallas kernel ---------------------------------
def sent_attention_kernel(
    s_ref,       # (S, D, bt)    bf16  feature-major input (batch on lanes)
    wx_ref,      # (3*GP, D)     bf16  fused input-proj weight, gates [r;z;n], dirs [fwd;bwd;pad]
    w_ref,       # (WROWS, GP)   f32   [w_rec(3GP); w_att(GP); w_cls1(GP); w_cls2(C); pad]
    col_ref,     # (CROWS, 1)    f32   [bx(3GP); bh_n(GP); b_att(GP); w_ctx(GP); b1(GP); b2(C); pad]
    pred_ref,    # out: (C, bt)  f32   lane-dense output
    outs_ref,    # scratch (S, GP, bt) f32 : per-step GRU outputs [h_f; h_b; 0]
    logit_ref,   # scratch (S, 1, bt)  f32 : per-step attention logits
):
    S, _, bt = s_ref.shape
    GP = outs_ref.shape[1]            # padded 2H (24)
    C = pred_ref.shape[0]
    G3 = 3 * GP

    # ---- static, sublane-aligned slices of the consolidated slabs (hoisted out of the loop)
    wx    = wx_ref[...]                                   # (3GP, D) bf16
    w_rec = w_ref[0:G3, :]                                # (3GP, GP)
    w_att = w_ref[G3:G3 + GP, :]                          # (GP, GP)
    w_c1  = w_ref[G3 + GP:G3 + 2 * GP, :]                 # (GP, GP)
    w_c2  = w_ref[G3 + 2 * GP:G3 + 2 * GP + C, :]         # (C, GP)
    bx    = col_ref[0:G3, :]                              # (3GP, 1)
    bh_n  = col_ref[G3:G3 + GP, :]                        # (GP, 1)
    b_att = col_ref[G3 + GP:G3 + 2 * GP, :]               # (GP, 1)
    w_ctx = col_ref[G3 + 2 * GP:G3 + 3 * GP, :]           # (GP, 1)
    b1    = col_ref[G3 + 3 * GP:G3 + 4 * GP, :]           # (GP, 1)
    b2    = col_ref[G3 + 4 * GP:G3 + 4 * GP + C, :]       # (C, 1)

    def step(t, h):
        # Fused input projection: all 3 gates / both directions in ONE bf16 MXU push.
        # Depends only on s -> off the serial critical path (loop is fully unrolled).
        gi = jnp.dot(wx, s_ref[t], preferred_element_type=jnp.float32) + bx        # (3GP, bt)
        # Fused recurrent projection: the only matmul on the serial critical path.
        gh = jnp.dot(w_rec, h, preferred_element_type=jnp.float32)                 # (3GP, bt)
        # Gate math in f32 (slices at sublane-aligned offsets 0 / GP / 2GP).
        r = jax.nn.sigmoid(gi[0:GP] + gh[0:GP])
        z = jax.nn.sigmoid(gi[GP:2 * GP] + gh[GP:2 * GP])
        n = jnp.tanh(gi[2 * GP:3 * GP] + r * (gh[2 * GP:3 * GP] + bh_n))
        h_new = (1.0 - z) * n + z * h                                               # (GP, bt)
        outs_ref[t] = h_new                    # out_t == [h_f | h_b | 0-pad]
        # Attention branch (off the h-carry path): u = tanh(W_att @ out + b),
        # logit = <w_ctx, u> via VPU multiply + cross-sublane reduce (no M=1 MXU dispatch).
        u = jnp.tanh(jnp.dot(w_att, h_new, preferred_element_type=jnp.float32) + b_att)
        logit_ref[t] = jnp.sum(w_ctx * u, axis=0, keepdims=True)                    # (1, bt)
        return h_new

    h0 = jnp.zeros((GP, bt), jnp.float32)      # init_hidden(): zeros
    lax.fori_loop(0, S, step, h0, unroll=True)

    # ---- softmax over the sentence axis (slab axis), lane-dense over batch ----
    logits = logit_ref[...]                                   # (S, 1, bt)
    m = jnp.max(logits, axis=0, keepdims=True)                # (1, 1, bt)
    e = jnp.exp(logits - m)
    denom = jnp.sum(e, axis=0, keepdims=True)
    a = e * pl.reciprocal(denom, approx=False)                # exact; denom is tiny
    sent_att = jnp.sum(a * outs_ref[...], axis=0)             # (GP, bt)

    # classifier1 -> relu -> (dropout = identity at inference) -> classifier2
    hid = jax.nn.relu(jnp.dot(w_c1, sent_att, preferred_element_type=jnp.float32) + b1)   # (GP, bt)
    pred_ref[...] = jnp.dot(w_c2, hid, preferred_element_type=jnp.float32) + b2           # (C, bt)


# ------------------------- host-side parameter prep ---------------------------
def _prepare_params(p, H, C, GP):
    """Build feature-major, per-gate-fused, direction-fused, slot-padded weight slabs.

    PyTorch gate order is [r | z | n].  Feature-major means y = W @ x_col, so the PyTorch
    weight matrices are used WITHOUT transpose.  Every gate / attention / classifier block is
    padded to a GP(=24)-row slot so all in-kernel slices are sublane (8) aligned; padded rows
    and columns are zero, which keeps the padded hidden rows exactly 0 through the recurrence.
    """
    f32 = jnp.float32
    G = 2 * H
    D = p["w_ih_f"].shape[1]

    def gate(w, g):              # (3H, X) -> (H, X) rows of gate g (no transpose)
        return w[g * H:(g + 1) * H, :].astype(f32)

    def gate_b(b, g):            # (1, 3H) -> (H, 1) column
        return b[0, g * H:(g + 1) * H].astype(f32)[:, None]

    def pad_to(x, rows, cols):
        return jnp.pad(x, ((0, rows - x.shape[0]), (0, cols - x.shape[1])))

    def colpad(x, rows):
        return jnp.pad(x, ((0, rows - x.shape[0]), (0, 0)))

    # fused input-projection weight: [r; z; n], each slot = [fwd H | bwd H | zero pad] rows
    wx_blocks, wrec_blocks, bx_blocks = [], [], []
    for g in range(3):
        wx_blocks.append(pad_to(
            jnp.concatenate([gate(p["w_ih_f"], g), gate(p["w_ih_b"], g)], axis=0), GP, D))
        # recurrent weight: block-diagonal over directions inside a (GP, GP) slot
        blk = jnp.zeros((GP, GP), f32)
        blk = blk.at[0:H, 0:H].set(gate(p["w_hh_f"], g))
        blk = blk.at[H:G, H:G].set(gate(p["w_hh_b"], g))
        wrec_blocks.append(blk)
        # biases: r/z fold ih+hh; n keeps its hh bias separate (it sits inside r*(.))
        fold = g != 2
        bf = gate_b(p["b_ih_f"], g) + (gate_b(p["b_hh_f"], g) if fold else 0.0)
        bb = gate_b(p["b_ih_b"], g) + (gate_b(p["b_hh_b"], g) if fold else 0.0)
        bx_blocks.append(colpad(jnp.concatenate([bf, bb], axis=0), GP))

    wx = jnp.concatenate(wx_blocks, axis=0).astype(jnp.bfloat16)        # (3GP, D) bf16
    w_rec = jnp.concatenate(wrec_blocks, axis=0)                        # (3GP, GP)

    w_att = pad_to(p["w_att"].astype(f32), GP, GP)                      # (GP, GP)
    w_c1  = pad_to(p["w1"].astype(f32), GP, GP)                         # (GP, GP)
    w_c2  = pad_to(p["w2"].astype(f32), C, GP)                          # (C, GP)
    w_big = jnp.concatenate([w_rec, w_att, w_c1, w_c2], axis=0)
    w_big = jnp.pad(w_big, ((0, _round_up(w_big.shape[0], 8) - w_big.shape[0]), (0, 0)))

    bx    = jnp.concatenate(bx_blocks, axis=0)                          # (3GP, 1)
    bh_n  = colpad(jnp.concatenate([gate_b(p["b_hh_f"], 2), gate_b(p["b_hh_b"], 2)], axis=0), GP)
    b_att = colpad(p["b_att"].astype(f32).reshape(-1, 1), GP)
    w_ctx = colpad(p["w_ctx"].astype(f32).reshape(-1, 1), GP)
    b1    = colpad(p["b1"].astype(f32).reshape(-1, 1), GP)
    b2    = p["b2"].astype(f32).reshape(-1, 1)
    col = jnp.concatenate([bx, bh_n, b_att, w_ctx, b1, b2], axis=0)
    col = jnp.pad(col, ((0, _round_up(col.shape[0], 8) - col.shape[0]), (0, 0)))

    return wx, w_big, col


# ------------------------------- wrapper --------------------------------------
def sent_attention_forward(s, params, *, batch_tile=256,
                           vmem_limit_bytes=48 * 1024 * 1024):
    """batch_tile is the primary tuning knob (multiple of 128; 256-1024 typical.
    On v7x keep B_pad/batch_tile >= 2 for large batches so the "parallel" grid axis
    shards across both TensorCores; raise vmem_limit_bytes toward 64-96 MiB only on
    v5e/v6e (128 MiB physical) if very large tiles are used)."""
    B, S, D = s.shape
    H = params["w_hh_f"].shape[1]
    C = params["w2"].shape[0]
    assert D == 2 * H, "GRU input size must equal word_att_size = 2*GRU_hid"

    GP = _round_up(2 * H, 8)
    wx, w_big, col_big = _prepare_params(params, H, C, GP)

    # Batch rides the lane axis -> tiles are multiples of 128.
    bt = max(128, (batch_tile // 128) * 128)
    B_pad = _round_up(B, 128)
    if B_pad <= bt:
        bt = B_pad                       # single block covering the (padded) batch
    else:
        B_pad = _round_up(B, bt)
    num_blocks = B_pad // bt

    # Feature-major input slab: (S, D, B_pad), bf16 (halves the only large HBM transfer).
    s_fm = jnp.transpose(s, (1, 2, 0)).astype(jnp.bfloat16)
    if B_pad != B:
        s_fm = jnp.pad(s_fm, ((0, 0), (0, 0), (0, B_pad - B)))

    def full_spec(arr):                  # untiled weight slab, same block every grid step
        nd = arr.ndim
        return pl.BlockSpec(arr.shape, lambda b, _n=nd: (0,) * _n)

    grid_spec = pltpu.PrefetchScalarGridSpec(
        num_scalar_prefetch=0,
        grid=(num_blocks,),
        in_specs=[pl.BlockSpec((S, D, bt), lambda b: (0, 0, b)),
                  full_spec(wx), full_spec(w_big), full_spec(col_big)],
        out_specs=pl.BlockSpec((C, bt), lambda b: (0, b)),
        scratch_shapes=[
            pltpu.VMEM((S, GP, bt), jnp.float32),    # per-step GRU outputs
            pltpu.VMEM((S, 1, bt), jnp.float32),     # per-step attention logits
        ],
    )

    pred_fm = pl.pallas_call(
        sent_attention_kernel,
        out_shape=jax.ShapeDtypeStruct((C, B_pad), jnp.float32),
        grid_spec=grid_spec,
        compiler_params=pltpu.CompilerParams(
            dimension_semantics=("parallel",),       # batch tiles shard across TCs (v7x)
            vmem_limit_bytes=vmem_limit_bytes,
        ),
    )(s_fm, wx, w_big, col_big)

    # lane-dense (C, B_pad) -> user-facing (B, C)
    return pred_fm[:, :B].T


# -------------------------- pure-JAX reference ---------------------------------
def sent_attention_ref(s, p):
    B, S, D = s.shape
    H = p["w_hh_f"].shape[1]

    def cell(x, h, w_ih, w_hh, b_ih, b_hh):
        gi = x @ w_ih.T + b_ih
        gh = h @ w_hh.T + b_hh
        r = jax.nn.sigmoid(gi[:, :H] + gh[:, :H])
        z = jax.nn.sigmoid(gi[:, H:2 * H] + gh[:, H:2 * H])
        n = jnp.tanh(gi[:, 2 * H:] + r * gh[:, 2 * H:])
        return (1 - z) * n + z * h

    h_f = jnp.zeros((B, H)); h_b = jnp.zeros((B, H))
    outs, logits = [], []
    for t in range(S):
        x = s[:, t, :]
        h_f = cell(x, h_f, p["w_ih_f"], p["w_hh_f"], p["b_ih_f"][0], p["b_hh_f"][0])
        h_b = cell(x, h_b, p["w_ih_b"], p["w_hh_b"], p["b_ih_b"][0], p["b_hh_b"][0])
        o = jnp.concatenate([h_f, h_b], axis=-1)
        u = jnp.tanh(o @ p["w_att"].T + p["b_att"][0])
        logits.append(u @ p["w_ctx"].T)
        outs.append(o)
    outs = jnp.stack(outs, axis=1)                      # (B, S, D)
    logits = jnp.concatenate(logits, axis=1)            # (B, S)
    a = jax.nn.softmax(logits, axis=1)
    sent_att = jnp.sum(a[:, :, None] * outs, axis=1)
    hid = jax.nn.relu(sent_att @ p["w1"].T + p["b1"][0])
    return hid @ p["w2"].T + p["b2"][0]


# --------------------------------- main ----------------------------------------
if __name__ == "__main__":
    B, S = 4, 8          # batch, sentence count
    H = 10               # GRU_hid_size (fixed by module)
    D = 2 * H            # word_att_size = GRU input/output feature size
    C = 6                # cls_num

    key = jax.random.PRNGKey(0)
    ks = jax.random.split(key, 20)

    def rnd(k, shape, scale=0.1):
        return (scale * jax.random.normal(k, shape)).astype(jnp.float32)

    params = {
        # forward-direction GRU (weight_ih_l0 / weight_hh_l0, gate order [r|z|n])
        "w_ih_f": rnd(ks[0], (3 * H, D)), "w_hh_f": rnd(ks[1], (3 * H, H)),
        "b_ih_f": rnd(ks[2], (1, 3 * H)), "b_hh_f": rnd(ks[3], (1, 3 * H)),
        # reverse-direction GRU weights (run forward-in-time, per the PyTorch loop)
        "w_ih_b": rnd(ks[4], (3 * H, D)), "w_hh_b": rnd(ks[5], (3 * H, H)),
        "b_ih_b": rnd(ks[6], (1, 3 * H)), "b_hh_b": rnd(ks[7], (1, 3 * H)),
        # sent_att_lin: Linear(2H -> 2H)
        "w_att": rnd(ks[8], (D, D)), "b_att": rnd(ks[9], (1, D)),
        # sent_att_context_lin: Linear(2H -> 1, bias=False)
        "w_ctx": rnd(ks[10], (1, D)),
        # classifier1: Linear(2H -> C); classifier2: Linear(C -> C)
        "w1": rnd(ks[11], (C, D)), "b1": rnd(ks[12], (1, C)),
        "w2": rnd(ks[13], (C, C)), "b2": rnd(ks[14], (1, C)),
    }

    s = rnd(ks[15], (B, S, D), scale=1.0)

    pred = jax.block_until_ready(sent_attention_forward(s, params))
    ref = sent_attention_ref(s, params)
    assert pred.shape == (B, C)
    # Tolerance accounts for the bf16 input slab / bf16 input-projection weights
    # (recurrent matmul, gate math, attention, softmax, classifier all stay f32).
    assert jnp.allclose(pred, ref, atol=5e-3, rtol=5e-2), (pred, ref)
    print("KERNEL_OK")
</pallas_src>

<mosaic_0001>
module attributes {stable_mosaic.version = 11 : i64} {
  func.func @sent_attention_kernel(%arg0: i32, %arg1: memref<8x20x128xbf16, #tpu.memory_space<vmem>>, %arg2: memref<72x20xbf16, #tpu.memory_space<vmem>>, %arg3: memref<128x24xf32, #tpu.memory_space<vmem>>, %arg4: memref<176x1xf32, #tpu.memory_space<vmem>>, %arg5: memref<6x128xf32, #tpu.memory_space<vmem>>, %arg6: memref<8x24x128xf32, #tpu.memory_space<vmem>>, %arg7: memref<8x1x128xf32, #tpu.memory_space<vmem>>) attributes {dimension_semantics = [#tpu.dimension_semantics<parallel>], iteration_bounds = array<i64: 1>, scalar_prefetch = 0 : i64, scratch_operands = 2 : i64, tpu.core_type = #tpu.core_type<tc>, window_params = [{transform_indices = @transform_0, window_bounds = array<i64: 8, 20, 128>}, {pipeline_mode = #tpu.pipeline_mode<synchronous>, transform_indices = @transform_1, window_bounds = array<i64: 72, 20>}, {pipeline_mode = #tpu.pipeline_mode<synchronous>, transform_indices = @transform_2, window_bounds = array<i64: 128, 24>}, {pipeline_mode = #tpu.pipeline_mode<synchronous>, transform_indices = @transform_3, window_bounds = array<i64: 176, 1>}, {transform_indices = @transform_4, window_bounds = array<i64: 6, 128>}]} {
    %c0 = arith.constant 0 : index
    %c0_0 = arith.constant 0 : index
    %0 = vector.load %arg2[%c0, %c0_0] : memref<72x20xbf16, #tpu.memory_space<vmem>>, vector<72x20xbf16>
    %c0_1 = arith.constant 0 : index
    %c0_2 = arith.constant 0 : index
    %1 = vector.load %arg3[%c0_1, %c0_2] : memref<128x24xf32, #tpu.memory_space<vmem>>, vector<72x24xf32>
    %c72 = arith.constant 72 : index
    %c0_3 = arith.constant 0 : index
    %2 = vector.load %arg3[%c72, %c0_3] : memref<128x24xf32, #tpu.memory_space<vmem>>, vector<24x24xf32>
    %c96 = arith.constant 96 : index
    %c0_4 = arith.constant 0 : index
    %3 = vector.load %arg3[%c96, %c0_4] : memref<128x24xf32, #tpu.memory_space<vmem>>, vector<24x24xf32>
    %c120 = arith.constant 120 : index
    %c0_5 = arith.constant 0 : index
    %4 = vector.load %arg3[%c120, %c0_5] : memref<128x24xf32, #tpu.memory_space<vmem>>, vector<6x24xf32>
    %c0_6 = arith.constant 0 : index
    %c0_7 = arith.constant 0 : index
    %5 = vector.load %arg4[%c0_6, %c0_7] : memref<176x1xf32, #tpu.memory_space<vmem>>, vector<72x1xf32>
    %c72_8 = arith.constant 72 : index
    %c0_9 = arith.constant 0 : index
    %6 = vector.load %arg4[%c72_8, %c0_9] : memref<176x1xf32, #tpu.memory_space<vmem>>, vector<24x1xf32>
    %c96_10 = arith.constant 96 : index
    %c0_11 = arith.constant 0 : index
    %7 = vector.load %arg4[%c96_10, %c0_11] : memref<176x1xf32, #tpu.memory_space<vmem>>, vector<24x1xf32>
    %c120_12 = arith.constant 120 : index
    %c0_13 = arith.constant 0 : index
    %8 = vector.load %arg4[%c120_12, %c0_13] : memref<176x1xf32, #tpu.memory_space<vmem>>, vector<24x1xf32>
    %c144 = arith.constant 144 : index
    %c0_14 = arith.constant 0 : index
    %9 = vector.load %arg4[%c144, %c0_14] : memref<176x1xf32, #tpu.memory_space<vmem>>, vector<24x1xf32>
    %c168 = arith.constant 168 : index
    %c0_15 = arith.constant 0 : index
    %10 = vector.load %arg4[%c168, %c0_15] : memref<176x1xf32, #tpu.memory_space<vmem>>, vector<6x1xf32>
    %cst = arith.constant 0.000000e+00 : f32
    %11 = vector.broadcast %cst : f32 to vector<24x128xf32>
    %c0_i32 = arith.constant 0 : i32
    %12 = arith.index_cast %c0_i32 : i32 to index
    %c0_16 = arith.constant 0 : index
    %c0_17 = arith.constant 0 : index
    %13 = vector.load %arg1[%12, %c0_16, %c0_17] : memref<8x20x128xbf16, #tpu.memory_space<vmem>>, vector<1x20x128xbf16>
    %14 = vector.shape_cast %13 : vector<1x20x128xbf16> to vector<20x128xbf16>
    %cst_18 = arith.constant dense<0.000000e+00> : vector<72x128xf32>
    %15 = tpu.matmul %0, %14, %cst_18 {dimension_numbers = #tpu.dot_dimension_numbers<[1], [0], [0], [1], [0, 0, 1, 1], [], []>} : vector<72x20xbf16>, vector<20x128xbf16>, vector<72x128xf32> -> vector<72x128xf32>
    %16 = vector.broadcast %5 : vector<72x1xf32> to vector<72x128xf32>
    %17 = arith.addf %15, %16 : vector<72x128xf32>
    %cst_19 = arith.constant dense<0.000000e+00> : vector<72x128xf32>
    %18 = tpu.matmul %1, %11, %cst_19 {dimension_numbers = #tpu.dot_dimension_numbers<[1], [0], [0], [1], [0, 0, 1, 1], [], []>} : vector<72x24xf32>, vector<24x128xf32>, vector<72x128xf32> -> vector<72x128xf32>
    %19 = vector.extract_strided_slice %17 {offsets = [0, 0], sizes = [24, 128], strides = [1, 1]} : vector<72x128xf32> to vector<24x128xf32>
    %20 = vector.extract_strided_slice %18 {offsets = [0, 0], sizes = [24, 128], strides = [1, 1]} : vector<72x128xf32> to vector<24x128xf32>
    %21 = arith.addf %19, %20 : vector<24x128xf32>
    %22 = arith.negf %21 : vector<24x128xf32>
    %23 = math.exp %22 : vector<24x128xf32>
    %cst_20 = arith.constant 1.000000e+00 : f32
    %24 = vector.broadcast %cst_20 : f32 to vector<24x128xf32>
    %25 = arith.addf %24, %23 : vector<24x128xf32>
    %26 = arith.divf %24, %25 : vector<24x128xf32>
    %27 = vector.extract_strided_slice %17 {offsets = [24, 0], sizes = [24, 128], strides = [1, 1]} : vector<72x128xf32> to vector<24x128xf32>
    %28 = vector.extract_strided_slice %18 {offsets = [24, 0], sizes = [24, 128], strides = [1, 1]} : vector<72x128xf32> to vector<24x128xf32>
    %29 = arith.addf %27, %28 : vector<24x128xf32>
    %30 = arith.negf %29 : vector<24x128xf32>
    %31 = math.exp %30 : vector<24x128xf32>
    %cst_21 = arith.constant 1.000000e+00 : f32
    %32 = vector.broadcast %cst_21 : f32 to vector<24x128xf32>
    %33 = arith.addf %32, %31 : vector<24x128xf32>
    %34 = arith.divf %32, %33 : vector<24x128xf32>
    %35 = vector.extract_strided_slice %17 {offsets = [48, 0], sizes = [24, 128], strides = [1, 1]} : vector<72x128xf32> to vector<24x128xf32>
    %36 = vector.extract_strided_slice %18 {offsets = [48, 0], sizes = [24, 128], strides = [1, 1]} : vector<72x128xf32> to vector<24x128xf32>
    %37 = vector.broadcast %6 : vector<24x1xf32> to vector<24x128xf32>
    %38 = arith.addf %36, %37 : vector<24x128xf32>
    %39 = arith.mulf %26, %38 : vector<24x128xf32>
    %40 = arith.addf %35, %39 : vector<24x128xf32>
    %41 = math.tanh %40 : vector<24x128xf32>
    %cst_22 = arith.constant 1.000000e+00 : f32
    %42 = vector.broadcast %cst_22 : f32 to vector<24x128xf32>
    %43 = arith.subf %42, %34 : vector<24x128xf32>
    %44 = arith.mulf %43, %41 : vector<24x128xf32>
    %45 = arith.mulf %34, %11 : vector<24x128xf32>
    %46 = arith.addf %44, %45 : vector<24x128xf32>
    %47 = arith.index_cast %c0_i32 : i32 to index
    %c0_23 = arith.constant 0 : index
    %c0_24 = arith.constant 0 : index
    %48 = vector.load %arg6[%47, %c0_23, %c0_24] : memref<8x24x128xf32, #tpu.memory_space<vmem>>, vector<1x24x128xf32>
    %49 = vector.shape_cast %48 : vector<1x24x128xf32> to vector<24x128xf32>
    %50 = vector.shape_cast %46 : vector<24x128xf32> to vector<1x24x128xf32>
    tpu.vector_store %arg6[%47, %c0_23, %c0_24], %50 {strides = array<i32>} : memref<8x24x128xf32, #tpu.memory_space<vmem>>, vector<1x24x128xf32>,
    %cst_25 = arith.constant dense<0.000000e+00> : vector<24x128xf32>
    %51 = tpu.matmul %2, %46, %cst_25 {dimension_numbers = #tpu.dot_dimension_numbers<[1], [0], [0], [1], [0, 0, 1, 1], [], []>} : vector<24x24xf32>, vector<24x128xf32>, vector<24x128xf32> -> vector<24x128xf32>
    %52 = vector.broadcast %7 : vector<24x1xf32> to vector<24x128xf32>
    %53 = arith.addf %51, %52 : vector<24x128xf32>
    %54 = math.tanh %53 : vector<24x128xf32>
    %55 = vector.broadcast %8 : vector<24x1xf32> to vector<24x128xf32>
    %56 = arith.mulf %55, %54 : vector<24x128xf32>
    %cst_26 = arith.constant dense<0.000000e+00> : vector<128xf32>
    %57 = vector.multi_reduction <add>, %56, %cst_26 [0] : vector<24x128xf32> to vector<128xf32>
    %58 = vector.shape_cast %57 : vector<128xf32> to vector<1x128xf32>
    %59 = arith.index_cast %c0_i32 : i32 to index
    %c0_27 = arith.constant 0 : index
    %c0_28 = arith.constant 0 : index
    %60 = vector.load %arg7[%59, %c0_27, %c0_28] : memref<8x1x128xf32, #tpu.memory_space<vmem>>, vector<1x1x128xf32>
    %61 = vector.shape_cast %60 : vector<1x1x128xf32> to vector<1x128xf32>
    %62 = vector.shape_cast %58 : vector<1x128xf32> to vector<1x1x128xf32>
    tpu.vector_store %arg7[%59, %c0_27, %c0_28], %62 {strides = array<i32>} : memref<8x1x128xf32, #tpu.memory_space<vmem>>, vector<1x1x128xf32>,
    %c1_i32 = arith.constant 1 : i32
    %63 = arith.index_cast %c1_i32 : i32 to index
    %c0_29 = arith.constant 0 : index
    %c0_30 = arith.constant 0 : index
    %64 = vector.load %arg1[%63, %c0_29, %c0_30] : memref<8x20x128xbf16, #tpu.memory_space<vmem>>, vector<1x20x128xbf16>
    %65 = vector.shape_cast %64 : vector<1x20x128xbf16> to vector<20x128xbf16>
    %cst_31 = arith.constant dense<0.000000e+00> : vector<72x128xf32>
    %66 = tpu.matmul %0, %65, %cst_31 {dimension_numbers = #tpu.dot_dimension_numbers<[1], [0], [0], [1], [0, 0, 1, 1], [], []>} : vector<72x20xbf16>, vector<20x128xbf16>, vector<72x128xf32> -> vector<72x128xf32>
    %67 = vector.broadcast %5 : vector<72x1xf32> to vector<72x128xf32>
    %68 = arith.addf %66, %67 : vector<72x128xf32>
    %cst_32 = arith.constant dense<0.000000e+00> : vector<72x128xf32>
    %69 = tpu.matmul %1, %46, %cst_32 {dimension_numbers = #tpu.dot_dimension_numbers<[1], [0], [0], [1], [0, 0, 1, 1], [], []>} : vector<72x24xf32>, vector<24x128xf32>, vector<72x128xf32> -> vector<72x128xf32>
    %70 = vector.extract_strided_slice %68 {offsets = [0, 0], sizes = [24, 128], strides = [1, 1]} : vector<72x128xf32> to vector<24x128xf32>
    %71 = vector.extract_strided_slice %69 {offsets = [0, 0], sizes = [24, 128], strides = [1, 1]} : vector<72x128xf32> to vector<24x128xf32>
    %72 = arith.addf %70, %71 : vector<24x128xf32>
    %73 = arith.negf %72 : vector<24x128xf32>
    %74 = math.exp %73 : vector<24x128xf32>
    %cst_33 = arith.constant 1.000000e+00 : f32
    %75 = vector.broadcast %cst_33 : f32 to vector<24x128xf32>
    %76 = arith.addf %75, %74 : vector<24x128xf32>
    %77 = arith.divf %75, %76 : vector<24x128xf32>
    %78 = vector.extract_strided_slice %68 {offsets = [24, 0], sizes = [24, 128], strides = [1, 1]} : vector<72x128xf32> to vector<24x128xf32>
    %79 = vector.extract_strided_slice %69 {offsets = [24, 0], sizes = [24, 128], strides = [1, 1]} : vector<72x128xf32> to vector<24x128xf32>
    %80 = arith.addf %78, %79 : vector<24x128xf32>
    %81 = arith.negf %80 : vector<24x128xf32>
    %82 = math.exp %81 : vector<24x128xf32>
    %cst_34 = arith.constant 1.000000e+00 : f32
    %83 = vector.broadcast %cst_34 : f32 to vector<24x128xf32>
    %84 = arith.addf %83, %82 : vector<24x128xf32>
    %85 = arith.divf %83, %84 : vector<24x128xf32>
    %86 = vector.extract_strided_slice %68 {offsets = [48, 0], sizes = [24, 128], strides = [1, 1]} : vector<72x128xf32> to vector<24x128xf32>
    %87 = vector.extract_strided_slice %69 {offsets = [48, 0], sizes = [24, 128], strides = [1, 1]} : vector<72x128xf32> to vector<24x128xf32>
    %88 = vector.broadcast %6 : vector<24x1xf32> to vector<24x128xf32>
    %89 = arith.addf %87, %88 : vector<24x128xf32>
    %90 = arith.mulf %77, %89 : vector<24x128xf32>
    %91 = arith.addf %86, %90 : vector<24x128xf32>
    %92 = math.tanh %91 : vector<24x128xf32>
    %cst_35 = arith.constant 1.000000e+00 : f32
    %93 = vector.broadcast %cst_35 : f32 to vector<24x128xf32>
    %94 = arith.subf %93, %85 : vector<24x128xf32>
    %95 = arith.mulf %94, %92 : vector<24x128xf32>
    %96 = arith.mulf %85, %46 : vector<24x128xf32>
    %97 = arith.addf %95, %96 : vector<24x128xf32>
    %98 = arith.index_cast %c1_i32 : i32 to index
    %c0_36 = arith.constant 0 : index
    %c0_37 = arith.constant 0 : index
    %99 = vector.load %arg6[%98, %c0_36, %c0_37] : memref<8x24x128xf32, #tpu.memory_space<vmem>>, vector<1x24x128xf32>
    %100 = vector.shape_cast %99 : vector<1x24x128xf32> to vector<24x128xf32>
    %101 = vector.shape_cast %97 : vector<24x128xf32> to vector<1x24x128xf32>
    tpu.vector_store %arg6[%98, %c0_36, %c0_37], %101 {strides = array<i32>} : memref<8x24x128xf32, #tpu.memory_space<vmem>>, vector<1x24x128xf32>,
    %cst_38 = arith.constant dense<0.000000e+00> : vector<24x128xf32>
    %102 = tpu.matmul %2, %97, %cst_38 {dimension_numbers = #tpu.dot_dimension_numbers<[1], [0], [0], [1], [0, 0, 1, 1], [], []>} : vector<24x24xf32>, vector<24x128xf32>, vector<24x128xf32> -> vector<24x128xf32>
    %103 = vector.broadcast %7 : vector<24x1xf32> to vector<24x128xf32>
    %104 = arith.addf %102, %103 : vector<24x128xf32>
    %105 = math.tanh %104 : vector<24x128xf32>
    %106 = vector.broadcast %8 : vector<24x1xf32> to vector<24x128xf32>
    %107 = arith.mulf %106, %105 : vector<24x128xf32>
    %cst_39 = arith.constant dense<0.000000e+00> : vector<128xf32>
    %108 = vector.multi_reduction <add>, %107, %cst_39 [0] : vector<24x128xf32> to vector<128xf32>
    %109 = vector.shape_cast %108 : vector<128xf32> to vector<1x128xf32>
    %110 = arith.index_cast %c1_i32 : i32 to index
    %c0_40 = arith.constant 0 : index
    %c0_41 = arith.constant 0 : index
    %111 = vector.load %arg7[%110, %c0_40, %c0_41] : memref<8x1x128xf32, #tpu.memory_space<vmem>>, vector<1x1x128xf32>
    %112 = vector.shape_cast %111 : vector<1x1x128xf32> to vector<1x128xf32>
    %113 = vector.shape_cast %109 : vector<1x128xf32> to vector<1x1x128xf32>
    tpu.vector_store %arg7[%110, %c0_40, %c0_41], %113 {strides = array<i32>} : memref<8x1x128xf32, #tpu.memory_space<vmem>>, vector<1x1x128xf32>,
    %c2_i32 = arith.constant 2 : i32
    %114 = arith.index_cast %c2_i32 : i32 to index
    %c0_42 = arith.constant 0 : index
    %c0_43 = arith.constant 0 : index
    %115 = vector.load %arg1[%114, %c0_42, %c0_43] : memref<8x20x128xbf16, #tpu.memory_space<vmem>>, vector<1x20x128xbf16>
    %116 = vector.shape_cast %115 : vector<1x20x128xbf16> to vector<20x128xbf16>
    %cst_44 = arith.constant dense<0.000000e+00> : vector<72x128xf32>
    %117 = tpu.matmul %0, %116, %cst_44 {dimension_numbers = #tpu.dot_dimension_numbers<[1], [0], [0], [1], [0, 0, 1, 1], [], []>} : vector<72x20xbf16>, vector<20x128xbf16>, vector<72x128xf32> -> vector<72x128xf32>
    %118 = vector.broadcast %5 : vector<72x1xf32> to vector<72x128xf32>
    %119 = arith.addf %117, %118 : vector<72x128xf32>
    %cst_45 = arith.constant dense<0.000000e+00> : vector<72x128xf32>
    %120 = tpu.matmul %1, %97, %cst_45 {dimension_numbers = #tpu.dot_dimension_numbers<[1], [0], [0], [1], [0, 0, 1, 1], [], []>} : vector<72x24xf32>, vector<24x128xf32>, vector<72x128xf32> -> vector<72x128xf32>
    %121 = vector.extract_strided_slice %119 {offsets = [0, 0], sizes = [24, 128], strides = [1, 1]} : vector<72x128xf32> to vector<24x128xf32>
    %122 = vector.extract_strided_slice %120 {offsets = [0, 0], sizes = [24, 128], strides = [1, 1]} : vector<72x128xf32> to vector<24x128xf32>
    %123 = arith.addf %121, %122 : vector<24x128xf32>
    %124 = arith.negf %123 : vector<24x128xf32>
    %125 = math.exp %124 : vector<24x128xf32>
    %cst_46 = arith.constant 1.000000e+00 : f32
    %126 = vector.broadcast %cst_46 : f32 to vector<24x128xf32>
    %127 = arith.addf %126, %125 : vector<24x128xf32>
    %128 = arith.divf %126, %127 : vector<24x128xf32>
    %129 = vector.extract_strided_slice %119 {offsets = [24, 0], sizes = [24, 128], strides = [1, 1]} : vector<72x128xf32> to vector<24x128xf32>
    %130 = vector.extract_strided_slice %120 {offsets = [24, 0], sizes = [24, 128], strides = [1, 1]} : vector<72x128xf32> to vector<24x128xf32>
    %131 = arith.addf %129, %130 : vector<24x128xf32>
    %132 = arith.negf %131 : vector<24x128xf32>
    %133 = math.exp %132 : vector<24x128xf32>
    %cst_47 = arith.constant 1.000000e+00 : f32
    %134 = vector.broadcast %cst_47 : f32 to vector<24x128xf32>
    %135 = arith.addf %134, %133 : vector<24x128xf32>
    %136 = arith.divf %134, %135 : vector<24x128xf32>
    %137 = vector.extract_strided_slice %119 {offsets = [48, 0], sizes = [24, 128], strides = [1, 1]} : vector<72x128xf32> to vector<24x128xf32>
    %138 = vector.extract_strided_slice %120 {offsets = [48, 0], sizes = [24, 128], strides = [1, 1]} : vector<72x128xf32> to vector<24x128xf32>
    %139 = vector.broadcast %6 : vector<24x1xf32> to vector<24x128xf32>
    %140 = arith.addf %138, %139 : vector<24x128xf32>
    %141 = arith.mulf %128, %140 : vector<24x128xf32>
    %142 = arith.addf %137, %141 : vector<24x128xf32>
    %143 = math.tanh %142 : vector<24x128xf32>
    %cst_48 = arith.constant 1.000000e+00 : f32
    %144 = vector.broadcast %cst_48 : f32 to vector<24x128xf32>
    %145 = arith.subf %144, %136 : vector<24x128xf32>
    %146 = arith.mulf %145, %143 : vector<24x128xf32>
    %147 = arith.mulf %136, %97 : vector<24x128xf32>
    %148 = arith.addf %146, %147 : vector<24x128xf32>
    %149 = arith.index_cast %c2_i32 : i32 to index
    %c0_49 = arith.constant 0 : index
    %c0_50 = arith.constant 0 : index
    %150 = vector.load %arg6[%149, %c0_49, %c0_50] : memref<8x24x128xf32, #tpu.memory_space<vmem>>, vector<1x24x128xf32>
    %151 = vector.shape_cast %150 : vector<1x24x128xf32> to vector<24x128xf32>
    %152 = vector.shape_cast %148 : vector<24x128xf32> to vector<1x24x128xf32>
    tpu.vector_store %arg6[%149, %c0_49, %c0_50], %152 {strides = array<i32>} : memref<8x24x128xf32, #tpu.memory_space<vmem>>, vector<1x24x128xf32>,
    %cst_51 = arith.constant dense<0.000000e+00> : vector<24x128xf32>
    %153 = tpu.matmul %2, %148, %cst_51 {dimension_numbers = #tpu.dot_dimension_numbers<[1], [0], [0], [1], [0, 0, 1, 1], [], []>} : vector<24x24xf32>, vector<24x128xf32>, vector<24x128xf32> -> vector<24x128xf32>
    %154 = vector.broadcast %7 : vector<24x1xf32> to vector<24x128xf32>
    %155 = arith.addf %153, %154 : vector<24x128xf32>
    %156 = math.tanh %155 : vector<24x128xf32>
    %157 = vector.broadcast %8 : vector<24x1xf32> to vector<24x128xf32>
    %158 = arith.mulf %157, %156 : vector<24x128xf32>
    %cst_52 = arith.constant dense<0.000000e+00> : vector<128xf32>
    %159 = vector.multi_reduction <add>, %158, %cst_52 [0] : vector<24x128xf32> to vector<128xf32>
    %160 = vector.shape_cast %159 : vector<128xf32> to vector<1x128xf32>
    %161 = arith.index_cast %c2_i32 : i32 to index
    %c0_53 = arith.constant 0 : index
    %c0_54 = arith.constant 0 : index
    %162 = vector.load %arg7[%161, %c0_53, %c0_54] : memref<8x1x128xf32, #tpu.memory_space<vmem>>, vector<1x1x128xf32>
    %163 = vector.shape_cast %162 : vector<1x1x128xf32> to vector<1x128xf32>
    %164 = vector.shape_cast %160 : vector<1x128xf32> to vector<1x1x128xf32>
    tpu.vector_store %arg7[%161, %c0_53, %c0_54], %164 {strides = array<i32>} : memref<8x1x128xf32, #tpu.memory_space<vmem>>, vector<1x1x128xf32>,
    %c3_i32 = arith.constant 3 : i32
    %165 = arith.index_cast %c3_i32 : i32 to index
    %c0_55 = arith.constant 0 : index
    %c0_56 = arith.constant 0 : index
    %166 = vector.load %arg1[%165, %c0_55, %c0_56] : memref<8x20x128xbf16, #tpu.memory_space<vmem>>, vector<1x20x128xbf16>
    %167 = vector.shape_cast %166 : vector<1x20x128xbf16> to vector<20x128xbf16>
    %cst_57 = arith.constant dense<0.000000e+00> : vector<72x128xf32>
    %168 = tpu.matmul %0, %167, %cst_57 {dimension_numbers = #tpu.dot_dimension_numbers<[1], [0], [0], [1], [0, 0, 1, 1], [], []>} : vector<72x20xbf16>, vector<20x128xbf16>, vector<72x128xf32> -> vector<72x128xf32>
    %169 = vector.broadcast %5 : vector<72x1xf32> to vector<72x128xf32>
    %170 = arith.addf %168, %169 : vector<72x128xf32>
    %cst_58 = arith.constant dense<0.000000e+00> : vector<72x128xf32>
    %171 = tpu.matmul %1, %148, %cst_58 {dimension_numbers = #tpu.dot_dimension_numbers<[1], [0], [0], [1], [0, 0, 1, 1], [], []>} : vector<72x24xf32>, vector<24x128xf32>, vector<72x128xf32> -> vector<72x128xf32>
    %172 = vector.extract_strided_slice %170 {offsets = [0, 0], sizes = [24, 128], strides = [1, 1]} : vector<72x128xf32> to vector<24x128xf32>
    %173 = vector.extract_strided_slice %171 {offsets = [0, 0], sizes = [24, 128], strides = [1, 1]} : vector<72x128xf32> to vector<24x128xf32>
    %174 = arith.addf %172, %173 : vector<24x128xf32>
    %175 = arith.negf %174 : vector<24x128xf32>
    %176 = math.exp %175 : vector<24x128xf32>
    %cst_59 = arith.constant 1.000000e+00 : f32
    %177 = vector.broadcast %cst_59 : f32 to vector<24x128xf32>
    %178 = arith.addf %177, %176 : vector<24x128xf32>
    %179 = arith.divf %177, %178 : vector<24x128xf32>
    %180 = vector.extract_strided_slice %170 {offsets = [24, 0], sizes = [24, 128], strides = [1, 1]} : vector<72x128xf32> to vector<24x128xf32>
    %181 = vector.extract_strided_slice %171 {offsets = [24, 0], sizes = [24, 128], strides = [1, 1]} : vector<72x128xf32> to vector<24x128xf32>
    %182 = arith.addf %180, %181 : vector<24x128xf32>
    %183 = arith.negf %182 : vector<24x128xf32>
    %184 = math.exp %183 : vector<24x128xf32>
    %cst_60 = arith.constant 1.000000e+00 : f32
    %185 = vector.broadcast %cst_60 : f32 to vector<24x128xf32>
    %186 = arith.addf %185, %184 : vector<24x128xf32>
    %187 = arith.divf %185, %186 : vector<24x128xf32>
    %188 = vector.extract_strided_slice %170 {offsets = [48, 0], sizes = [24, 128], strides = [1, 1]} : vector<72x128xf32> to vector<24x128xf32>
    %189 = vector.extract_strided_slice %171 {offsets = [48, 0], sizes = [24, 128], strides = [1, 1]} : vector<72x128xf32> to vector<24x128xf32>
    %190 = vector.broadcast %6 : vector<24x1xf32> to vector<24x128xf32>
    %191 = arith.addf %189, %190 : vector<24x128xf32>
    %192 = arith.mulf %179, %191 : vector<24x128xf32>
    %193 = arith.addf %188, %192 : vector<24x128xf32>
    %194 = math.tanh %193 : vector<24x128xf32>
    %cst_61 = arith.constant 1.000000e+00 : f32
    %195 = vector.broadcast %cst_61 : f32 to vector<24x128xf32>
    %196 = arith.subf %195, %187 : vector<24x128xf32>
    %197 = arith.mulf %196, %194 : vector<24x128xf32>
    %198 = arith.mulf %187, %148 : vector<24x128xf32>
    %199 = arith.addf %197, %198 : vector<24x128xf32>
    %200 = arith.index_cast %c3_i32 : i32 to index
    %c0_62 = arith.constant 0 : index
    %c0_63 = arith.constant 0 : index
    %201 = vector.load %arg6[%200, %c0_62, %c0_63] : memref<8x24x128xf32, #tpu.memory_space<vmem>>, vector<1x24x128xf32>
    %202 = vector.shape_cast %201 : vector<1x24x128xf32> to vector<24x128xf32>
    %203 = vector.shape_cast %199 : vector<24x128xf32> to vector<1x24x128xf32>
    tpu.vector_store %arg6[%200, %c0_62, %c0_63], %203 {strides = array<i32>} : memref<8x24x128xf32, #tpu.memory_space<vmem>>, vector<1x24x128xf32>,
    %cst_64 = arith.constant dense<0.000000e+00> : vector<24x128xf32>
    %204 = tpu.matmul %2, %199, %cst_64 {dimension_numbers = #tpu.dot_dimension_numbers<[1], [0], [0], [1], [0, 0, 1, 1], [], []>} : vector<24x24xf32>, vector<24x128xf32>, vector<24x128xf32> -> vector<24x128xf32>
    %205 = vector.broadcast %7 : vector<24x1xf32> to vector<24x128xf32>
    %206 = arith.addf %204, %205 : vector<24x128xf32>
    %207 = math.tanh %206 : vector<24x128xf32>
    %208 = vector.broadcast %8 : vector<24x1xf32> to vector<24x128xf32>
    %209 = arith.mulf %208, %207 : vector<24x128xf32>
    %cst_65 = arith.constant dense<0.000000e+00> : vector<128xf32>
    %210 = vector.multi_reduction <add>, %209, %cst_65 [0] : vector<24x128xf32> to vector<128xf32>
    %211 = vector.shape_cast %210 : vector<128xf32> to vector<1x128xf32>
    %212 = arith.index_cast %c3_i32 : i32 to index
    %c0_66 = arith.constant 0 : index
    %c0_67 = arith.constant 0 : index
    %213 = vector.load %arg7[%212, %c0_66, %c0_67] : memref<8x1x128xf32, #tpu.memory_space<vmem>>, vector<1x1x128xf32>
    %214 = vector.shape_cast %213 : vector<1x1x128xf32> to vector<1x128xf32>
    %215 = vector.shape_cast %211 : vector<1x128xf32> to vector<1x1x128xf32>
    tpu.vector_store %arg7[%212, %c0_66, %c0_67], %215 {strides = array<i32>} : memref<8x1x128xf32, #tpu.memory_space<vmem>>, vector<1x1x128xf32>,
    %c4_i32 = arith.constant 4 : i32
    %216 = arith.index_cast %c4_i32 : i32 to index
    %c0_68 = arith.constant 0 : index
    %c0_69 = arith.constant 0 : index
    %217 = vector.load %arg1[%216, %c0_68, %c0_69] : memref<8x20x128xbf16, #tpu.memory_space<vmem>>, vector<1x20x128xbf16>
    %218 = vector.shape_cast %217 : vector<1x20x128xbf16> to vector<20x128xbf16>
    %cst_70 = arith.constant dense<0.000000e+00> : vector<72x128xf32>
    %219 = tpu.matmul %0, %218, %cst_70 {dimension_numbers = #tpu.dot_dimension_numbers<[1], [0], [0], [1], [0, 0, 1, 1], [], []>} : vector<72x20xbf16>, vector<20x128xbf16>, vector<72x128xf32> -> vector<72x128xf32>
    %220 = vector.broadcast %5 : vector<72x1xf32> to vector<72x128xf32>
    %221 = arith.addf %219, %220 : vector<72x128xf32>
    %cst_71 = arith.constant dense<0.000000e+00> : vector<72x128xf32>
    %222 = tpu.matmul %1, %199, %cst_71 {dimension_numbers = #tpu.dot_dimension_numbers<[1], [0], [0], [1], [0, 0, 1, 1], [], []>} : vector<72x24xf32>, vector<24x128xf32>, vector<72x128xf32> -> vector<72x128xf32>
    %223 = vector.extract_strided_slice %221 {offsets = [0, 0], sizes = [24, 128], strides = [1, 1]} : vector<72x128xf32> to vector<24x128xf32>
    %224 = vector.extract_strided_slice %222 {offsets = [0, 0], sizes = [24, 128], strides = [1, 1]} : vector<72x128xf32> to vector<24x128xf32>
    %225 = arith.addf %223, %224 : vector<24x128xf32>
    %226 = arith.negf %225 : vector<24x128xf32>
    %227 = math.exp %226 : vector<24x128xf32>
    %cst_72 = arith.constant 1.000000e+00 : f32
    %228 = vector.broadcast %cst_72 : f32 to vector<24x128xf32>
    %229 = arith.addf %228, %227 : vector<24x128xf32>
    %230 = arith.divf %228, %229 : vector<24x128xf32>
    %231 = vector.extract_strided_slice %221 {offsets = [24, 0], sizes = [24, 128], strides = [1, 1]} : vector<72x128xf32> to vector<24x128xf32>
    %232 = vector.extract_strided_slice %222 {offsets = [24, 0], sizes = [24, 128], strides = [1, 1]} : vector<72x128xf32> to vector<24x128xf32>
    %233 = arith.addf %231, %232 : vector<24x128xf32>
    %234 = arith.negf %233 : vector<24x128xf32>
    %235 = math.exp %234 : vector<24x128xf32>
    %cst_73 = arith.constant 1.000000e+00 : f32
    %236 = vector.broadcast %cst_73 : f32 to vector<24x128xf32>
    %237 = arith.addf %236, %235 : vector<24x128xf32>
    %238 = arith.divf %236, %237 : vector<24x128xf32>
    %239 = vector.extract_strided_slice %221 {offsets = [48, 0], sizes = [24, 128], strides = [1, 1]} : vector<72x128xf32> to vector<24x128xf32>
    %240 = vector.extract_strided_slice %222 {offsets = [48, 0], sizes = [24, 128], strides = [1, 1]} : vector<72x128xf32> to vector<24x128xf32>
    %241 = vector.broadcast %6 : vector<24x1xf32> to vector<24x128xf32>
    %242 = arith.addf %240, %241 : vector<24x128xf32>
    %243 = arith.mulf %230, %242 : vector<24x128xf32>
    %244 = arith.addf %239, %243 : vector<24x128xf32>
    %245 = math.tanh %244 : vector<24x128xf32>
    %cst_74 = arith.constant 1.000000e+00 : f32
    %246 = vector.broadcast %cst_74 : f32 to vector<24x128xf32>
    %247 = arith.subf %246, %238 : vector<24x128xf32>
    %248 = arith.mulf %247, %245 : vector<24x128xf32>
    %249 = arith.mulf %238, %199 : vector<24x128xf32>
    %250 = arith.addf %248, %249 : vector<24x128xf32>
    %251 = arith.index_cast %c4_i32 : i32 to index
    %c0_75 = arith.constant 0 : index
    %c0_76 = arith.constant 0 : index
    %252 = vector.load %arg6[%251, %c0_75, %c0_76] : memref<8x24x128xf32, #tpu.memory_space<vmem>>, vector<1x24x128xf32>
    %253 = vector.shape_cast %252 : vector<1x24x128xf32> to vector<24x128xf32>
    %254 = vector.shape_cast %250 : vector<24x128xf32> to vector<1x24x128xf32>
    tpu.vector_store %arg6[%251, %c0_75, %c0_76], %254 {strides = array<i32>} : memref<8x24x128xf32, #tpu.memory_space<vmem>>, vector<1x24x128xf32>,
    %cst_77 = arith.constant dense<0.000000e+00> : vector<24x128xf32>
    %255 = tpu.matmul %2, %250, %cst_77 {dimension_numbers = #tpu.dot_dimension_numbers<[1], [0], [0], [1], [0, 0, 1, 1], [], []>} : vector<24x24xf32>, vector<24x128xf32>, vector<24x128xf32> -> vector<24x128xf32>
    %256 = vector.broadcast %7 : vector<24x1xf32> to vector<24x128xf32>
    %257 = arith.addf %255, %256 : vector<24x128xf32>
    %258 = math.tanh %257 : vector<24x128xf32>
    %259 = vector.broadcast %8 : vector<24x1xf32> to vector<24x128xf32>
    %260 = arith.mulf %259, %258 : vector<24x128xf32>
    %cst_78 = arith.constant dense<0.000000e+00> : vector<128xf32>
    %261 = vector.multi_reduction <add>, %260, %cst_78 [0] : vector<24x128xf32> to vector<128xf32>
    %262 = vector.shape_cast %261 : vector<128xf32> to vector<1x128xf32>
    %263 = arith.index_cast %c4_i32 : i32 to index
    %c0_79 = arith.constant 0 : index
    %c0_80 = arith.constant 0 : index
    %264 = vector.load %arg7[%263, %c0_79, %c0_80] : memref<8x1x128xf32, #tpu.memory_space<vmem>>, vector<1x1x128xf32>
    %265 = vector.shape_cast %264 : vector<1x1x128xf32> to vector<1x128xf32>
    %266 = vector.shape_cast %262 : vector<1x128xf32> to vector<1x1x128xf32>
    tpu.vector_store %arg7[%263, %c0_79, %c0_80], %266 {strides = array<i32>} : memref<8x1x128xf32, #tpu.memory_space<vmem>>, vector<1x1x128xf32>,
    %c5_i32 = arith.constant 5 : i32
    %267 = arith.index_cast %c5_i32 : i32 to index
    %c0_81 = arith.constant 0 : index
    %c0_82 = arith.constant 0 : index
    %268 = vector.load %arg1[%267, %c0_81, %c0_82] : memref<8x20x128xbf16, #tpu.memory_space<vmem>>, vector<1x20x128xbf16>
    %269 = vector.shape_cast %268 : vector<1x20x128xbf16> to vector<20x128xbf16>
    %cst_83 = arith.constant dense<0.000000e+00> : vector<72x128xf32>
    %270 = tpu.matmul %0, %269, %cst_83 {dimension_numbers = #tpu.dot_dimension_numbers<[1], [0], [0], [1], [0, 0, 1, 1], [], []>} : vector<72x20xbf16>, vector<20x128xbf16>, vector<72x128xf32> -> vector<72x128xf32>
    %271 = vector.broadcast %5 : vector<72x1xf32> to vector<72x128xf32>
    %272 = arith.addf %270, %271 : vector<72x128xf32>
    %cst_84 = arith.constant dense<0.000000e+00> : vector<72x128xf32>
    %273 = tpu.matmul %1, %250, %cst_84 {dimension_numbers = #tpu.dot_dimension_numbers<[1], [0], [0], [1], [0, 0, 1, 1], [], []>} : vector<72x24xf32>, vector<24x128xf32>, vector<72x128xf32> -> vector<72x128xf32>
    %274 = vector.extract_strided_slice %272 {offsets = [0, 0], sizes = [24, 128], strides = [1, 1]} : vector<72x128xf32> to vector<24x128xf32>
    %275 = vector.extract_strided_slice %273 {offsets = [0, 0], sizes = [24, 128], strides = [1, 1]} : vector<72x128xf32> to vector<24x128xf32>
    %276 = arith.addf %274, %275 : vector<24x128xf32>
    %277 = arith.negf %276 : vector<24x128xf32>
    %278 = math.exp %277 : vector<24x128xf32>
    %cst_85 = arith.constant 1.000000e+00 : f32
    %279 = vector.broadcast %cst_85 : f32 to vector<24x128xf32>
    %280 = arith.addf %279, %278 : vector<24x128xf32>
    %281 = arith.divf %279, %280 : vector<24x128xf32>
    %282 = vector.extract_strided_slice %272 {offsets = [24, 0], sizes = [24, 128], strides = [1, 1]} : vector<72x128xf32> to vector<24x128xf32>
    %283 = vector.extract_strided_slice %273 {offsets = [24, 0], sizes = [24, 128], strides = [1, 1]} : vector<72x128xf32> to vector<24x128xf32>
    %284 = arith.addf %282, %283 : vector<24x128xf32>
    %285 = arith.negf %284 : vector<24x128xf32>
    %286 = math.exp %285 : vector<24x128xf32>
    %cst_86 = arith.constant 1.000000e+00 : f32
    %287 = vector.broadcast %cst_86 : f32 to vector<24x128xf32>
    %288 = arith.addf %287, %286 : vector<24x128xf32>
    %289 = arith.divf %287, %288 : vector<24x128xf32>
    %290 = vector.extract_strided_slice %272 {offsets = [48, 0], sizes = [24, 128], strides = [1, 1]} : vector<72x128xf32> to vector<24x128xf32>
    %291 = vector.extract_strided_slice %273 {offsets = [48, 0], sizes = [24, 128], strides = [1, 1]} : vector<72x128xf32> to vector<24x128xf32>
    %292 = vector.broadcast %6 : vector<24x1xf32> to vector<24x128xf32>
    %293 = arith.addf %291, %292 : vector<24x128xf32>
    %294 = arith.mulf %281, %293 : vector<24x128xf32>
    %295 = arith.addf %290, %294 : vector<24x128xf32>
    %296 = math.tanh %295 : vector<24x128xf32>
    %cst_87 = arith.constant 1.000000e+00 : f32
    %297 = vector.broadcast %cst_87 : f32 to vector<24x128xf32>
    %298 = arith.subf %297, %289 : vector<24x128xf32>
    %299 = arith.mulf %298, %296 : vector<24x128xf32>
    %300 = arith.mulf %289, %250 : vector<24x128xf32>
    %301 = arith.addf %299, %300 : vector<24x128xf32>
    %302 = arith.index_cast %c5_i32 : i32 to index
    %c0_88 = arith.constant 0 : index
    %c0_89 = arith.constant 0 : index
    %303 = vector.load %arg6[%302, %c0_88, %c0_89] : memref<8x24x128xf32, #tpu.memory_space<vmem>>, vector<1x24x128xf32>
    %304 = vector.shape_cast %303 : vector<1x24x128xf32> to vector<24x128xf32>
    %305 = vector.shape_cast %301 : vector<24x128xf32> to vector<1x24x128xf32>
    tpu.vector_store %arg6[%302, %c0_88, %c0_89], %305 {strides = array<i32>} : memref<8x24x128xf32, #tpu.memory_space<vmem>>, vector<1x24x128xf32>,
    %cst_90 = arith.constant dense<0.000000e+00> : vector<24x128xf32>
    %306 = tpu.matmul %2, %301, %cst_90 {dimension_numbers = #tpu.dot_dimension_numbers<[1], [0], [0], [1], [0, 0, 1, 1], [], []>} : vector<24x24xf32>, vector<24x128xf32>, vector<24x128xf32> -> vector<24x128xf32>
    %307 = vector.broadcast %7 : vector<24x1xf32> to vector<24x128xf32>
    %308 = arith.addf %306, %307 : vector<24x128xf32>
    %309 = math.tanh %308 : vector<24x128xf32>
    %310 = vector.broadcast %8 : vector<24x1xf32> to vector<24x128xf32>
    %311 = arith.mulf %310, %309 : vector<24x128xf32>
    %cst_91 = arith.constant dense<0.000000e+00> : vector<128xf32>
    %312 = vector.multi_reduction <add>, %311, %cst_91 [0] : vector<24x128xf32> to vector<128xf32>
    %313 = vector.shape_cast %312 : vector<128xf32> to vector<1x128xf32>
    %314 = arith.index_cast %c5_i32 : i32 to index
    %c0_92 = arith.constant 0 : index
    %c0_93 = arith.constant 0 : index
    %315 = vector.load %arg7[%314, %c0_92, %c0_93] : memref<8x1x128xf32, #tpu.memory_space<vmem>>, vector<1x1x128xf32>
    %316 = vector.shape_cast %315 : vector<1x1x128xf32> to vector<1x128xf32>
    %317 = vector.shape_cast %313 : vector<1x128xf32> to vector<1x1x128xf32>
    tpu.vector_store %arg7[%314, %c0_92, %c0_93], %317 {strides = array<i32>} : memref<8x1x128xf32, #tpu.memory_space<vmem>>, vector<1x1x128xf32>,
    %c6_i32 = arith.constant 6 : i32
    %318 = arith.index_cast %c6_i32 : i32 to index
    %c0_94 = arith.constant 0 : index
    %c0_95 = arith.constant 0 : index
    %319 = vector.load %arg1[%318, %c0_94, %c0_95] : memref<8x20x128xbf16, #tpu.memory_space<vmem>>, vector<1x20x128xbf16>
    %320 = vector.shape_cast %319 : vector<1x20x128xbf16> to vector<20x128xbf16>
    %cst_96 = arith.constant dense<0.000000e+00> : vector<72x128xf32>
    %321 = tpu.matmul %0, %320, %cst_96 {dimension_numbers = #tpu.dot_dimension_numbers<[1], [0], [0], [1], [0, 0, 1, 1], [], []>} : vector<72x20xbf16>, vector<20x128xbf16>, vector<72x128xf32> -> vector<72x128xf32>
    %322 = vector.broadcast %5 : vector<72x1xf32> to vector<72x128xf32>
    %323 = arith.addf %321, %322 : vector<72x128xf32>
    %cst_97 = arith.constant dense<0.000000e+00> : vector<72x128xf32>
    %324 = tpu.matmul %1, %301, %cst_97 {dimension_numbers = #tpu.dot_dimension_numbers<[1], [0], [0], [1], [0, 0, 1, 1], [], []>} : vector<72x24xf32>, vector<24x128xf32>, vector<72x128xf32> -> vector<72x128xf32>
    %325 = vector.extract_strided_slice %323 {offsets = [0, 0], sizes = [24, 128], strides = [1, 1]} : vector<72x128xf32> to vector<24x128xf32>
    %326 = vector.extract_strided_slice %324 {offsets = [0, 0], sizes = [24, 128], strides = [1, 1]} : vector<72x128xf32> to vector<24x128xf32>
    %327 = arith.addf %325, %326 : vector<24x128xf32>
    %328 = arith.negf %327 : vector<24x128xf32>
    %329 = math.exp %328 : vector<24x128xf32>
    %cst_98 = arith.constant 1.000000e+00 : f32
    %330 = vector.broadcast %cst_98 : f32 to vector<24x128xf32>
    %331 = arith.addf %330, %329 : vector<24x128xf32>
    %332 = arith.divf %330, %331 : vector<24x128xf32>
    %333 = vector.extract_strided_slice %323 {offsets = [24, 0], sizes = [24, 128], strides = [1, 1]} : vector<72x128xf32> to vector<24x128xf32>
    %334 = vector.extract_strided_slice %324 {offsets = [24, 0], sizes = [24, 128], strides = [1, 1]} : vector<72x128xf32> to vector<24x128xf32>
    %335 = arith.addf %333, %334 : vector<24x128xf32>
    %336 = arith.negf %335 : vector<24x128xf32>
    %337 = math.exp %336 : vector<24x128xf32>
    %cst_99 = arith.constant 1.000000e+00 : f32
    %338 = vector.broadcast %cst_99 : f32 to vector<24x128xf32>
    %339 = arith.addf %338, %337 : vector<24x128xf32>
    %340 = arith.divf %338, %339 : vector<24x128xf32>
    %341 = vector.extract_strided_slice %323 {offsets = [48, 0], sizes = [24, 128], strides = [1, 1]} : vector<72x128xf32> to vector<24x128xf32>
    %342 = vector.extract_strided_slice %324 {offsets = [48, 0], sizes = [24, 128], strides = [1, 1]} : vector<72x128xf32> to vector<24x128xf32>
    %343 = vector.broadcast %6 : vector<24x1xf32> to vector<24x128xf32>
    %344 = arith.addf %342, %343 : vector<24x128xf32>
    %345 = arith.mulf %332, %344 : vector<24x128xf32>
    %346 = arith.addf %341, %345 : vector<24x128xf32>
    %347 = math.tanh %346 : vector<24x128xf32>
    %cst_100 = arith.constant 1.000000e+00 : f32
    %348 = vector.broadcast %cst_100 : f32 to vector<24x128xf32>
    %349 = arith.subf %348, %340 : vector<24x128xf32>
    %350 = arith.mulf %349, %347 : vector<24x128xf32>
    %351 = arith.mulf %340, %301 : vector<24x128xf32>
    %352 = arith.addf %350, %351 : vector<24x128xf32>
    %353 = arith.index_cast %c6_i32 : i32 to index
    %c0_101 = arith.constant 0 : index
    %c0_102 = arith.constant 0 : index
    %354 = vector.load %arg6[%353, %c0_101, %c0_102] : memref<8x24x128xf32, #tpu.memory_space<vmem>>, vector<1x24x128xf32>
    %355 = vector.shape_cast %354 : vector<1x24x128xf32> to vector<24x128xf32>
    %356 = vector.shape_cast %352 : vector<24x128xf32> to vector<1x24x128xf32>
    tpu.vector_store %arg6[%353, %c0_101, %c0_102], %356 {strides = array<i32>} : memref<8x24x128xf32, #tpu.memory_space<vmem>>, vector<1x24x128xf32>,
    %cst_103 = arith.constant dense<0.000000e+00> : vector<24x128xf32>
    %357 = tpu.matmul %2, %352, %cst_103 {dimension_numbers = #tpu.dot_dimension_numbers<[1], [0], [0], [1], [0, 0, 1, 1], [], []>} : vector<24x24xf32>, vector<24x128xf32>, vector<24x128xf32> -> vector<24x128xf32>
    %358 = vector.broadcast %7 : vector<24x1xf32> to vector<24x128xf32>
    %359 = arith.addf %357, %358 : vector<24x128xf32>
    %360 = math.tanh %359 : vector<24x128xf32>
    %361 = vector.broadcast %8 : vector<24x1xf32> to vector<24x128xf32>
    %362 = arith.mulf %361, %360 : vector<24x128xf32>
    %cst_104 = arith.constant dense<0.000000e+00> : vector<128xf32>
    %363 = vector.multi_reduction <add>, %362, %cst_104 [0] : vector<24x128xf32> to vector<128xf32>
    %364 = vector.shape_cast %363 : vector<128xf32> to vector<1x128xf32>
    %365 = arith.index_cast %c6_i32 : i32 to index
    %c0_105 = arith.constant 0 : index
    %c0_106 = arith.constant 0 : index
    %366 = vector.load %arg7[%365, %c0_105, %c0_106] : memref<8x1x128xf32, #tpu.memory_space<vmem>>, vector<1x1x128xf32>
    %367 = vector.shape_cast %366 : vector<1x1x128xf32> to vector<1x128xf32>
    %368 = vector.shape_cast %364 : vector<1x128xf32> to vector<1x1x128xf32>
    tpu.vector_store %arg7[%365, %c0_105, %c0_106], %368 {strides = array<i32>} : memref<8x1x128xf32, #tpu.memory_space<vmem>>, vector<1x1x128xf32>,
    %c7_i32 = arith.constant 7 : i32
    %369 = arith.index_cast %c7_i32 : i32 to index
    %c0_107 = arith.constant 0 : index
    %c0_108 = arith.constant 0 : index
    %370 = vector.load %arg1[%369, %c0_107, %c0_108] : memref<8x20x128xbf16, #tpu.memory_space<vmem>>, vector<1x20x128xbf16>
    %371 = vector.shape_cast %370 : vector<1x20x128xbf16> to vector<20x128xbf16>
    %cst_109 = arith.constant dense<0.000000e+00> : vector<72x128xf32>
    %372 = tpu.matmul %0, %371, %cst_109 {dimension_numbers = #tpu.dot_dimension_numbers<[1], [0], [0], [1], [0, 0, 1, 1], [], []>} : vector<72x20xbf16>, vector<20x128xbf16>, vector<72x128xf32> -> vector<72x128xf32>
    %373 = vector.broadcast %5 : vector<72x1xf32> to vector<72x128xf32>
    %374 = arith.addf %372, %373 : vector<72x128xf32>
    %cst_110 = arith.constant dense<0.000000e+00> : vector<72x128xf32>
    %375 = tpu.matmul %1, %352, %cst_110 {dimension_numbers = #tpu.dot_dimension_numbers<[1], [0], [0], [1], [0, 0, 1, 1], [], []>} : vector<72x24xf32>, vector<24x128xf32>, vector<72x128xf32> -> vector<72x128xf32>
    %376 = vector.extract_strided_slice %374 {offsets = [0, 0], sizes = [24, 128], strides = [1, 1]} : vector<72x128xf32> to vector<24x128xf32>
    %377 = vector.extract_strided_slice %375 {offsets = [0, 0], sizes = [24, 128], strides = [1, 1]} : vector<72x128xf32> to vector<24x128xf32>
    %378 = arith.addf %376, %377 : vector<24x128xf32>
    %379 = arith.negf %378 : vector<24x128xf32>
    %380 = math.exp %379 : vector<24x128xf32>
    %cst_111 = arith.constant 1.000000e+00 : f32
    %381 = vector.broadcast %cst_111 : f32 to vector<24x128xf32>
    %382 = arith.addf %381, %380 : vector<24x128xf32>
    %383 = arith.divf %381, %382 : vector<24x128xf32>
    %384 = vector.extract_strided_slice %374 {offsets = [24, 0], sizes = [24, 128], strides = [1, 1]} : vector<72x128xf32> to vector<24x128xf32>
    %385 = vector.extract_strided_slice %375 {offsets = [24, 0], sizes = [24, 128], strides = [1, 1]} : vector<72x128xf32> to vector<24x128xf32>
    %386 = arith.addf %384, %385 : vector<24x128xf32>
    %387 = arith.negf %386 : vector<24x128xf32>
    %388 = math.exp %387 : vector<24x128xf32>
    %cst_112 = arith.constant 1.000000e+00 : f32
    %389 = vector.broadcast %cst_112 : f32 to vector<24x128xf32>
    %390 = arith.addf %389, %388 : vector<24x128xf32>
    %391 = arith.divf %389, %390 : vector<24x128xf32>
    %392 = vector.extract_strided_slice %374 {offsets = [48, 0], sizes = [24, 128], strides = [1, 1]} : vector<72x128xf32> to vector<24x128xf32>
    %393 = vector.extract_strided_slice %375 {offsets = [48, 0], sizes = [24, 128], strides = [1, 1]} : vector<72x128xf32> to vector<24x128xf32>
    %394 = vector.broadcast %6 : vector<24x1xf32> to vector<24x128xf32>
    %395 = arith.addf %393, %394 : vector<24x128xf32>
    %396 = arith.mulf %383, %395 : vector<24x128xf32>
    %397 = arith.addf %392, %396 : vector<24x128xf32>
    %398 = math.tanh %397 : vector<24x128xf32>
    %cst_113 = arith.constant 1.000000e+00 : f32
    %399 = vector.broadcast %cst_113 : f32 to vector<24x128xf32>
    %400 = arith.subf %399, %391 : vector<24x128xf32>
    %401 = arith.mulf %400, %398 : vector<24x128xf32>
    %402 = arith.mulf %391, %352 : vector<24x128xf32>
    %403 = arith.addf %401, %402 : vector<24x128xf32>
    %404 = arith.index_cast %c7_i32 : i32 to index
    %c0_114 = arith.constant 0 : index
    %c0_115 = arith.constant 0 : index
    %405 = vector.load %arg6[%404, %c0_114, %c0_115] : memref<8x24x128xf32, #tpu.memory_space<vmem>>, vector<1x24x128xf32>
    %406 = vector.shape_cast %405 : vector<1x24x128xf32> to vector<24x128xf32>
    %407 = vector.shape_cast %403 : vector<24x128xf32> to vector<1x24x128xf32>
    tpu.vector_store %arg6[%404, %c0_114, %c0_115], %407 {strides = array<i32>} : memref<8x24x128xf32, #tpu.memory_space<vmem>>, vector<1x24x128xf32>,
    %cst_116 = arith.constant dense<0.000000e+00> : vector<24x128xf32>
    %408 = tpu.matmul %2, %403, %cst_116 {dimension_numbers = #tpu.dot_dimension_numbers<[1], [0], [0], [1], [0, 0, 1, 1], [], []>} : vector<24x24xf32>, vector<24x128xf32>, vector<24x128xf32> -> vector<24x128xf32>
    %409 = vector.broadcast %7 : vector<24x1xf32> to vector<24x128xf32>
    %410 = arith.addf %408, %409 : vector<24x128xf32>
    %411 = math.tanh %410 : vector<24x128xf32>
    %412 = vector.broadcast %8 : vector<24x1xf32> to vector<24x128xf32>
    %413 = arith.mulf %412, %411 : vector<24x128xf32>
    %cst_117 = arith.constant dense<0.000000e+00> : vector<128xf32>
    %414 = vector.multi_reduction <add>, %413, %cst_117 [0] : vector<24x128xf32> to vector<128xf32>
    %415 = vector.shape_cast %414 : vector<128xf32> to vector<1x128xf32>
    %416 = arith.index_cast %c7_i32 : i32 to index
    %c0_118 = arith.constant 0 : index
    %c0_119 = arith.constant 0 : index
    %417 = vector.load %arg7[%416, %c0_118, %c0_119] : memref<8x1x128xf32, #tpu.memory_space<vmem>>, vector<1x1x128xf32>
    %418 = vector.shape_cast %417 : vector<1x1x128xf32> to vector<1x128xf32>
    %419 = vector.shape_cast %415 : vector<1x128xf32> to vector<1x1x128xf32>
    tpu.vector_store %arg7[%416, %c0_118, %c0_119], %419 {strides = array<i32>} : memref<8x1x128xf32, #tpu.memory_space<vmem>>, vector<1x1x128xf32>,
    %c8_i32 = arith.constant 8 : i32
    %c0_120 = arith.constant 0 : index
    %c0_121 = arith.constant 0 : index
    %c0_122 = arith.constant 0 : index
    %420 = vector.load %arg7[%c0_120, %c0_121, %c0_122] : memref<8x1x128xf32, #tpu.memory_space<vmem>>, vector<8x1x128xf32>
    %cst_123 = arith.constant dense<0xFF800000> : vector<1x128xf32>
    %421 = vector.multi_reduction <maximumf>, %420, %cst_123 [0] : vector<8x1x128xf32> to vector<1x128xf32>
    %422 = vector.shape_cast %421 : vector<1x128xf32> to vector<1x1x128xf32>
    %423 = vector.broadcast %422 : vector<1x1x128xf32> to vector<8x1x128xf32>
    %424 = arith.subf %420, %423 : vector<8x1x128xf32>
    %425 = math.exp %424 : vector<8x1x128xf32>
    %cst_124 = arith.constant dense<0.000000e+00> : vector<1x128xf32>
    %426 = vector.multi_reduction <add>, %425, %cst_124 [0] : vector<8x1x128xf32> to vector<1x128xf32>
    %427 = vector.shape_cast %426 : vector<1x128xf32> to vector<1x1x128xf32>
    %428 = tpu.reciprocal %427 : vector<1x1x128xf32> -> vector<1x1x128xf32>
    %429 = vector.broadcast %428 : vector<1x1x128xf32> to vector<8x1x128xf32>
    %430 = arith.mulf %425, %429 : vector<8x1x128xf32>
    %c0_125 = arith.constant 0 : index
    %c0_126 = arith.constant 0 : index
    %c0_127 = arith.constant 0 : index
    %431 = vector.load %arg6[%c0_125, %c0_126, %c0_127] : memref<8x24x128xf32, #tpu.memory_space<vmem>>, vector<8x24x128xf32>
    %432 = vector.broadcast %430 : vector<8x1x128xf32> to vector<8x24x128xf32>
    %433 = arith.mulf %432, %431 : vector<8x24x128xf32>
    %cst_128 = arith.constant dense<0.000000e+00> : vector<24x128xf32>
    %434 = vector.multi_reduction <add>, %433, %cst_128 [0] : vector<8x24x128xf32> to vector<24x128xf32>
    %cst_129 = arith.constant dense<0.000000e+00> : vector<24x128xf32>
    %435 = tpu.matmul %3, %434, %cst_129 {dimension_numbers = #tpu.dot_dimension_numbers<[1], [0], [0], [1], [0, 0, 1, 1], [], []>} : vector<24x24xf32>, vector<24x128xf32>, vector<24x128xf32> -> vector<24x128xf32>
    %436 = vector.broadcast %9 : vector<24x1xf32> to vector<24x128xf32>
    %437 = arith.addf %435, %436 : vector<24x128xf32>
    %cst_130 = arith.constant 0.000000e+00 : f32
    %438 = vector.broadcast %cst_130 : f32 to vector<24x128xf32>
    %439 = arith.maximumf %437, %438 : vector<24x128xf32>
    %cst_131 = arith.constant dense<0.000000e+00> : vector<6x128xf32>
    %440 = tpu.matmul %4, %439, %cst_131 {dimension_numbers = #tpu.dot_dimension_numbers<[1], [0], [0], [1], [0, 0, 1, 1], [], []>} : vector<6x24xf32>, vector<24x128xf32>, vector<6x128xf32> -> vector<6x128xf32>
    %441 = vector.broadcast %10 : vector<6x1xf32> to vector<6x128xf32>
    %442 = arith.addf %440, %441 : vector<6x128xf32>
    %c0_132 = arith.constant 0 : index
    %c0_133 = arith.constant 0 : index
    %443 = vector.load %arg5[%c0_132, %c0_133] : memref<6x128xf32, #tpu.memory_space<vmem>>, vector<6x128xf32>
    tpu.vector_store %arg5[%c0_132, %c0_133], %442 {strides = array<i32>} : memref<6x128xf32, #tpu.memory_space<vmem>>, vector<6x128xf32>,
    return
  }
  func.func @transform_0(%arg0: i32) -> (i32, i32, i32) {
    %c0_i32 = arith.constant 0 : i32
    %c0_i32_0 = arith.constant 0 : i32
    %c0_i32_1 = arith.constant 0 : i32
    return %c0_i32, %c0_i32_0, %arg0 : i32, i32, i32
  }
  func.func @transform_1(%arg0: i32) -> (i32, i32) {
    %c0_i32 = arith.constant 0 : i32
    %c0_i32_0 = arith.constant 0 : i32
    %c0_i32_1 = arith.constant 0 : i32
    return %c0_i32, %c0_i32_0 : i32, i32
  }
  func.func @transform_2(%arg0: i32) -> (i32, i32) {
    %c0_i32 = arith.constant 0 : i32
    %c0_i32_0 = arith.constant 0 : i32
    %c0_i32_1 = arith.constant 0 : i32
    return %c0_i32, %c0_i32_0 : i32, i32
  }
  func.func @transform_3(%arg0: i32) -> (i32, i32) {
    %c0_i32 = arith.constant 0 : i32
    %c0_i32_0 = arith.constant 0 : i32
    %c0_i32_1 = arith.constant 0 : i32
    return %c0_i32, %c0_i32_0 : i32, i32
  }
  func.func @transform_4(%arg0: i32) -> (i32, i32) {
    %c0_i32 = arith.constant 0 : i32
    %c0_i32_0 = arith.constant 0 : i32
    return %c0_i32, %arg0 : i32, i32
  }
}

</mosaic_0001>

<llo_original>
// kernel: tpu_custom_call.1
$region0: #{tpu_custom_call.1}
  #allocation0 [shape = 'u32[]', space=smem, size = 0x4, offset = 0x4, fixed_abs, tag = 'smem constant byte address 0x4 - core index']
  #allocation1 [shape = 'u32[72,128]{1,0:T(1,128)}', space=vmem, size = 0x9000, scoped, tag = 'internal scratch']
  #allocation2 [shape = 'f32[8,24,128]{2,1,0:T(8,128)}', space=vmem, size = 0x18000, scoped, tag = 'scratch operand']
  #allocation3 [shape = 'f32[8,1,128]{2,1,0:T(1,128)}', space=vmem, size = 0x1000, scoped, tag = 'scratch operand']
  %s0 = inlined_call_operand.vmem [shape: bf16[8,20,128], index: 0, kind: input, shape index: {}]
  %s1 = inlined_call_operand.vmem [shape: bf16[72,20], index: 1, kind: input, shape index: {}]
  %s2 = inlined_call_operand.vmem [shape: f32[128,24], index: 2, kind: input, shape index: {}]
  %s3 = inlined_call_operand.vmem [shape: f32[176,1], index: 3, kind: input, shape index: {}]
  %s4 = inlined_call_operand.hbm [shape: f32[6,128], index: 4, kind: output, shape index: {}]
  %s5 = sld [smem:[#allocation0]]
  $region26: #{tpu_custom_call.1} parent=0
    _
  %s7 = ssub.s32 1, %s5
  %s8 = scalar_select 0, %s7, %s5
  $region1: #{tpu_custom_call.1} parent=0
    #allocation4 [shape = 'u8[4096]{0}', space=vmem, size = 0x1000, scoped, tag = 'output window, operand 0, single buffered']
    #allocation5 [shape = 's32[1]{0}', space=sflag, size = 0x4, scoped, tag = 'scoped memory for tpu_custom_call.1']
    %9 = vsyncpa [#allocation5], 0
    // Predicated region
    $region2: #{tpu_custom_call.1} parent=1 // pred_check
      _
    $region3: #{tpu_custom_call.1} parent=1 // pred_check_branch
      %11 = sbr.rel (0) target = $region5
    $region4: #{tpu_custom_call.1} parent=1 // pred_region
      _
    $region5: #{tpu_custom_call.1} parent=1 // pred_fallthru
      _
    // Predicated region
    $region6: #{tpu_custom_call.1} parent=1 // pred_check
      _
    $region7: #{tpu_custom_call.1} parent=1 // pred_check_branch
      %13 = sbr.rel (0) target = $region9
    $region8: #{tpu_custom_call.1} parent=1 // pred_region
      _
    $region9: #{tpu_custom_call.1} parent=1 // pred_fallthru
      _
    // Predicated region
    $region10: #{tpu_custom_call.1} parent=1 // pred_check
      _
    $region11: #{tpu_custom_call.1} parent=1 // pred_check_branch
      %15 = sbr.rel (0) target = $region13
    $region12: #{tpu_custom_call.1} parent=1 // pred_region
      _
    $region13: #{tpu_custom_call.1} parent=1 // pred_fallthru
      _
    // Predicated region
    $region14: #{tpu_custom_call.1} parent=1 // pred_check
      _
    $region15: #{tpu_custom_call.1} parent=1 // pred_check_branch
      %17 = sbr.rel (0) target = $region17
    $region16: #{tpu_custom_call.1} parent=1 // pred_region
      _
    $region17: #{tpu_custom_call.1} parent=1 // pred_fallthru
      _
    %v19 = vld [vmem:[%s1] sm:$0xf]
    %v20 = vld [vmem:[%s1 + $0x4] sm:$0xf]
    %v21 = vld [vmem:[%s1 + $0x8] sm:$0xf]
    %v22 = vld [vmem:[%s1 + $0xc] sm:$0xf]
    %v23 = vld [vmem:[%s1 + $0x10] sm:$0xf]
    %v24 = vld [vmem:[%s1 + $0x14] sm:$0xf]
    %v25 = vld [vmem:[%s1 + $0x18] sm:$0xf]
    %v26 = vld [vmem:[%s1 + $0x1c] sm:$0xf]
    %v27 = vld [vmem:[%s1 + $0x20] sm:$0xf]
    %v28 = vld [vmem:[%s2] sm:$0xff]
    %v29 = vld [vmem:[%s2 + $0x8] sm:$0xff]
    %v30 = vld [vmem:[%s2 + $0x10] sm:$0xff]
    %v31 = vld [vmem:[%s2 + $0x18] sm:$0xff]
    %v32 = vld [vmem:[%s2 + $0x20] sm:$0xff]
    %v33 = vld [vmem:[%s2 + $0x28] sm:$0xff]
    %v34 = vld [vmem:[%s2 + $0x30] sm:$0xff]
    %v35 = vld [vmem:[%s2 + $0x38] sm:$0xff]
    %v36 = vld [vmem:[%s2 + $0x40] sm:$0xff]
    %v37 = vld [vmem:[%s2 + $0x48] sm:$0xff]
    %v38 = vld [vmem:[%s2 + $0x50] sm:$0xff]
    %v39 = vld [vmem:[%s2 + $0x58] sm:$0xff]
    %v40 = vld [vmem:[%s2 + $0x60] sm:$0xff]
    %v41 = vld [vmem:[%s2 + $0x68] sm:$0xff]
    %v42 = vld [vmem:[%s2 + $0x70] sm:$0xff]
    %v43 = vld [vmem:[%s2 + $0x78] sm:$0x3f]
    %v44 = vld [vmem:[%s3] sm:$0xff]
    %v45 = vld [vmem:[%s3 + $0x8] sm:$0xff]
    %v46 = vld [vmem:[%s3 + $0x10] sm:$0xff]
    %v47 = vld [vmem:[%s3 + $0x18] sm:$0xff]
    %v48 = vld [vmem:[%s3 + $0x20] sm:$0xff]
    %v49 = vld [vmem:[%s3 + $0x28] sm:$0xff]
    %v50 = vld [vmem:[%s3 + $0x30] sm:$0xff]
    %v51 = vld [vmem:[%s3 + $0x38] sm:$0xff]
    %v52 = vld [vmem:[%s3 + $0x40] sm:$0xff]
    %v53 = vld [vmem:[%s3 + $0x48] sm:$0xff]
    %v54 = vld [vmem:[%s3 + $0x50] sm:$0xff]
    %v55 = vld [vmem:[%s3 + $0x58] sm:$0xff]
    %v56 = vld [vmem:[%s3 + $0x60] sm:$0xff]
    %v57 = vld [vmem:[%s3 + $0x68] sm:$0xff]
    %v58 = vld [vmem:[%s3 + $0x70] sm:$0xff]
    %v59 = vld [vmem:[%s3 + $0x78] sm:$0xff]
    %v60 = vld [vmem:[%s3 + $0x80] sm:$0xff]
    %v61 = vld [vmem:[%s3 + $0x88] sm:$0xff]
    %v62 = vld [vmem:[%s3 + $0x90] sm:$0xff]
    %v63 = vld [vmem:[%s3 + $0x98] sm:$0xff]
    %v64 = vld [vmem:[%s3 + $0xa0] sm:$0xff]
    %v65 = vld [vmem:[%s3 + $0xa8] sm:$0x3f]
    %v66 = vld [vmem:[%s0] sm:$0xf]
    %v67 = vld [vmem:[%s0 + $0x4] sm:$0xf]
    %v68 = vld [vmem:[%s0 + $0x8] sm:$0x3]
    %70 = vset.pattern.permute.xlu0 0
    %71 = vperm.xlu0 %70, %v44
    %v72 = vpop.permute.xlu0 %71
    %75 = vset.pattern.permute.xlu0 0
    %76 = vperm.xlu0 %75, %v45
    %v77 = vpop.permute.xlu0 %76
    %80 = vset.pattern.permute.xlu0 0
    %81 = vperm.xlu0 %80, %v46
    %v82 = vpop.permute.xlu0 %81
    %85 = vset.pattern.permute.xlu0 0
    %86 = vperm.xlu0 %85, %v47
    %v87 = vpop.permute.xlu0 %86
    %90 = vset.pattern.permute.xlu0 0
    %91 = vperm.xlu0 %90, %v48
    %v92 = vpop.permute.xlu0 %91
    %95 = vset.pattern.permute.xlu0 0
    %96 = vperm.xlu0 %95, %v49
    %v97 = vpop.permute.xlu0 %96
    %100 = vset.pattern.permute.xlu0 0
    %101 = vperm.xlu0 %100, %v50
    %v102 = vpop.permute.xlu0 %101
    %105 = vset.pattern.permute.xlu0 0
    %106 = vperm.xlu0 %105, %v51
    %v107 = vpop.permute.xlu0 %106
    %110 = vset.pattern.permute.xlu0 0
    %111 = vperm.xlu0 %110, %v52
    %v112 = vpop.permute.xlu0 %111
    %v123 = vunpack.c.l.b16 %v19
    %v124 = vunpack.c.l.b16 %v20
    %v125 = vunpack.c.l.b16 %v21
    %v126 = vunpack.c.l.b16 %v22
    %v127 = vunpack.c.l.b16 %v23
    %v128 = vunpack.c.l.b16 %v24
    %v129 = vunpack.c.l.b16 %v25
    %v130 = vunpack.c.l.b16 %v26
    %v131 = vunpack.c.l.b16 %v27
    %v132 = vpack.c.b16 %v124, %v123
    %v133 = vpack.c.b16 %v126, %v125
    %v134 = vpack.c.b16 %v128, %v127
    %v135 = vpack.c.b16 %v130, %v129
    %v136 = vpack.c.b16 %v131, %v131
    %v140 = vunpack.c.l.b16 %v66
    %v141 = vunpack.c.l.b16 %v67
    %v142 = vunpack.c.l.b16 %v68
    %v143 = vpack.c.b16 %v141, %v140
    %v144 = vpack.c.b16 %v142, %v142
    %vm146 = vcmask 162816
    %v148 = vsel %vm146, %v132, 0
    %v151 = vsel %vm146, %v133, 0
    %v154 = vsel %vm146, %v134, 0
    %v157 = vsel %vm146, %v135, 0
    %v160 = vsel %vm146, %v136, 0
    %vm162 = vcmask 1041408
    %v164 = vsel %vm162, %v144, 0
    %166 = vmatpush.bf16.msra.mxu0 0
    %167 = vmatpush.bf16.msra.mxu0 0
    %168 = vmatpush.bf16.msra.mxu0 0
    %169 = vmatpush.bf16.msra.mxu0 0
    %170 = vmatpush.bf16.msra.mxu0 0
    %171 = vmatpush.bf16.msra.mxu0 0
    %172 = vmatpush.bf16.msra.mxu0 %v164
    %173 = vmatpush.bf16.msra.mxu0 %v143
    %174 = vmatmul.bf16.gmra.mxu0 %v148
    %v175 = vpop.f32.mrf.mxu0
    %v176 = vadd.f32 %v72, %v175
    %v177 = vpop.f32.mrf.mxu0
    %v178 = vadd.f32 %v77, %v177
    %179 = vmatmul.bf16.gmra.mxu0 %v151
    %v180 = vpop.f32.mrf.mxu0
    %v181 = vadd.f32 %v82, %v180
    %v182 = vpop.f32.mrf.mxu0
    %v183 = vadd.f32 %v87, %v182
    %184 = vmatmul.bf16.gmra.mxu0 %v154
    %v185 = vpop.f32.mrf.mxu0
    %v186 = vadd.f32 %v92, %v185
    %v187 = vpop.f32.mrf.mxu0
    %v188 = vadd.f32 %v97, %v187
    %189 = vmatmul.bf16.gmra.mxu0 %v157
    %v190 = vpop.f32.mrf.mxu0
    %v191 = vadd.f32 %v102, %v190
    %v192 = vpop.f32.mrf.mxu0
    %v193 = vadd.f32 %v107, %v192
    %194 = vmatmul.bf16.gmra.mxu0 %v160
    %v195 = vpop.f32.mrf.mxu0
    %v196 = vadd.f32 %v112, %v195
    %v197 = vpop.f32.mrf.mxu0
    %198 = vdwg.mxu0
    %vm199 = vcmask 195584
    %v201 = vsel %vm199, %v28, 0
    %v204 = vsel %vm199, %v29, 0
    %v207 = vsel %vm199, %v30, 0
    %v210 = vsel %vm199, %v31, 0
    %v213 = vsel %vm199, %v32, 0
    %v216 = vsel %vm199, %v33, 0
    %v219 = vsel %vm199, %v34, 0
    %v222 = vsel %vm199, %v35, 0
    %v225 = vsel %vm199, %v36, 0
    %227 = vmatpush.msra.mxu0 0.0
    %228 = vmatpush.msra.mxu0 0.0
    %229 = vmatpush.msra.mxu0 0.0
    %230 = vmatpush.msra.mxu0 0.0
    %231 = vmatpush.msra.mxu0 0.0
    %232 = vmatpush.msra.mxu0 0.0
    %233 = vmatpush.msra.mxu0 0.0
    %234 = vmatpush.msra.mxu0 0.0
    %235 = vmatpush.msra.mxu0 0.0
    %236 = vmatpush.msra.mxu0 0.0
    %237 = vmatpush.msra.mxu0 0.0
    %238 = vmatpush.msra.mxu0 0.0
    %239 = vmatpush.msra.mxu0 0.0
    %240 = vmatpush.msra.mxu0 0.0
    %241 = vmatpush.msra.mxu0 0.0
    %242 = vmatpush.msra.mxu0 0.0
    %243 = vmatmul.f32.gmra.mxu0 %v201
    %v244 = vpop.f32.mrf.mxu0
    %v245 = vadd.f32 0.0, %v244
    %246 = vmatmul.f32.gmra.mxu0 %v204
    %v247 = vpop.f32.mrf.mxu0
    %v248 = vadd.f32 0.0, %v247
    %249 = vmatmul.f32.gmra.mxu0 %v207
    %v250 = vpop.f32.mrf.mxu0
    %v251 = vadd.f32 0.0, %v250
    %252 = vmatmul.f32.gmra.mxu0 %v210
    %v253 = vpop.f32.mrf.mxu0
    %v254 = vadd.f32 0.0, %v253
    %255 = vmatmul.f32.gmra.mxu0 %v213
    %v256 = vpop.f32.mrf.mxu0
    %v257 = vadd.f32 0.0, %v256
    %258 = vmatmul.f32.gmra.mxu0 %v216
    %v259 = vpop.f32.mrf.mxu0
    %v260 = vadd.f32 0.0, %v259
    %261 = vmatmul.f32.gmra.mxu0 %v219
    %v262 = vpop.f32.mrf.mxu0
    %v263 = vadd.f32 0.0, %v262
    %264 = vmatmul.f32.gmra.mxu0 %v222
    %v265 = vpop.f32.mrf.mxu0
    %v266 = vadd.f32 0.0, %v265
    %267 = vmatmul.f32.gmra.mxu0 %v225
    %v268 = vpop.f32.mrf.mxu0
    %v269 = vadd.f32 0.0, %v268
    %270 = vdwg.mxu0
    %v271 = vadd.f32 %v176, %v245
    %v272 = vadd.f32 %v178, %v248
    %v273 = vadd.f32 %v181, %v251
    %v274 = vxor.u32 %v271, 2147483648
    %v275 = vxor.u32 %v272, 2147483648
    %v276 = vxor.u32 %v273, 2147483648
    %v277 = vmul.f32 %v274, 1.442695
    %v278 = vpow.pop %v277
    %v279 = vmul.f32 %v275, 1.442695
    %v280 = vpow.pop %v279
    %v281 = vmul.f32 %v276, 1.442695
    %v282 = vpow.pop %v281
    %v283 = vadd.f32 %v278, 1.0
    %v284 = vadd.f32 %v280, 1.0
    %v285 = vadd.f32 %v282, 1.0
    %v286 = vrcp.pop %v283
    %v287 = vmul.f32 %v283, %v286
    %v288 = vsub.f32 1.0, %v287
    %v289 = vmul.f32 %v286, %v288
    %v290 = vadd.f32 %v286, %v289
    %vm291 = vweird.f32 %v283
    %vm292 = vweird.f32 %v286
    %vm293 = vmor %vm291, %vm292
    %v294 = vsel %vm293, %v286, %v290
    %v295 = vand.u32 2147483647, %v283
    %vm296 = vcmp.eq.f32.partialorder %v295, 8.507059e+37
    %v297 = vand.u32 %v283, 2147483648
    %v298 = vor.u32 1.1754944e-38, %v297
    %v299 = vsel %vm296, %v298, %v294
    %v300 = vmul.f32 1.0, %v299
    %v301 = vrcp.pop %v284
    %v302 = vmul.f32 %v284, %v301
    %v303 = vsub.f32 1.0, %v302
    %v304 = vmul.f32 %v301, %v303
    %v305 = vadd.f32 %v301, %v304
    %vm306 = vweird.f32 %v284
    %vm307 = vweird.f32 %v301
    %vm308 = vmor %vm306, %vm307
    %v309 = vsel %vm308, %v301, %v305
    %v310 = vand.u32 2147483647, %v284
    %vm311 = vcmp.eq.f32.partialorder %v310, 8.507059e+37
    %v312 = vand.u32 %v284, 2147483648
    %v313 = vor.u32 1.1754944e-38, %v312
    %v314 = vsel %vm311, %v313, %v309
    %v315 = vmul.f32 1.0, %v314
    %v316 = vrcp.pop %v285
    %v317 = vmul.f32 %v285, %v316
    %v318 = vsub.f32 1.0, %v317
    %v319 = vmul.f32 %v316, %v318
    %v320 = vadd.f32 %v316, %v319
    %vm321 = vweird.f32 %v285
    %vm322 = vweird.f32 %v316
    %vm323 = vmor %vm321, %vm322
    %v324 = vsel %vm323, %v316, %v320
    %v325 = vand.u32 2147483647, %v285
    %vm326 = vcmp.eq.f32.partialorder %v325, 8.507059e+37
    %v327 = vand.u32 %v285, 2147483648
    %v328 = vor.u32 1.1754944e-38, %v327
    %v329 = vsel %vm326, %v328, %v324
    %v330 = vmul.f32 1.0, %v329
    %v331 = vadd.f32 %v183, %v254
    %v332 = vadd.f32 %v186, %v257
    %v333 = vadd.f32 %v188, %v260
    %v334 = vxor.u32 %v331, 2147483648
    %v335 = vxor.u32 %v332, 2147483648
    %v336 = vxor.u32 %v333, 2147483648
    %v337 = vmul.f32 %v334, 1.442695
    %v338 = vpow.pop %v337
    %v339 = vmul.f32 %v335, 1.442695
    %v340 = vpow.pop %v339
    %v341 = vmul.f32 %v336, 1.442695
    %v342 = vpow.pop %v341
    %v343 = vadd.f32 %v338, 1.0
    %v344 = vadd.f32 %v340, 1.0
    %v345 = vadd.f32 %v342, 1.0
    %v346 = vrcp.pop %v343
    %v347 = vmul.f32 %v343, %v346
    %v348 = vsub.f32 1.0, %v347
    %v349 = vmul.f32 %v346, %v348
    %v350 = vadd.f32 %v346, %v349
    %vm351 = vweird.f32 %v343
    %vm352 = vweird.f32 %v346
    %vm353 = vmor %vm351, %vm352
    %v354 = vsel %vm353, %v346, %v350
    %v355 = vand.u32 2147483647, %v343
    %vm356 = vcmp.eq.f32.partialorder %v355, 8.507059e+37
    %v357 = vand.u32 %v343, 2147483648
    %v358 = vor.u32 1.1754944e-38, %v357
    %v359 = vsel %vm356, %v358, %v354
    %v360 = vmul.f32 1.0, %v359
    %v361 = vrcp.pop %v344
    %v362 = vmul.f32 %v344, %v361
    %v363 = vsub.f32 1.0, %v362
    %v364 = vmul.f32 %v361, %v363
    %v365 = vadd.f32 %v361, %v364
    %vm366 = vweird.f32 %v344
    %vm367 = vweird.f32 %v361
    %vm368 = vmor %vm366, %vm367
    %v369 = vsel %vm368, %v361, %v365
    %v370 = vand.u32 2147483647, %v344
    %vm371 = vcmp.eq.f32.partialorder %v370, 8.507059e+37
    %v372 = vand.u32 %v344, 2147483648
    %v373 = vor.u32 1.1754944e-38, %v372
    %v374 = vsel %vm371, %v373, %v369
    %v375 = vmul.f32 1.0, %v374
    %v376 = vrcp.pop %v345
    %v377 = vmul.f32 %v345, %v376
    %v378 = vsub.f32 1.0, %v377
    %v379 = vmul.f32 %v376, %v378
    %v380 = vadd.f32 %v376, %v379
    %vm381 = vweird.f32 %v345
    %vm382 = vweird.f32 %v376
    %vm383 = vmor %vm381, %vm382
    %v384 = vsel %vm383, %v376, %v380
    %v385 = vand.u32 2147483647, %v345
    %vm386 = vcmp.eq.f32.partialorder %v385, 8.507059e+37
    %v387 = vand.u32 %v345, 2147483648
    %v388 = vor.u32 1.1754944e-38, %v387
    %v389 = vsel %vm386, %v388, %v384
    %v390 = vmul.f32 1.0, %v389
    %392 = vset.pattern.permute.xlu0 0
    %393 = vperm.xlu0 %392, %v53
    %v394 = vpop.permute.xlu0 %393
    %397 = vset.pattern.permute.xlu0 0
    %398 = vperm.xlu0 %397, %v54
    %v399 = vpop.permute.xlu0 %398
    %402 = vset.pattern.permute.xlu0 0
    %403 = vperm.xlu0 %402, %v55
    %v404 = vpop.permute.xlu0 %403
    %v406 = vadd.f32 %v263, %v394
    %v407 = vadd.f32 %v266, %v399
    %v408 = vadd.f32 %v269, %v404
    %v409 = vmul.f32 %v300, %v406
    %v410 = vmul.f32 %v315, %v407
    %v411 = vmul.f32 %v330, %v408
    %v412 = vadd.f32 %v191, %v409
    %v413 = vadd.f32 %v193, %v410
    %v414 = vadd.f32 %v196, %v411
    %v415 = vtanh.pop %v412
    %v416 = vtanh.pop %v413
    %v417 = vtanh.pop %v414
    %v418 = vsub.f32 1.0, %v360
    %v419 = vsub.f32 1.0, %v375
    %v420 = vsub.f32 1.0, %v390
    %v421 = vmul.f32 %v418, %v415
    %v422 = vmul.f32 %v419, %v416
    %v423 = vmul.f32 %v420, %v417
    %v424 = vmul.f32 %v360, 0.0
    %v425 = vmul.f32 %v375, 0.0
    %v426 = vmul.f32 %v390, 0.0
    %v427 = vadd.f32 %v421, %v424
    %v428 = vadd.f32 %v422, %v425
    %v429 = vadd.f32 %v423, %v426
    %430 = vst [vmem:[#allocation2] sm:$0xff] %v427
    %431 = vst [vmem:[#allocation2 + $0x8] sm:$0xff] %v428
    %432 = vst [vmem:[#allocation2 + $0x10] sm:$0xff] %v429
    %434 = vset.pattern.permute.xlu0 0
    %435 = vperm.xlu0 %434, %v56
    %v436 = vpop.permute.xlu0 %435
    %439 = vset.pattern.permute.xlu0 0
    %440 = vperm.xlu0 %439, %v57
    %v441 = vpop.permute.xlu0 %440
    %444 = vset.pattern.permute.xlu0 0
    %445 = vperm.xlu0 %444, %v58
    %v446 = vpop.permute.xlu0 %445
    %v449 = vsel %vm199, %v37, 0
    %v452 = vsel %vm199, %v38, 0
    %v455 = vsel %vm199, %v39, 0
    %457 = vmatpush.msra.mxu0 0.0
    %458 = vmatpush.msra.mxu0 0.0
    %459 = vmatpush.msra.mxu0 0.0
    %460 = vmatpush.msra.mxu0 0.0
    %461 = vmatpush.msra.mxu0 0.0
    %462 = vmatpush.msra.mxu0 0.0
    %463 = vmatpush.msra.mxu0 0.0
    %464 = vmatpush.msra.mxu0 0.0
    %465 = vmatpush.msra.mxu0 0.0
    %466 = vmatpush.msra.mxu0 0.0
    %467 = vmatpush.msra.mxu0 0.0
    %468 = vmatpush.msra.mxu0 0.0
    %469 = vmatpush.msra.mxu0 0.0
    %470 = vmatpush.msra.mxu0 %v429
    %471 = vmatpush.msra.mxu0 %v428
    %472 = vmatpush.msra.mxu0 %v427
    %473 = vmatmul.f32.gmra.mxu0 %v449
    %v474 = vpop.f32.mrf.mxu0
    %v475 = vadd.f32 %v436, %v474
    %476 = vmatmul.f32.gmra.mxu0 %v452
    %v477 = vpop.f32.mrf.mxu0
    %v478 = vadd.f32 %v441, %v477
    %479 = vmatmul.f32.gmra.mxu0 %v455
    %v480 = vpop.f32.mrf.mxu0
    %v481 = vadd.f32 %v446, %v480
    %482 = vdwg.mxu0
    %v483 = vtanh.pop %v475
    %v484 = vtanh.pop %v478
    %v485 = vtanh.pop %v481
    %487 = vset.pattern.permute.xlu0 0
    %488 = vperm.xlu0 %487, %v59
    %v489 = vpop.permute.xlu0 %488
    %492 = vset.pattern.permute.xlu0 0
    %493 = vperm.xlu0 %492, %v60
    %v494 = vpop.permute.xlu0 %493
    %497 = vset.pattern.permute.xlu0 0
    %498 = vperm.xlu0 %497, %v61
    %v499 = vpop.permute.xlu0 %498
    %v501 = vmul.f32 %v489, %v483
    %v502 = vmul.f32 %v494, %v484
    %v503 = vmul.f32 %v499, %v485
    %v504 = vadd.f32 %v501, %v502
    %v505 = vadd.f32 %v504, %v503
    %v506 = vrot.slane %v505, 4
    %v507 = vadd.f32 %v505, %v506
    %v508 = vrot.slane %v507, 2
    %v509 = vadd.f32 %v507, %v508
    %v510 = vrot.slane %v509, 1
    %v511 = vadd.f32 %v509, %v510
    %512 = vst [vmem:[#allocation3] sm:$0x1] %v511
    %s513 = scalar_lea.vmem %s0, 12
    %v514 = vld [vmem:[%s513] sm:$0xf]
    %v515 = vld [vmem:[%s513 + $0x4] sm:$0xf]
    %v516 = vld [vmem:[%s513 + $0x8] sm:$0x3]
    %v520 = vunpack.c.l.b16 %v514
    %v521 = vunpack.c.l.b16 %v515
    %v522 = vunpack.c.l.b16 %v516
    %v523 = vpack.c.b16 %v521, %v520
    %v524 = vpack.c.b16 %v522, %v522
    %v527 = vsel %vm162, %v524, 0
    %529 = vmatpush.bf16.msra.mxu0 0
    %530 = vmatpush.bf16.msra.mxu0 0
    %531 = vmatpush.bf16.msra.mxu0 0
    %532 = vmatpush.bf16.msra.mxu0 0
    %533 = vmatpush.bf16.msra.mxu0 0
    %534 = vmatpush.bf16.msra.mxu0 0
    %535 = vmatpush.bf16.msra.mxu0 %v527
    %536 = vmatpush.bf16.msra.mxu0 %v523
    %537 = vmatmul.bf16.gmra.mxu0 %v148
    %v538 = vpop.f32.mrf.mxu0
    %v539 = vadd.f32 %v72, %v538
    %v540 = vpop.f32.mrf.mxu0
    %v541 = vadd.f32 %v77, %v540
    %542 = vmatmul.bf16.gmra.mxu0 %v151
    %v543 = vpop.f32.mrf.mxu0
    %v544 = vadd.f32 %v82, %v543
    %v545 = vpop.f32.mrf.mxu0
    %v546 = vadd.f32 %v87, %v545
    %547 = vmatmul.bf16.gmra.mxu0 %v154
    %v548 = vpop.f32.mrf.mxu0
    %v549 = vadd.f32 %v92, %v548
    %v550 = vpop.f32.mrf.mxu0
    %v551 = vadd.f32 %v97, %v550
    %552 = vmatmul.bf16.gmra.mxu0 %v157
    %v553 = vpop.f32.mrf.mxu0
    %v554 = vadd.f32 %v102, %v553
    %v555 = vpop.f32.mrf.mxu0
    %v556 = vadd.f32 %v107, %v555
    %557 = vmatmul.bf16.gmra.mxu0 %v160
    %v558 = vpop.f32.mrf.mxu0
    %v559 = vadd.f32 %v112, %v558
    %v560 = vpop.f32.mrf.mxu0
    %561 = vdwg.mxu0
    %562 = vmatpush.msra.mxu0 0.0
    %563 = vmatpush.msra.mxu0 0.0
    %564 = vmatpush.msra.mxu0 0.0
    %565 = vmatpush.msra.mxu0 0.0
    %566 = vmatpush.msra.mxu0 0.0
    %567 = vmatpush.msra.mxu0 0.0
    %568 = vmatpush.msra.mxu0 0.0
    %569 = vmatpush.msra.mxu0 0.0
    %570 = vmatpush.msra.mxu0 0.0
    %571 = vmatpush.msra.mxu0 0.0
    %572 = vmatpush.msra.mxu0 0.0
    %573 = vmatpush.msra.mxu0 0.0
    %574 = vmatpush.msra.mxu0 0.0
    %575 = vmatpush.msra.mxu0 %v429
    %576 = vmatpush.msra.mxu0 %v428
    %577 = vmatpush.msra.mxu0 %v427
    %578 = vmatmul.f32.gmra.mxu0 %v201
    %v579 = vpop.f32.mrf.mxu0
    %v580 = vadd.f32 0.0, %v579
    %581 = vmatmul.f32.gmra.mxu0 %v204
    %v582 = vpop.f32.mrf.mxu0
    %v583 = vadd.f32 0.0, %v582
    %584 = vmatmul.f32.gmra.mxu0 %v207
    %v585 = vpop.f32.mrf.mxu0
    %v586 = vadd.f32 0.0, %v585
    %587 = vmatmul.f32.gmra.mxu0 %v210
    %v588 = vpop.f32.mrf.mxu0
    %v589 = vadd.f32 0.0, %v588
    %590 = vmatmul.f32.gmra.mxu0 %v213
    %v591 = vpop.f32.mrf.mxu0
    %v592 = vadd.f32 0.0, %v591
    %593 = vmatmul.f32.gmra.mxu0 %v216
    %v594 = vpop.f32.mrf.mxu0
    %v595 = vadd.f32 0.0, %v594
    %596 = vmatmul.f32.gmra.mxu0 %v219
    %v597 = vpop.f32.mrf.mxu0
    %v598 = vadd.f32 0.0, %v597
    %599 = vmatmul.f32.gmra.mxu0 %v222
    %v600 = vpop.f32.mrf.mxu0
    %v601 = vadd.f32 0.0, %v600
    %602 = vmatmul.f32.gmra.mxu0 %v225
    %v603 = vpop.f32.mrf.mxu0
    %v604 = vadd.f32 0.0, %v603
    %605 = vdwg.mxu0
    %v606 = vadd.f32 %v539, %v580
    %v607 = vadd.f32 %v541, %v583
    %v608 = vadd.f32 %v544, %v586
    %v609 = vxor.u32 %v606, 2147483648
    %v610 = vxor.u32 %v607, 2147483648
    %v611 = vxor.u32 %v608, 2147483648
    %v612 = vmul.f32 %v609, 1.442695
    %v613 = vpow.pop %v612
    %v614 = vmul.f32 %v610, 1.442695
    %v615 = vpow.pop %v614
    %v616 = vmul.f32 %v611, 1.442695
    %v617 = vpow.pop %v616
    %v618 = vadd.f32 %v613, 1.0
    %v619 = vadd.f32 %v615, 1.0
    %v620 = vadd.f32 %v617, 1.0
    %v621 = vrcp.pop %v618
    %v622 = vmul.f32 %v618, %v621
    %v623 = vsub.f32 1.0, %v622
    %v624 = vmul.f32 %v621, %v623
    %v625 = vadd.f32 %v621, %v624
    %vm626 = vweird.f32 %v618
    %vm627 = vweird.f32 %v621
    %vm628 = vmor %vm626, %vm627
    %v629 = vsel %vm628, %v621, %v625
    %v630 = vand.u32 2147483647, %v618
    %vm631 = vcmp.eq.f32.partialorder %v630, 8.507059e+37
    %v632 = vand.u32 %v618, 2147483648
    %v633 = vor.u32 1.1754944e-38, %v632
    %v634 = vsel %vm631, %v633, %v629
    %v635 = vmul.f32 1.0, %v634
    %v636 = vrcp.pop %v619
    %v637 = vmul.f32 %v619, %v636
    %v638 = vsub.f32 1.0, %v637
    %v639 = vmul.f32 %v636, %v638
    %v640 = vadd.f32 %v636, %v639
    %vm641 = vweird.f32 %v619
    %vm642 = vweird.f32 %v636
    %vm643 = vmor %vm641, %vm642
    %v644 = vsel %vm643, %v636, %v640
    %v645 = vand.u32 2147483647, %v619
    %vm646 = vcmp.eq.f32.partialorder %v645, 8.507059e+37
    %v647 = vand.u32 %v619, 2147483648
    %v648 = vor.u32 1.1754944e-38, %v647
    %v649 = vsel %vm646, %v648, %v644
    %v650 = vmul.f32 1.0, %v649
    %v651 = vrcp.pop %v620
    %v652 = vmul.f32 %v620, %v651
    %v653 = vsub.f32 1.0, %v652
    %v654 = vmul.f32 %v651, %v653
    %v655 = vadd.f32 %v651, %v654
    %vm656 = vweird.f32 %v620
    %vm657 = vweird.f32 %v651
    %vm658 = vmor %vm656, %vm657
    %v659 = vsel %vm658, %v651, %v655
    %v660 = vand.u32 2147483647, %v620
    %vm661 = vcmp.eq.f32.partialorder %v660, 8.507059e+37
    %v662 = vand.u32 %v620, 2147483648
    %v663 = vor.u32 1.1754944e-38, %v662
    %v664 = vsel %vm661, %v663, %v659
    %v665 = vmul.f32 1.0, %v664
    %v666 = vadd.f32 %v546, %v589
    %v667 = vadd.f32 %v549, %v592
    %v668 = vadd.f32 %v551, %v595
    %v669 = vxor.u32 %v666, 2147483648
    %v670 = vxor.u32 %v667, 2147483648
    %v671 = vxor.u32 %v668, 2147483648
    %v672 = vmul.f32 %v669, 1.442695
    %v673 = vpow.pop %v672
    %v674 = vmul.f32 %v670, 1.442695
    %v675 = vpow.pop %v674
    %v676 = vmul.f32 %v671, 1.442695
    %v677 = vpow.pop %v676
    %v678 = vadd.f32 %v673, 1.0
    %v679 = vadd.f32 %v675, 1.0
    %v680 = vadd.f32 %v677, 1.0
    %v681 = vrcp.pop %v678
    %v682 = vmul.f32 %v678, %v681
    %v683 = vsub.f32 1.0, %v682
    %v684 = vmul.f32 %v681, %v683
    %v685 = vadd.f32 %v681, %v684
    %vm686 = vweird.f32 %v678
    %vm687 = vweird.f32 %v681
    %vm688 = vmor %vm686, %vm687
    %v689 = vsel %vm688, %v681, %v685
    %v690 = vand.u32 2147483647, %v678
    %vm691 = vcmp.eq.f32.partialorder %v690, 8.507059e+37
    %v692 = vand.u32 %v678, 2147483648
    %v693 = vor.u32 1.1754944e-38, %v692
    %v694 = vsel %vm691, %v693, %v689
    %v695 = vmul.f32 1.0, %v694
    %v696 = vrcp.pop %v679
    %v697 = vmul.f32 %v679, %v696
    %v698 = vsub.f32 1.0, %v697
    %v699 = vmul.f32 %v696, %v698
    %v700 = vadd.f32 %v696, %v699
    %vm701 = vweird.f32 %v679
    %vm702 = vweird.f32 %v696
    %vm703 = vmor %vm701, %vm702
    %v704 = vsel %vm703, %v696, %v700
    %v705 = vand.u32 2147483647, %v679
    %vm706 = vcmp.eq.f32.partialorder %v705, 8.507059e+37
    %v707 = vand.u32 %v679, 2147483648
    %v708 = vor.u32 1.1754944e-38, %v707
    %v709 = vsel %vm706, %v708, %v704
    %v710 = vmul.f32 1.0, %v709
    %v711 = vrcp.pop %v680
    %v712 = vmul.f32 %v680, %v711
    %v713 = vsub.f32 1.0, %v712
    %v714 = vmul.f32 %v711, %v713
    %v715 = vadd.f32 %v711, %v714
    %vm716 = vweird.f32 %v680
    %vm717 = vweird.f32 %v711
    %vm718 = vmor %vm716, %vm717
    %v719 = vsel %vm718, %v711, %v715
    %v720 = vand.u32 2147483647, %v680
    %vm721 = vcmp.eq.f32.partialorder %v720, 8.507059e+37
    %v722 = vand.u32 %v680, 2147483648
    %v723 = vor.u32 1.1754944e-38, %v722
    %v724 = vsel %vm721, %v723, %v719
    %v725 = vmul.f32 1.0, %v724
    %v726 = vadd.f32 %v598, %v394
    %v727 = vadd.f32 %v601, %v399
    %v728 = vadd.f32 %v604, %v404
    %v729 = vmul.f32 %v635, %v726
    %v730 = vmul.f32 %v650, %v727
    %v731 = vmul.f32 %v665, %v728
    %v732 = vadd.f32 %v554, %v729
    %v733 = vadd.f32 %v556, %v730
    %v734 = vadd.f32 %v559, %v731
    %v735 = vtanh.pop %v732
    %v736 = vtanh.pop %v733
    %v737 = vtanh.pop %v734
    %v738 = vsub.f32 1.0, %v695
    %v739 = vsub.f32 1.0, %v710
    %v740 = vsub.f32 1.0, %v725
    %v741 = vmul.f32 %v738, %v735
    %v742 = vmul.f32 %v739, %v736
    %v743 = vmul.f32 %v740, %v737
    %v744 = vmul.f32 %v695, %v427
    %v745 = vmul.f32 %v710, %v428
    %v746 = vmul.f32 %v725, %v429
    %v747 = vadd.f32 %v741, %v744
    %v748 = vadd.f32 %v742, %v745
    %v749 = vadd.f32 %v743, %v746
    %s750 = scalar_lea.vmem [#allocation2], 24
    %751 = vst [vmem:[%s750] sm:$0xff] %v747
    %752 = vst [vmem:[%s750 + $0x8] sm:$0xff] %v748
    %753 = vst [vmem:[%s750 + $0x10] sm:$0xff] %v749
    %754 = vmatpush.msra.mxu0 0.0
    %755 = vmatpush.msra.mxu0 0.0
    %756 = vmatpush.msra.mxu0 0.0
    %757 = vmatpush.msra.mxu0 0.0
    %758 = vmatpush.msra.mxu0 0.0
    %759 = vmatpush.msra.mxu0 0.0
    %760 = vmatpush.msra.mxu0 0.0
    %761 = vmatpush.msra.mxu0 0.0
    %762 = vmatpush.msra.mxu0 0.0
    %763 = vmatpush.msra.mxu0 0.0
    %764 = vmatpush.msra.mxu0 0.0
    %765 = vmatpush.msra.mxu0 0.0
    %766 = vmatpush.msra.mxu0 0.0
    %767 = vmatpush.msra.mxu0 %v749
    %768 = vmatpush.msra.mxu0 %v748
    %769 = vmatpush.msra.mxu0 %v747
    %770 = vmatmul.f32.gmra.mxu0 %v449
    %v771 = vpop.f32.mrf.mxu0
    %v772 = vadd.f32 %v436, %v771
    %773 = vmatmul.f32.gmra.mxu0 %v452
    %v774 = vpop.f32.mrf.mxu0
    %v775 = vadd.f32 %v441, %v774
    %776 = vmatmul.f32.gmra.mxu0 %v455
    %v777 = vpop.f32.mrf.mxu0
    %v778 = vadd.f32 %v446, %v777
    %779 = vdwg.mxu0
    %v780 = vtanh.pop %v772
    %v781 = vtanh.pop %v775
    %v782 = vtanh.pop %v778
    %v783 = vmul.f32 %v489, %v780
    %v784 = vmul.f32 %v494, %v781
    %v785 = vmul.f32 %v499, %v782
    %v786 = vadd.f32 %v783, %v784
    %v787 = vadd.f32 %v786, %v785
    %v788 = vrot.slane %v787, 4
    %v789 = vadd.f32 %v787, %v788
    %v790 = vrot.slane %v789, 2
    %v791 = vadd.f32 %v789, %v790
    %v792 = vrot.slane %v791, 1
    %v793 = vadd.f32 %v791, %v792
    %s794 = scalar_lea.vmem [#allocation3], 1
    %795 = vst [vmem:[%s794] sm:$0x1] %v793
    %s796 = scalar_lea.vmem %s0, 24
    %v797 = vld [vmem:[%s796] sm:$0xf]
    %v798 = vld [vmem:[%s796 + $0x4] sm:$0xf]
    %v799 = vld [vmem:[%s796 + $0x8] sm:$0x3]
    %v803 = vunpack.c.l.b16 %v797
    %v804 = vunpack.c.l.b16 %v798
    %v805 = vunpack.c.l.b16 %v799
    %v806 = vpack.c.b16 %v804, %v803
    %v807 = vpack.c.b16 %v805, %v805
    %v810 = vsel %vm162, %v807, 0
    %812 = vmatpush.bf16.msra.mxu0 0
    %813 = vmatpush.bf16.msra.mxu0 0
    %814 = vmatpush.bf16.msra.mxu0 0
    %815 = vmatpush.bf16.msra.mxu0 0
    %816 = vmatpush.bf16.msra.mxu0 0
    %817 = vmatpush.bf16.msra.mxu0 0
    %818 = vmatpush.bf16.msra.mxu0 %v810
    %819 = vmatpush.bf16.msra.mxu0 %v806
    %820 = vmatmul.bf16.gmra.mxu0 %v148
    %v821 = vpop.f32.mrf.mxu0
    %v822 = vadd.f32 %v72, %v821
    %v823 = vpop.f32.mrf.mxu0
    %v824 = vadd.f32 %v77, %v823
    %825 = vmatmul.bf16.gmra.mxu0 %v151
    %v826 = vpop.f32.mrf.mxu0
    %v827 = vadd.f32 %v82, %v826
    %v828 = vpop.f32.mrf.mxu0
    %v829 = vadd.f32 %v87, %v828
    %830 = vmatmul.bf16.gmra.mxu0 %v154
    %v831 = vpop.f32.mrf.mxu0
    %v832 = vadd.f32 %v92, %v831
    %v833 = vpop.f32.mrf.mxu0
    %v834 = vadd.f32 %v97, %v833
    %835 = vmatmul.bf16.gmra.mxu0 %v157
    %v836 = vpop.f32.mrf.mxu0
    %v837 = vadd.f32 %v102, %v836
    %v838 = vpop.f32.mrf.mxu0
    %v839 = vadd.f32 %v107, %v838
    %840 = vmatmul.bf16.gmra.mxu0 %v160
    %v841 = vpop.f32.mrf.mxu0
    %v842 = vadd.f32 %v112, %v841
    %v843 = vpop.f32.mrf.mxu0
    %844 = vdwg.mxu0
    %845 = vmatpush.msra.mxu0 0.0
    %846 = vmatpush.msra.mxu0 0.0
    %847 = vmatpush.msra.mxu0 0.0
    %848 = vmatpush.msra.mxu0 0.0
    %849 = vmatpush.msra.mxu0 0.0
    %850 = vmatpush.msra.mxu0 0.0
    %851 = vmatpush.msra.mxu0 0.0
    %852 = vmatpush.msra.mxu0 0.0
    %853 = vmatpush.msra.mxu0 0.0
    %854 = vmatpush.msra.mxu0 0.0
    %855 = vmatpush.msra.mxu0 0.0
    %856 = vmatpush.msra.mxu0 0.0
    %857 = vmatpush.msra.mxu0 0.0
    %858 = vmatpush.msra.mxu0 %v749
    %859 = vmatpush.msra.mxu0 %v748
    %860 = vmatpush.msra.mxu0 %v747
    %861 = vmatmul.f32.gmra.mxu0 %v201
    %v862 = vpop.f32.mrf.mxu0
    %v863 = vadd.f32 0.0, %v862
    %864 = vmatmul.f32.gmra.mxu0 %v204
    %v865 = vpop.f32.mrf.mxu0
    %v866 = vadd.f32 0.0, %v865
    %867 = vmatmul.f32.gmra.mxu0 %v207
    %v868 = vpop.f32.mrf.mxu0
    %v869 = vadd.f32 0.0, %v868
    %870 = vmatmul.f32.gmra.mxu0 %v210
    %v871 = vpop.f32.mrf.mxu0
    %v872 = vadd.f32 0.0, %v871
    %873 = vmatmul.f32.gmra.mxu0 %v213
    %v874 = vpop.f32.mrf.mxu0
    %v875 = vadd.f32 0.0, %v874
    %876 = vmatmul.f32.gmra.mxu0 %v216
    %v877 = vpop.f32.mrf.mxu0
    %v878 = vadd.f32 0.0, %v877
    %879 = vmatmul.f32.gmra.mxu0 %v219
    %v880 = vpop.f32.mrf.mxu0
    %v881 = vadd.f32 0.0, %v880
    %882 = vmatmul.f32.gmra.mxu0 %v222
    %v883 = vpop.f32.mrf.mxu0
    %v884 = vadd.f32 0.0, %v883
    %885 = vmatmul.f32.gmra.mxu0 %v225
    %v886 = vpop.f32.mrf.mxu0
    %v887 = vadd.f32 0.0, %v886
    %888 = vdwg.mxu0
    %v889 = vadd.f32 %v822, %v863
    %v890 = vadd.f32 %v824, %v866
    %v891 = vadd.f32 %v827, %v869
    %v892 = vxor.u32 %v889, 2147483648
    %v893 = vxor.u32 %v890, 2147483648
    %v894 = vxor.u32 %v891, 2147483648
    %v895 = vmul.f32 %v892, 1.442695
    %v896 = vpow.pop %v895
    %v897 = vmul.f32 %v893, 1.442695
    %v898 = vpow.pop %v897
    %v899 = vmul.f32 %v894, 1.442695
    %v900 = vpow.pop %v899
    %v901 = vadd.f32 %v896, 1.0
    %v902 = vadd.f32 %v898, 1.0
    %v903 = vadd.f32 %v900, 1.0
    %v904 = vrcp.pop %v901
    %v905 = vmul.f32 %v901, %v904
    %v906 = vsub.f32 1.0, %v905
    %v907 = vmul.f32 %v904, %v906
    %v908 = vadd.f32 %v904, %v907
    %vm909 = vweird.f32 %v901
    %vm910 = vweird.f32 %v904
    %vm911 = vmor %vm909, %vm910
    %v912 = vsel %vm911, %v904, %v908
    %v913 = vand.u32 2147483647, %v901
    %vm914 = vcmp.eq.f32.partialorder %v913, 8.507059e+37
    %v915 = vand.u32 %v901, 2147483648
    %v916 = vor.u32 1.1754944e-38, %v915
    %v917 = vsel %vm914, %v916, %v912
    %v918 = vmul.f32 1.0, %v917
    %v919 = vrcp.pop %v902
    %v920 = vmul.f32 %v902, %v919
    %v921 = vsub.f32 1.0, %v920
    %v922 = vmul.f32 %v919, %v921
    %v923 = vadd.f32 %v919, %v922
    %vm924 = vweird.f32 %v902
    %vm925 = vweird.f32 %v919
    %vm926 = vmor %vm924, %vm925
    %v927 = vsel %vm926, %v919, %v923
    %v928 = vand.u32 2147483647, %v902
    %vm929 = vcmp.eq.f32.partialorder %v928, 8.507059e+37
    %v930 = vand.u32 %v902, 2147483648
    %v931 = vor.u32 1.1754944e-38, %v930
    %v932 = vsel %vm929, %v931, %v927
    %v933 = vmul.f32 1.0, %v932
    %v934 = vrcp.pop %v903
    %v935 = vmul.f32 %v903, %v934
    %v936 = vsub.f32 1.0, %v935
    %v937 = vmul.f32 %v934, %v936
    %v938 = vadd.f32 %v934, %v937
    %vm939 = vweird.f32 %v903
    %vm940 = vweird.f32 %v934
    %vm941 = vmor %vm939, %vm940
    %v942 = vsel %vm941, %v934, %v938
    %v943 = vand.u32 2147483647, %v903
    %vm944 = vcmp.eq.f32.partialorder %v943, 8.507059e+37
    %v945 = vand.u32 %v903, 2147483648
    %v946 = vor.u32 1.1754944e-38, %v945
    %v947 = vsel %vm944, %v946, %v942
    %v948 = vmul.f32 1.0, %v947
    %v949 = vadd.f32 %v829, %v872
    %v950 = vadd.f32 %v832, %v875
    %v951 = vadd.f32 %v834, %v878
    %v952 = vxor.u32 %v949, 2147483648
    %v953 = vxor.u32 %v950, 2147483648
    %v954 = vxor.u32 %v951, 2147483648
    %v955 = vmul.f32 %v952, 1.442695
    %v956 = vpow.pop %v955
    %v957 = vmul.f32 %v953, 1.442695
    %v958 = vpow.pop %v957
    %v959 = vmul.f32 %v954, 1.442695
    %v960 = vpow.pop %v959
    %v961 = vadd.f32 %v956, 1.0
    %v962 = vadd.f32 %v958, 1.0
    %v963 = vadd.f32 %v960, 1.0
    %v964 = vrcp.pop %v961
    %v965 = vmul.f32 %v961, %v964
    %v966 = vsub.f32 1.0, %v965
    %v967 = vmul.f32 %v964, %v966
    %v968 = vadd.f32 %v964, %v967
    %vm969 = vweird.f32 %v961
    %vm970 = vweird.f32 %v964
    %vm971 = vmor %vm969, %vm970
    %v972 = vsel %vm971, %v964, %v968
    %v973 = vand.u32 2147483647, %v961
    %vm974 = vcmp.eq.f32.partialorder %v973, 8.507059e+37
    %v975 = vand.u32 %v961, 2147483648
    %v976 = vor.u32 1.1754944e-38, %v975
    %v977 = vsel %vm974, %v976, %v972
    %v978 = vmul.f32 1.0, %v977
    %v979 = vrcp.pop %v962
    %v980 = vmul.f32 %v962, %v979
    %v981 = vsub.f32 1.0, %v980
    %v982 = vmul.f32 %v979, %v981
    %v983 = vadd.f32 %v979, %v982
    %vm984 = vweird.f32 %v962
    %vm985 = vweird.f32 %v979
    %vm986 = vmor %vm984, %vm985
    %v987 = vsel %vm986, %v979, %v983
    %v988 = vand.u32 2147483647, %v962
    %vm989 = vcmp.eq.f32.partialorder %v988, 8.507059e+37
    %v990 = vand.u32 %v962, 2147483648
    %v991 = vor.u32 1.1754944e-38, %v990
    %v992 = vsel %vm989, %v991, %v987
    %v993 = vmul.f32 1.0, %v992
    %v994 = vrcp.pop %v963
    %v995 = vmul.f32 %v963, %v994
    %v996 = vsub.f32 1.0, %v995
    %v997 = vmul.f32 %v994, %v996
    %v998 = vadd.f32 %v994, %v997
    %vm999 = vweird.f32 %v963
    %vm1000 = vweird.f32 %v994
    %vm1001 = vmor %vm999, %vm1000
    %v1002 = vsel %vm1001, %v994, %v998
    %v1003 = vand.u32 2147483647, %v963
    %vm1004 = vcmp.eq.f32.partialorder %v1003, 8.507059e+37
    %v1005 = vand.u32 %v963, 2147483648
    %v1006 = vor.u32 1.1754944e-38, %v1005
    %v1007 = vsel %vm1004, %v1006, %v1002
    %v1008 = vmul.f32 1.0, %v1007
    %v1009 = vadd.f32 %v881, %v394
    %v1010 = vadd.f32 %v884, %v399
    %v1011 = vadd.f32 %v887, %v404
    %v1012 = vmul.f32 %v918, %v1009
    %v1013 = vmul.f32 %v933, %v1010
    %v1014 = vmul.f32 %v948, %v1011
    %v1015 = vadd.f32 %v837, %v1012
    %v1016 = vadd.f32 %v839, %v1013
    %v1017 = vadd.f32 %v842, %v1014
    %v1018 = vtanh.pop %v1015
    %v1019 = vtanh.pop %v1016
    %v1020 = vtanh.pop %v1017
    %v1021 = vsub.f32 1.0, %v978
    %v1022 = vsub.f32 1.0, %v993
    %v1023 = vsub.f32 1.0, %v1008
    %v1024 = vmul.f32 %v1021, %v1018
    %v1025 = vmul.f32 %v1022, %v1019
    %v1026 = vmul.f32 %v1023, %v1020
    %v1027 = vmul.f32 %v978, %v747
    %v1028 = vmul.f32 %v993, %v748
    %v1029 = vmul.f32 %v1008, %v749
    %v1030 = vadd.f32 %v1024, %v1027
    %v1031 = vadd.f32 %v1025, %v1028
    %v1032 = vadd.f32 %v1026, %v1029
    %s1033 = scalar_lea.vmem [#allocation2], 48
    %1034 = vst [vmem:[%s1033] sm:$0xff] %v1030
    %1035 = vst [vmem:[%s1033 + $0x8] sm:$0xff] %v1031
    %1036 = vst [vmem:[%s1033 + $0x10] sm:$0xff] %v1032
    %1037 = vmatpush.msra.mxu0 0.0
    %1038 = vmatpush.msra.mxu0 0.0
    %1039 = vmatpush.msra.mxu0 0.0
    %1040 = vmatpush.msra.mxu0 0.0
    %1041 = vmatpush.msra.mxu0 0.0
    %1042 = vmatpush.msra.mxu0 0.0
    %1043 = vmatpush.msra.mxu0 0.0
    %1044 = vmatpush.msra.mxu0 0.0
    %1045 = vmatpush.msra.mxu0 0.0
    %1046 = vmatpush.msra.mxu0 0.0
    %1047 = vmatpush.msra.mxu0 0.0
    %1048 = vmatpush.msra.mxu0 0.0
    %1049 = vmatpush.msra.mxu0 0.0
    %1050 = vmatpush.msra.mxu0 %v1032
    %1051 = vmatpush.msra.mxu0 %v1031
    %1052 = vmatpush.msra.mxu0 %v1030
    %1053 = vmatmul.f32.gmra.mxu0 %v449
    %v1054 = vpop.f32.mrf.mxu0
    %v1055 = vadd.f32 %v436, %v1054
    %1056 = vmatmul.f32.gmra.mxu0 %v452
    %v1057 = vpop.f32.mrf.mxu0
    %v1058 = vadd.f32 %v441, %v1057
    %1059 = vmatmul.f32.gmra.mxu0 %v455
    %v1060 = vpop.f32.mrf.mxu0
    %v1061 = vadd.f32 %v446, %v1060
    %1062 = vdwg.mxu0
    %v1063 = vtanh.pop %v1055
    %v1064 = vtanh.pop %v1058
    %v1065 = vtanh.pop %v1061
    %v1066 = vmul.f32 %v489, %v1063
    %v1067 = vmul.f32 %v494, %v1064
    %v1068 = vmul.f32 %v499, %v1065
    %v1069 = vadd.f32 %v1066, %v1067
    %v1070 = vadd.f32 %v1069, %v1068
    %v1071 = vrot.slane %v1070, 4
    %v1072 = vadd.f32 %v1070, %v1071
    %v1073 = vrot.slane %v1072, 2
    %v1074 = vadd.f32 %v1072, %v1073
    %v1075 = vrot.slane %v1074, 1
    %v1076 = vadd.f32 %v1074, %v1075
    %s1077 = scalar_lea.vmem [#allocation3], 2
    %1078 = vst [vmem:[%s1077] sm:$0x1] %v1076
    %s1079 = scalar_lea.vmem %s0, 36
    %v1080 = vld [vmem:[%s1079] sm:$0xf]
    %v1081 = vld [vmem:[%s1079 + $0x4] sm:$0xf]
    %v1082 = vld [vmem:[%s1079 + $0x8] sm:$0x3]
    %v1086 = vunpack.c.l.b16 %v1080
    %v1087 = vunpack.c.l.b16 %v1081
    %v1088 = vunpack.c.l.b16 %v1082
    %v1089 = vpack.c.b16 %v1087, %v1086
    %v1090 = vpack.c.b16 %v1088, %v1088
    %v1093 = vsel %vm162, %v1090, 0
    %1095 = vmatpush.bf16.msra.mxu0 0
    %1096 = vmatpush.bf16.msra.mxu0 0
    %1097 = vmatpush.bf16.msra.mxu0 0
    %1098 = vmatpush.bf16.msra.mxu0 0
    %1099 = vmatpush.bf16.msra.mxu0 0
    %1100 = vmatpush.bf16.msra.mxu0 0
    %1101 = vmatpush.bf16.msra.mxu0 %v1093
    %1102 = vmatpush.bf16.msra.mxu0 %v1089
    %1103 = vmatmul.bf16.gmra.mxu0 %v148
    %v1104 = vpop.f32.mrf.mxu0
    %v1105 = vadd.f32 %v72, %v1104
    %v1106 = vpop.f32.mrf.mxu0
    %v1107 = vadd.f32 %v77, %v1106
    %1108 = vmatmul.bf16.gmra.mxu0 %v151
    %v1109 = vpop.f32.mrf.mxu0
    %v1110 = vadd.f32 %v82, %v1109
    %v1111 = vpop.f32.mrf.mxu0
    %v1112 = vadd.f32 %v87, %v1111
    %1113 = vmatmul.bf16.gmra.mxu0 %v154
    %v1114 = vpop.f32.mrf.mxu0
    %v1115 = vadd.f32 %v92, %v1114
    %v1116 = vpop.f32.mrf.mxu0
    %v1117 = vadd.f32 %v97, %v1116
    %1118 = vmatmul.bf16.gmra.mxu0 %v157
    %v1119 = vpop.f32.mrf.mxu0
    %v1120 = vadd.f32 %v102, %v1119
    %v1121 = vpop.f32.mrf.mxu0
    %v1122 = vadd.f32 %v107, %v1121
    %1123 = vmatmul.bf16.gmra.mxu0 %v160
    %v1124 = vpop.f32.mrf.mxu0
    %v1125 = vadd.f32 %v112, %v1124
    %v1126 = vpop.f32.mrf.mxu0
    %1127 = vdwg.mxu0
    %1128 = vmatpush.msra.mxu0 0.0
    %1129 = vmatpush.msra.mxu0 0.0
    %1130 = vmatpush.msra.mxu0 0.0
    %1131 = vmatpush.msra.mxu0 0.0
    %1132 = vmatpush.msra.mxu0 0.0
    %1133 = vmatpush.msra.mxu0 0.0
    %1134 = vmatpush.msra.mxu0 0.0
    %1135 = vmatpush.msra.mxu0 0.0
    %1136 = vmatpush.msra.mxu0 0.0
    %1137 = vmatpush.msra.mxu0 0.0
    %1138 = vmatpush.msra.mxu0 0.0
    %1139 = vmatpush.msra.mxu0 0.0
    %1140 = vmatpush.msra.mxu0 0.0
    %1141 = vmatpush.msra.mxu0 %v1032
    %1142 = vmatpush.msra.mxu0 %v1031
    %1143 = vmatpush.msra.mxu0 %v1030
    %1144 = vmatmul.f32.gmra.mxu0 %v201
    %v1145 = vpop.f32.mrf.mxu0
    %v1146 = vadd.f32 0.0, %v1145
    %1147 = vmatmul.f32.gmra.mxu0 %v204
    %v1148 = vpop.f32.mrf.mxu0
    %v1149 = vadd.f32 0.0, %v1148
    %1150 = vmatmul.f32.gmra.mxu0 %v207
    %v1151 = vpop.f32.mrf.mxu0
    %v1152 = vadd.f32 0.0, %v1151
    %1153 = vmatmul.f32.gmra.mxu0 %v210
    %v1154 = vpop.f32.mrf.mxu0
    %v1155 = vadd.f32 0.0, %v1154
    %1156 = vmatmul.f32.gmra.mxu0 %v213
    %v1157 = vpop.f32.mrf.mxu0
    %v1158 = vadd.f32 0.0, %v1157
    %1159 = vmatmul.f32.gmra.mxu0 %v216
    %v1160 = vpop.f32.mrf.mxu0
    %v1161 = vadd.f32 0.0, %v1160
    %1162 = vmatmul.f32.gmra.mxu0 %v219
    %v1163 = vpop.f32.mrf.mxu0
    %v1164 = vadd.f32 0.0, %v1163
    %1165 = vmatmul.f32.gmra.mxu0 %v222
    %v1166 = vpop.f32.mrf.mxu0
    %v1167 = vadd.f32 0.0, %v1166
    %1168 = vmatmul.f32.gmra.mxu0 %v225
    %v1169 = vpop.f32.mrf.mxu0
    %v1170 = vadd.f32 0.0, %v1169
    %1171 = vdwg.mxu0
    %v1172 = vadd.f32 %v1105, %v1146
    %v1173 = vadd.f32 %v1107, %v1149
    %v1174 = vadd.f32 %v1110, %v1152
    %v1175 = vxor.u32 %v1172, 2147483648
    %v1176 = vxor.u32 %v1173, 2147483648
    %v1177 = vxor.u32 %v1174, 2147483648
    %v1178 = vmul.f32 %v1175, 1.442695
    %v1179 = vpow.pop %v1178
    %v1180 = vmul.f32 %v1176, 1.442695
    %v1181 = vpow.pop %v1180
    %v1182 = vmul.f32 %v1177, 1.442695
    %v1183 = vpow.pop %v1182
    %v1184 = vadd.f32 %v1179, 1.0
    %v1185 = vadd.f32 %v1181, 1.0
    %v1186 = vadd.f32 %v1183, 1.0
    %v1187 = vrcp.pop %v1184
    %v1188 = vmul.f32 %v1184, %v1187
    %v1189 = vsub.f32 1.0, %v1188
    %v1190 = vmul.f32 %v1187, %v1189
    %v1191 = vadd.f32 %v1187, %v1190
    %vm1192 = vweird.f32 %v1184
    %vm1193 = vweird.f32 %v1187
    %vm1194 = vmor %vm1192, %vm1193
    %v1195 = vsel %vm1194, %v1187, %v1191
    %v1196 = vand.u32 2147483647, %v1184
    %vm1197 = vcmp.eq.f32.partialorder %v1196, 8.507059e+37
    %v1198 = vand.u32 %v1184, 2147483648
    %v1199 = vor.u32 1.1754944e-38, %v1198
    %v1200 = vsel %vm1197, %v1199, %v1195
    %v1201 = vmul.f32 1.0, %v1200
    %v1202 = vrcp.pop %v1185
    %v1203 = vmul.f32 %v1185, %v1202
    %v1204 = vsub.f32 1.0, %v1203
    %v1205 = vmul.f32 %v1202, %v1204
    %v1206 = vadd.f32 %v1202, %v1205
    %vm1207 = vweird.f32 %v1185
    %vm1208 = vweird.f32 %v1202
    %vm1209 = vmor %vm1207, %vm1208
    %v1210 = vsel %vm1209, %v1202, %v1206
    %v1211 = vand.u32 2147483647, %v1185
    %vm1212 = vcmp.eq.f32.partialorder %v1211, 8.507059e+37
    %v1213 = vand.u32 %v1185, 2147483648
    %v1214 = vor.u32 1.1754944e-38, %v1213
    %v1215 = vsel %vm1212, %v1214, %v1210
    %v1216 = vmul.f32 1.0, %v1215
    %v1217 = vrcp.pop %v1186
    %v1218 = vmul.f32 %v1186, %v1217
    %v1219 = vsub.f32 1.0, %v1218
    %v1220 = vmul.f32 %v1217, %v1219
    %v1221 = vadd.f32 %v1217, %v1220
    %vm1222 = vweird.f32 %v1186
    %vm1223 = vweird.f32 %v1217
    %vm1224 = vmor %vm1222, %vm1223
    %v1225 = vsel %vm1224, %v1217, %v1221
    %v1226 = vand.u32 2147483647, %v1186
    %vm1227 = vcmp.eq.f32.partialorder %v1226, 8.507059e+37
    %v1228 = vand.u32 %v1186, 2147483648
    %v1229 = vor.u32 1.1754944e-38, %v1228
    %v1230 = vsel %vm1227, %v1229, %v1225
    %v1231 = vmul.f32 1.0, %v1230
    %v1232 = vadd.f32 %v1112, %v1155
    %v1233 = vadd.f32 %v1115, %v1158
    %v1234 = vadd.f32 %v1117, %v1161
    %v1235 = vxor.u32 %v1232, 2147483648
    %v1236 = vxor.u32 %v1233, 2147483648
    %v1237 = vxor.u32 %v1234, 2147483648
    %v1238 = vmul.f32 %v1235, 1.442695
    %v1239 = vpow.pop %v1238
    %v1240 = vmul.f32 %v1236, 1.442695
    %v1241 = vpow.pop %v1240
    %v1242 = vmul.f32 %v1237, 1.442695
    %v1243 = vpow.pop %v1242
    %v1244 = vadd.f32 %v1239, 1.0
    %v1245 = vadd.f32 %v1241, 1.0
    %v1246 = vadd.f32 %v1243, 1.0
    %v1247 = vrcp.pop %v1244
    %v1248 = vmul.f32 %v1244, %v1247
    %v1249 = vsub.f32 1.0, %v1248
    %v1250 = vmul.f32 %v1247, %v1249
    %v1251 = vadd.f32 %v1247, %v1250
    %vm1252 = vweird.f32 %v1244
    %vm1253 = vweird.f32 %v1247
    %vm1254 = vmor %vm1252, %vm1253
    %v1255 = vsel %vm1254, %v1247, %v1251
    %v1256 = vand.u32 2147483647, %v1244
    %vm1257 = vcmp.eq.f32.partialorder %v1256, 8.507059e+37
    %v1258 = vand.u32 %v1244, 2147483648
    %v1259 = vor.u32 1.1754944e-38, %v1258
    %v1260 = vsel %vm1257, %v1259, %v1255
    %v1261 = vmul.f32 1.0, %v1260
    %v1262 = vrcp.pop %v1245
    %v1263 = vmul.f32 %v1245, %v1262
    %v1264 = vsub.f32 1.0, %v1263
    %v1265 = vmul.f32 %v1262, %v1264
    %v1266 = vadd.f32 %v1262, %v1265
    %vm1267 = vweird.f32 %v1245
    %vm1268 = vweird.f32 %v1262
    %vm1269 = vmor %vm1267, %vm1268
    %v1270 = vsel %vm1269, %v1262, %v1266
    %v1271 = vand.u32 2147483647, %v1245
    %vm1272 = vcmp.eq.f32.partialorder %v1271, 8.507059e+37
    %v1273 = vand.u32 %v1245, 2147483648
    %v1274 = vor.u32 1.1754944e-38, %v1273
    %v1275 = vsel %vm1272, %v1274, %v1270
    %v1276 = vmul.f32 1.0, %v1275
    %v1277 = vrcp.pop %v1246
    %v1278 = vmul.f32 %v1246, %v1277
    %v1279 = vsub.f32 1.0, %v1278
    %v1280 = vmul.f32 %v1277, %v1279
    %v1281 = vadd.f32 %v1277, %v1280
    %vm1282 = vweird.f32 %v1246
    %vm1283 = vweird.f32 %v1277
    %vm1284 = vmor %vm1282, %vm1283
    %v1285 = vsel %vm1284, %v1277, %v1281
    %v1286 = vand.u32 2147483647, %v1246
    %vm1287 = vcmp.eq.f32.partialorder %v1286, 8.507059e+37
    %v1288 = vand.u32 %v1246, 2147483648
    %v1289 = vor.u32 1.1754944e-38, %v1288
    %v1290 = vsel %vm1287, %v1289, %v1285
    %v1291 = vmul.f32 1.0, %v1290
    %v1292 = vadd.f32 %v1164, %v394
    %v1293 = vadd.f32 %v1167, %v399
    %v1294 = vadd.f32 %v1170, %v404
    %v1295 = vmul.f32 %v1201, %v1292
    %v1296 = vmul.f32 %v1216, %v1293
    %v1297 = vmul.f32 %v1231, %v1294
    %v1298 = vadd.f32 %v1120, %v1295
    %v1299 = vadd.f32 %v1122, %v1296
    %v1300 = vadd.f32 %v1125, %v1297
    %v1301 = vtanh.pop %v1298
    %v1302 = vtanh.pop %v1299
    %v1303 = vtanh.pop %v1300
    %v1304 = vsub.f32 1.0, %v1261
    %v1305 = vsub.f32 1.0, %v1276
    %v1306 = vsub.f32 1.0, %v1291
    %v1307 = vmul.f32 %v1304, %v1301
    %v1308 = vmul.f32 %v1305, %v1302
    %v1309 = vmul.f32 %v1306, %v1303
    %v1310 = vmul.f32 %v1261, %v1030
    %v1311 = vmul.f32 %v1276, %v1031
    %v1312 = vmul.f32 %v1291, %v1032
    %v1313 = vadd.f32 %v1307, %v1310
    %v1314 = vadd.f32 %v1308, %v1311
    %v1315 = vadd.f32 %v1309, %v1312
    %s1316 = scalar_lea.vmem [#allocation2], 72
    %1317 = vst [vmem:[%s1316] sm:$0xff] %v1313
    %1318 = vst [vmem:[%s1316 + $0x8] sm:$0xff] %v1314
    %1319 = vst [vmem:[%s1316 + $0x10] sm:$0xff] %v1315
    %1320 = vmatpush.msra.mxu0 0.0
    %1321 = vmatpush.msra.mxu0 0.0
    %1322 = vmatpush.msra.mxu0 0.0
    %1323 = vmatpush.msra.mxu0 0.0
    %1324 = vmatpush.msra.mxu0 0.0
    %1325 = vmatpush.msra.mxu0 0.0
    %1326 = vmatpush.msra.mxu0 0.0
    %1327 = vmatpush.msra.mxu0 0.0
    %1328 = vmatpush.msra.mxu0 0.0
    %1329 = vmatpush.msra.mxu0 0.0
    %1330 = vmatpush.msra.mxu0 0.0
    %1331 = vmatpush.msra.mxu0 0.0
    %1332 = vmatpush.msra.mxu0 0.0
    %1333 = vmatpush.msra.mxu0 %v1315
    %1334 = vmatpush.msra.mxu0 %v1314
    %1335 = vmatpush.msra.mxu0 %v1313
    %1336 = vmatmul.f32.gmra.mxu0 %v449
    %v1337 = vpop.f32.mrf.mxu0
    %v1338 = vadd.f32 %v436, %v1337
    %1339 = vmatmul.f32.gmra.mxu0 %v452
    %v1340 = vpop.f32.mrf.mxu0
    %v1341 = vadd.f32 %v441, %v1340
    %1342 = vmatmul.f32.gmra.mxu0 %v455
    %v1343 = vpop.f32.mrf.mxu0
    %v1344 = vadd.f32 %v446, %v1343
    %1345 = vdwg.mxu0
    %v1346 = vtanh.pop %v1338
    %v1347 = vtanh.pop %v1341
    %v1348 = vtanh.pop %v1344
    %v1349 = vmul.f32 %v489, %v1346
    %v1350 = vmul.f32 %v494, %v1347
    %v1351 = vmul.f32 %v499, %v1348
    %v1352 = vadd.f32 %v1349, %v1350
    %v1353 = vadd.f32 %v1352, %v1351
    %v1354 = vrot.slane %v1353, 4
    %v1355 = vadd.f32 %v1353, %v1354
    %v1356 = vrot.slane %v1355, 2
    %v1357 = vadd.f32 %v1355, %v1356
    %v1358 = vrot.slane %v1357, 1
    %v1359 = vadd.f32 %v1357, %v1358
    %s1360 = scalar_lea.vmem [#allocation3], 3
    %1361 = vst [vmem:[%s1360] sm:$0x1] %v1359
    %s1362 = scalar_lea.vmem %s0, 48
    %v1363 = vld [vmem:[%s1362] sm:$0xf]
    %v1364 = vld [vmem:[%s1362 + $0x4] sm:$0xf]
    %v1365 = vld [vmem:[%s1362 + $0x8] sm:$0x3]
    %v1369 = vunpack.c.l.b16 %v1363
    %v1370 = vunpack.c.l.b16 %v1364
    %v1371 = vunpack.c.l.b16 %v1365
    %v1372 = vpack.c.b16 %v1370, %v1369
    %v1373 = vpack.c.b16 %v1371, %v1371
    %v1376 = vsel %vm162, %v1373, 0
    %1378 = vmatpush.bf16.msra.mxu0 0
    %1379 = vmatpush.bf16.msra.mxu0 0
    %1380 = vmatpush.bf16.msra.mxu0 0
    %1381 = vmatpush.bf16.msra.mxu0 0
    %1382 = vmatpush.bf16.msra.mxu0 0
    %1383 = vmatpush.bf16.msra.mxu0 0
    %1384 = vmatpush.bf16.msra.mxu0 %v1376
    %1385 = vmatpush.bf16.msra.mxu0 %v1372
    %1386 = vmatmul.bf16.gmra.mxu0 %v148
    %v1387 = vpop.f32.mrf.mxu0
    %v1388 = vadd.f32 %v72, %v1387
    %v1389 = vpop.f32.mrf.mxu0
    %v1390 = vadd.f32 %v77, %v1389
    %1391 = vmatmul.bf16.gmra.mxu0 %v151
    %v1392 = vpop.f32.mrf.mxu0
    %v1393 = vadd.f32 %v82, %v1392
    %v1394 = vpop.f32.mrf.mxu0
    %v1395 = vadd.f32 %v87, %v1394
    %1396 = vmatmul.bf16.gmra.mxu0 %v154
    %v1397 = vpop.f32.mrf.mxu0
    %v1398 = vadd.f32 %v92, %v1397
    %v1399 = vpop.f32.mrf.mxu0
    %v1400 = vadd.f32 %v97, %v1399
    %1401 = vmatmul.bf16.gmra.mxu0 %v157
    %v1402 = vpop.f32.mrf.mxu0
    %v1403 = vadd.f32 %v102, %v1402
    %v1404 = vpop.f32.mrf.mxu0
    %v1405 = vadd.f32 %v107, %v1404
    %1406 = vmatmul.bf16.gmra.mxu0 %v160
    %v1407 = vpop.f32.mrf.mxu0
    %v1408 = vadd.f32 %v112, %v1407
    %v1409 = vpop.f32.mrf.mxu0
    %1410 = vdwg.mxu0
    %1411 = vmatpush.msra.mxu0 0.0
    %1412 = vmatpush.msra.mxu0 0.0
    %1413 = vmatpush.msra.mxu0 0.0
    %1414 = vmatpush.msra.mxu0 0.0
    %1415 = vmatpush.msra.mxu0 0.0
    %1416 = vmatpush.msra.mxu0 0.0
    %1417 = vmatpush.msra.mxu0 0.0
    %1418 = vmatpush.msra.mxu0 0.0
    %1419 = vmatpush.msra.mxu0 0.0
    %1420 = vmatpush.msra.mxu0 0.0
    %1421 = vmatpush.msra.mxu0 0.0
    %1422 = vmatpush.msra.mxu0 0.0
    %1423 = vmatpush.msra.mxu0 0.0
    %1424 = vmatpush.msra.mxu0 %v1315
    %1425 = vmatpush.msra.mxu0 %v1314
    %1426 = vmatpush.msra.mxu0 %v1313
    %1427 = vmatmul.f32.gmra.mxu0 %v201
    %v1428 = vpop.f32.mrf.mxu0
    %v1429 = vadd.f32 0.0, %v1428
    %1430 = vmatmul.f32.gmra.mxu0 %v204
    %v1431 = vpop.f32.mrf.mxu0
    %v1432 = vadd.f32 0.0, %v1431
    %1433 = vmatmul.f32.gmra.mxu0 %v207
    %v1434 = vpop.f32.mrf.mxu0
    %v1435 = vadd.f32 0.0, %v1434
    %1436 = vmatmul.f32.gmra.mxu0 %v210
    %v1437 = vpop.f32.mrf.mxu0
    %v1438 = vadd.f32 0.0, %v1437
    %1439 = vmatmul.f32.gmra.mxu0 %v213
    %v1440 = vpop.f32.mrf.mxu0
    %v1441 = vadd.f32 0.0, %v1440
    %1442 = vmatmul.f32.gmra.mxu0 %v216
    %v1443 = vpop.f32.mrf.mxu0
    %v1444 = vadd.f32 0.0, %v1443
    %1445 = vmatmul.f32.gmra.mxu0 %v219
    %v1446 = vpop.f32.mrf.mxu0
    %v1447 = vadd.f32 0.0, %v1446
    %1448 = vmatmul.f32.gmra.mxu0 %v222
    %v1449 = vpop.f32.mrf.mxu0
    %v1450 = vadd.f32 0.0, %v1449
    %1451 = vmatmul.f32.gmra.mxu0 %v225
    %v1452 = vpop.f32.mrf.mxu0
    %v1453 = vadd.f32 0.0, %v1452
    %1454 = vdwg.mxu0
    %v1455 = vadd.f32 %v1388, %v1429
    %v1456 = vadd.f32 %v1390, %v1432
    %v1457 = vadd.f32 %v1393, %v1435
    %v1458 = vxor.u32 %v1455, 2147483648
    %v1459 = vxor.u32 %v1456, 2147483648
    %v1460 = vxor.u32 %v1457, 2147483648
    %v1461 = vmul.f32 %v1458, 1.442695
    %v1462 = vpow.pop %v1461
    %v1463 = vmul.f32 %v1459, 1.442695
    %v1464 = vpow.pop %v1463
    %v1465 = vmul.f32 %v1460, 1.442695
    %v1466 = vpow.pop %v1465
    %v1467 = vadd.f32 %v1462, 1.0
    %v1468 = vadd.f32 %v1464, 1.0
    %v1469 = vadd.f32 %v1466, 1.0
    %v1470 = vrcp.pop %v1467
    %v1471 = vmul.f32 %v1467, %v1470
    %v1472 = vsub.f32 1.0, %v1471
    %v1473 = vmul.f32 %v1470, %v1472
    %v1474 = vadd.f32 %v1470, %v1473
    %vm1475 = vweird.f32 %v1467
    %vm1476 = vweird.f32 %v1470
    %vm1477 = vmor %vm1475, %vm1476
    %v1478 = vsel %vm1477, %v1470, %v1474
    %v1479 = vand.u32 2147483647, %v1467
    %vm1480 = vcmp.eq.f32.partialorder %v1479, 8.507059e+37
    %v1481 = vand.u32 %v1467, 2147483648
    %v1482 = vor.u32 1.1754944e-38, %v1481
    %v1483 = vsel %vm1480, %v1482, %v1478
    %v1484 = vmul.f32 1.0, %v1483
    %v1485 = vrcp.pop %v1468
    %v1486 = vmul.f32 %v1468, %v1485
    %v1487 = vsub.f32 1.0, %v1486
    %v1488 = vmul.f32 %v1485, %v1487
    %v1489 = vadd.f32 %v1485, %v1488
    %vm1490 = vweird.f32 %v1468
    %vm1491 = vweird.f32 %v1485
    %vm1492 = vmor %vm1490, %vm1491
    %v1493 = vsel %vm1492, %v1485, %v1489
    %v1494 = vand.u32 2147483647, %v1468
    %vm1495 = vcmp.eq.f32.partialorder %v1494, 8.507059e+37
    %v1496 = vand.u32 %v1468, 2147483648
    %v1497 = vor.u32 1.1754944e-38, %v1496
    %v1498 = vsel %vm1495, %v1497, %v1493
    %v1499 = vmul.f32 1.0, %v1498
    %v1500 = vrcp.pop %v1469
    %v1501 = vmul.f32 %v1469, %v1500
    %v1502 = vsub.f32 1.0, %v1501
    %v1503 = vmul.f32 %v1500, %v1502
    %v1504 = vadd.f32 %v1500, %v1503
    %vm1505 = vweird.f32 %v1469
    %vm1506 = vweird.f32 %v1500
    %vm1507 = vmor %vm1505, %vm1506
    %v1508 = vsel %vm1507, %v1500, %v1504
    %v1509 = vand.u32 2147483647, %v1469
    %vm1510 = vcmp.eq.f32.partialorder %v1509, 8.507059e+37
    %v1511 = vand.u32 %v1469, 2147483648
    %v1512 = vor.u32 1.1754944e-38, %v1511
    %v1513 = vsel %vm1510, %v1512, %v1508
    %v1514 = vmul.f32 1.0, %v1513
    %v1515 = vadd.f32 %v1395, %v1438
    %v1516 = vadd.f32 %v1398, %v1441
    %v1517 = vadd.f32 %v1400, %v1444
    %v1518 = vxor.u32 %v1515, 2147483648
    %v1519 = vxor.u32 %v1516, 2147483648
    %v1520 = vxor.u32 %v1517, 2147483648
    %v1521 = vmul.f32 %v1518, 1.442695
    %v1522 = vpow.pop %v1521
    %v1523 = vmul.f32 %v1519, 1.442695
    %v1524 = vpow.pop %v1523
    %v1525 = vmul.f32 %v1520, 1.442695
    %v1526 = vpow.pop %v1525
    %v1527 = vadd.f32 %v1522, 1.0
    %v1528 = vadd.f32 %v1524, 1.0
    %v1529 = vadd.f32 %v1526, 1.0
    %v1530 = vrcp.pop %v1527
    %v1531 = vmul.f32 %v1527, %v1530
    %v1532 = vsub.f32 1.0, %v1531
    %v1533 = vmul.f32 %v1530, %v1532
    %v1534 = vadd.f32 %v1530, %v1533
    %vm1535 = vweird.f32 %v1527
    %vm1536 = vweird.f32 %v1530
    %vm1537 = vmor %vm1535, %vm1536
    %v1538 = vsel %vm1537, %v1530, %v1534
    %v1539 = vand.u32 2147483647, %v1527
    %vm1540 = vcmp.eq.f32.partialorder %v1539, 8.507059e+37
    %v1541 = vand.u32 %v1527, 2147483648
    %v1542 = vor.u32 1.1754944e-38, %v1541
    %v1543 = vsel %vm1540, %v1542, %v1538
    %v1544 = vmul.f32 1.0, %v1543
    %v1545 = vrcp.pop %v1528
    %v1546 = vmul.f32 %v1528, %v1545
    %v1547 = vsub.f32 1.0, %v1546
    %v1548 = vmul.f32 %v1545, %v1547
    %v1549 = vadd.f32 %v1545, %v1548
    %vm1550 = vweird.f32 %v1528
    %vm1551 = vweird.f32 %v1545
    %vm1552 = vmor %vm1550, %vm1551
    %v1553 = vsel %vm1552, %v1545, %v1549
    %v1554 = vand.u32 2147483647, %v1528
    %vm1555 = vcmp.eq.f32.partialorder %v1554, 8.507059e+37
    %v1556 = vand.u32 %v1528, 2147483648
    %v1557 = vor.u32 1.1754944e-38, %v1556
    %v1558 = vsel %vm1555, %v1557, %v1553
    %v1559 = vmul.f32 1.0, %v1558
    %v1560 = vrcp.pop %v1529
    %v1561 = vmul.f32 %v1529, %v1560
    %v1562 = vsub.f32 1.0, %v1561
    %v1563 = vmul.f32 %v1560, %v1562
    %v1564 = vadd.f32 %v1560, %v1563
    %vm1565 = vweird.f32 %v1529
    %vm1566 = vweird.f32 %v1560
    %vm1567 = vmor %vm1565, %vm1566
    %v1568 = vsel %vm1567, %v1560, %v1564
    %v1569 = vand.u32 2147483647, %v1529
    %vm1570 = vcmp.eq.f32.partialorder %v1569, 8.507059e+37
    %v1571 = vand.u32 %v1529, 2147483648
    %v1572 = vor.u32 1.1754944e-38, %v1571
    %v1573 = vsel %vm1570, %v1572, %v1568
    %v1574 = vmul.f32 1.0, %v1573
    %v1575 = vadd.f32 %v1447, %v394
    %v1576 = vadd.f32 %v1450, %v399
    %v1577 = vadd.f32 %v1453, %v404
    %v1578 = vmul.f32 %v1484, %v1575
    %v1579 = vmul.f32 %v1499, %v1576
    %v1580 = vmul.f32 %v1514, %v1577
    %v1581 = vadd.f32 %v1403, %v1578
    %v1582 = vadd.f32 %v1405, %v1579
    %v1583 = vadd.f32 %v1408, %v1580
    %v1584 = vtanh.pop %v1581
    %v1585 = vtanh.pop %v1582
    %v1586 = vtanh.pop %v1583
    %v1587 = vsub.f32 1.0, %v1544
    %v1588 = vsub.f32 1.0, %v1559
    %v1589 = vsub.f32 1.0, %v1574
    %v1590 = vmul.f32 %v1587, %v1584
    %v1591 = vmul.f32 %v1588, %v1585
    %v1592 = vmul.f32 %v1589, %v1586
    %v1593 = vmul.f32 %v1544, %v1313
    %v1594 = vmul.f32 %v1559, %v1314
    %v1595 = vmul.f32 %v1574, %v1315
    %v1596 = vadd.f32 %v1590, %v1593
    %v1597 = vadd.f32 %v1591, %v1594
    %v1598 = vadd.f32 %v1592, %v1595
    %s1599 = scalar_lea.vmem [#allocation2], 96
    %1600 = vst [vmem:[%s1599] sm:$0xff] %v1596
    %1601 = vst [vmem:[%s1599 + $0x8] sm:$0xff] %v1597
    %1602 = vst [vmem:[%s1599 + $0x10] sm:$0xff] %v1598
    %1603 = vmatpush.msra.mxu0 0.0
    %1604 = vmatpush.msra.mxu0 0.0
    %1605 = vmatpush.msra.mxu0 0.0
    %1606 = vmatpush.msra.mxu0 0.0
    %1607 = vmatpush.msra.mxu0 0.0
    %1608 = vmatpush.msra.mxu0 0.0
    %1609 = vmatpush.msra.mxu0 0.0
    %1610 = vmatpush.msra.mxu0 0.0
    %1611 = vmatpush.msra.mxu0 0.0
    %1612 = vmatpush.msra.mxu0 0.0
    %1613 = vmatpush.msra.mxu0 0.0
    %1614 = vmatpush.msra.mxu0 0.0
    %1615 = vmatpush.msra.mxu0 0.0
    %1616 = vmatpush.msra.mxu0 %v1598
    %1617 = vmatpush.msra.mxu0 %v1597
    %1618 = vmatpush.msra.mxu0 %v1596
    %1619 = vmatmul.f32.gmra.mxu0 %v449
    %v1620 = vpop.f32.mrf.mxu0
    %v1621 = vadd.f32 %v436, %v1620
    %1622 = vmatmul.f32.gmra.mxu0 %v452
    %v1623 = vpop.f32.mrf.mxu0
    %v1624 = vadd.f32 %v441, %v1623
    %1625 = vmatmul.f32.gmra.mxu0 %v455
    %v1626 = vpop.f32.mrf.mxu0
    %v1627 = vadd.f32 %v446, %v1626
    %1628 = vdwg.mxu0
    %v1629 = vtanh.pop %v1621
    %v1630 = vtanh.pop %v1624
    %v1631 = vtanh.pop %v1627
    %v1632 = vmul.f32 %v489, %v1629
    %v1633 = vmul.f32 %v494, %v1630
    %v1634 = vmul.f32 %v499, %v1631
    %v1635 = vadd.f32 %v1632, %v1633
    %v1636 = vadd.f32 %v1635, %v1634
    %v1637 = vrot.slane %v1636, 4
    %v1638 = vadd.f32 %v1636, %v1637
    %v1639 = vrot.slane %v1638, 2
    %v1640 = vadd.f32 %v1638, %v1639
    %v1641 = vrot.slane %v1640, 1
    %v1642 = vadd.f32 %v1640, %v1641
    %s1643 = scalar_lea.vmem [#allocation3], 4
    %1644 = vst [vmem:[%s1643] sm:$0x1] %v1642
    %s1645 = scalar_lea.vmem %s0, 60
    %v1646 = vld [vmem:[%s1645] sm:$0xf]
    %v1647 = vld [vmem:[%s1645 + $0x4] sm:$0xf]
    %v1648 = vld [vmem:[%s1645 + $0x8] sm:$0x3]
    %v1652 = vunpack.c.l.b16 %v1646
    %v1653 = vunpack.c.l.b16 %v1647
    %v1654 = vunpack.c.l.b16 %v1648
    %v1655 = vpack.c.b16 %v1653, %v1652
    %v1656 = vpack.c.b16 %v1654, %v1654
    %v1659 = vsel %vm162, %v1656, 0
    %1661 = vmatpush.bf16.msra.mxu0 0
    %1662 = vmatpush.bf16.msra.mxu0 0
    %1663 = vmatpush.bf16.msra.mxu0 0
    %1664 = vmatpush.bf16.msra.mxu0 0
    %1665 = vmatpush.bf16.msra.mxu0 0
    %1666 = vmatpush.bf16.msra.mxu0 0
    %1667 = vmatpush.bf16.msra.mxu0 %v1659
    %1668 = vmatpush.bf16.msra.mxu0 %v1655
    %1669 = vmatmul.bf16.gmra.mxu0 %v148
    %v1670 = vpop.f32.mrf.mxu0
    %v1671 = vadd.f32 %v72, %v1670
    %v1672 = vpop.f32.mrf.mxu0
    %v1673 = vadd.f32 %v77, %v1672
    %1674 = vmatmul.bf16.gmra.mxu0 %v151
    %v1675 = vpop.f32.mrf.mxu0
    %v1676 = vadd.f32 %v82, %v1675
    %v1677 = vpop.f32.mrf.mxu0
    %v1678 = vadd.f32 %v87, %v1677
    %1679 = vmatmul.bf16.gmra.mxu0 %v154
    %v1680 = vpop.f32.mrf.mxu0
    %v1681 = vadd.f32 %v92, %v1680
    %v1682 = vpop.f32.mrf.mxu0
    %v1683 = vadd.f32 %v97, %v1682
    %1684 = vmatmul.bf16.gmra.mxu0 %v157
    %v1685 = vpop.f32.mrf.mxu0
    %v1686 = vadd.f32 %v102, %v1685
    %v1687 = vpop.f32.mrf.mxu0
    %v1688 = vadd.f32 %v107, %v1687
    %1689 = vmatmul.bf16.gmra.mxu0 %v160
    %v1690 = vpop.f32.mrf.mxu0
    %v1691 = vadd.f32 %v112, %v1690
    %v1692 = vpop.f32.mrf.mxu0
    %1693 = vdwg.mxu0
    %1694 = vmatpush.msra.mxu0 0.0
    %1695 = vmatpush.msra.mxu0 0.0
    %1696 = vmatpush.msra.mxu0 0.0
    %1697 = vmatpush.msra.mxu0 0.0
    %1698 = vmatpush.msra.mxu0 0.0
    %1699 = vmatpush.msra.mxu0 0.0
    %1700 = vmatpush.msra.mxu0 0.0
    %1701 = vmatpush.msra.mxu0 0.0
    %1702 = vmatpush.msra.mxu0 0.0
    %1703 = vmatpush.msra.mxu0 0.0
    %1704 = vmatpush.msra.mxu0 0.0
    %1705 = vmatpush.msra.mxu0 0.0
    %1706 = vmatpush.msra.mxu0 0.0
    %1707 = vmatpush.msra.mxu0 %v1598
    %1708 = vmatpush.msra.mxu0 %v1597
    %1709 = vmatpush.msra.mxu0 %v1596
    %1710 = vmatmul.f32.gmra.mxu0 %v201
    %v1711 = vpop.f32.mrf.mxu0
    %v1712 = vadd.f32 0.0, %v1711
    %1713 = vmatmul.f32.gmra.mxu0 %v204
    %v1714 = vpop.f32.mrf.mxu0
    %v1715 = vadd.f32 0.0, %v1714
    %1716 = vmatmul.f32.gmra.mxu0 %v207
    %v1717 = vpop.f32.mrf.mxu0
    %v1718 = vadd.f32 0.0, %v1717
    %1719 = vmatmul.f32.gmra.mxu0 %v210
    %v1720 = vpop.f32.mrf.mxu0
    %v1721 = vadd.f32 0.0, %v1720
    %1722 = vmatmul.f32.gmra.mxu0 %v213
    %v1723 = vpop.f32.mrf.mxu0
    %v1724 = vadd.f32 0.0, %v1723
    %1725 = vmatmul.f32.gmra.mxu0 %v216
    %v1726 = vpop.f32.mrf.mxu0
    %v1727 = vadd.f32 0.0, %v1726
    %1728 = vmatmul.f32.gmra.mxu0 %v219
    %v1729 = vpop.f32.mrf.mxu0
    %v1730 = vadd.f32 0.0, %v1729
    %1731 = vmatmul.f32.gmra.mxu0 %v222
    %v1732 = vpop.f32.mrf.mxu0
    %v1733 = vadd.f32 0.0, %v1732
    %1734 = vmatmul.f32.gmra.mxu0 %v225
    %v1735 = vpop.f32.mrf.mxu0
    %v1736 = vadd.f32 0.0, %v1735
    %1737 = vdwg.mxu0
    %v1738 = vadd.f32 %v1671, %v1712
    %v1739 = vadd.f32 %v1673, %v1715
    %v1740 = vadd.f32 %v1676, %v1718
    %v1741 = vxor.u32 %v1738, 2147483648
    %v1742 = vxor.u32 %v1739, 2147483648
    %v1743 = vxor.u32 %v1740, 2147483648
    %v1744 = vmul.f32 %v1741, 1.442695
    %v1745 = vpow.pop %v1744
    %v1746 = vmul.f32 %v1742, 1.442695
    %v1747 = vpow.pop %v1746
    %v1748 = vmul.f32 %v1743, 1.442695
    %v1749 = vpow.pop %v1748
    %v1750 = vadd.f32 %v1745, 1.0
    %v1751 = vadd.f32 %v1747, 1.0
    %v1752 = vadd.f32 %v1749, 1.0
    %v1753 = vrcp.pop %v1750
    %v1754 = vmul.f32 %v1750, %v1753
    %v1755 = vsub.f32 1.0, %v1754
    %v1756 = vmul.f32 %v1753, %v1755
    %v1757 = vadd.f32 %v1753, %v1756
    %vm1758 = vweird.f32 %v1750
    %vm1759 = vweird.f32 %v1753
    %vm1760 = vmor %vm1758, %vm1759
    %v1761 = vsel %vm1760, %v1753, %v1757
    %v1762 = vand.u32 2147483647, %v1750
    %vm1763 = vcmp.eq.f32.partialorder %v1762, 8.507059e+37
    %v1764 = vand.u32 %v1750, 2147483648
    %v1765 = vor.u32 1.1754944e-38, %v1764
    %v1766 = vsel %vm1763, %v1765, %v1761
    %v1767 = vmul.f32 1.0, %v1766
    %v1768 = vrcp.pop %v1751
    %v1769 = vmul.f32 %v1751, %v1768
    %v1770 = vsub.f32 1.0, %v1769
    %v1771 = vmul.f32 %v1768, %v1770
    %v1772 = vadd.f32 %v1768, %v1771
    %vm1773 = vweird.f32 %v1751
    %vm1774 = vweird.f32 %v1768
    %vm1775 = vmor %vm1773, %vm1774
    %v1776 = vsel %vm1775, %v1768, %v1772
    %v1777 = vand.u32 2147483647, %v1751
    %vm1778 = vcmp.eq.f32.partialorder %v1777, 8.507059e+37
    %v1779 = vand.u32 %v1751, 2147483648
    %v1780 = vor.u32 1.1754944e-38, %v1779
    %v1781 = vsel %vm1778, %v1780, %v1776
    %v1782 = vmul.f32 1.0, %v1781
    %v1783 = vrcp.pop %v1752
    %v1784 = vmul.f32 %v1752, %v1783
    %v1785 = vsub.f32 1.0, %v1784
    %v1786 = vmul.f32 %v1783, %v1785
    %v1787 = vadd.f32 %v1783, %v1786
    %vm1788 = vweird.f32 %v1752
    %vm1789 = vweird.f32 %v1783
    %vm1790 = vmor %vm1788, %vm1789
    %v1791 = vsel %vm1790, %v1783, %v1787
    %v1792 = vand.u32 2147483647, %v1752
    %vm1793 = vcmp.eq.f32.partialorder %v1792, 8.507059e+37
    %v1794 = vand.u32 %v1752, 2147483648
    %v1795 = vor.u32 1.1754944e-38, %v1794
    %v1796 = vsel %vm1793, %v1795, %v1791
    %v1797 = vmul.f32 1.0, %v1796
    %v1798 = vadd.f32 %v1678, %v1721
    %v1799 = vadd.f32 %v1681, %v1724
    %v1800 = vadd.f32 %v1683, %v1727
    %v1801 = vxor.u32 %v1798, 2147483648
    %v1802 = vxor.u32 %v1799, 2147483648
    %v1803 = vxor.u32 %v1800, 2147483648
    %v1804 = vmul.f32 %v1801, 1.442695
    %v1805 = vpow.pop %v1804
    %v1806 = vmul.f32 %v1802, 1.442695
    %v1807 = vpow.pop %v1806
    %v1808 = vmul.f32 %v1803, 1.442695
    %v1809 = vpow.pop %v1808
    %v1810 = vadd.f32 %v1805, 1.0
    %v1811 = vadd.f32 %v1807, 1.0
    %v1812 = vadd.f32 %v1809, 1.0
    %v1813 = vrcp.pop %v1810
    %v1814 = vmul.f32 %v1810, %v1813
    %v1815 = vsub.f32 1.0, %v1814
    %v1816 = vmul.f32 %v1813, %v1815
    %v1817 = vadd.f32 %v1813, %v1816
    %vm1818 = vweird.f32 %v1810
    %vm1819 = vweird.f32 %v1813
    %vm1820 = vmor %vm1818, %vm1819
    %v1821 = vsel %vm1820, %v1813, %v1817
    %v1822 = vand.u32 2147483647, %v1810
    %vm1823 = vcmp.eq.f32.partialorder %v1822, 8.507059e+37
    %v1824 = vand.u32 %v1810, 2147483648
    %v1825 = vor.u32 1.1754944e-38, %v1824
    %v1826 = vsel %vm1823, %v1825, %v1821
    %v1827 = vmul.f32 1.0, %v1826
    %v1828 = vrcp.pop %v1811
    %v1829 = vmul.f32 %v1811, %v1828
    %v1830 = vsub.f32 1.0, %v1829
    %v1831 = vmul.f32 %v1828, %v1830
    %v1832 = vadd.f32 %v1828, %v1831
    %vm1833 = vweird.f32 %v1811
    %vm1834 = vweird.f32 %v1828
    %vm1835 = vmor %vm1833, %vm1834
    %v1836 = vsel %vm1835, %v1828, %v1832
    %v1837 = vand.u32 2147483647, %v1811
    %vm1838 = vcmp.eq.f32.partialorder %v1837, 8.507059e+37
    %v1839 = vand.u32 %v1811, 2147483648
    %v1840 = vor.u32 1.1754944e-38, %v1839
    %v1841 = vsel %vm1838, %v1840, %v1836
    %v1842 = vmul.f32 1.0, %v1841
    %v1843 = vrcp.pop %v1812
    %v1844 = vmul.f32 %v1812, %v1843
    %v1845 = vsub.f32 1.0, %v1844
    %v1846 = vmul.f32 %v1843, %v1845
    %v1847 = vadd.f32 %v1843, %v1846
    %vm1848 = vweird.f32 %v1812
    %vm1849 = vweird.f32 %v1843
    %vm1850 = vmor %vm1848, %vm1849
    %v1851 = vsel %vm1850, %v1843, %v1847
    %v1852 = vand.u32 2147483647, %v1812
    %vm1853 = vcmp.eq.f32.partialorder %v1852, 8.507059e+37
    %v1854 = vand.u32 %v1812, 2147483648
    %v1855 = vor.u32 1.1754944e-38, %v1854
    %v1856 = vsel %vm1853, %v1855, %v1851
    %v1857 = vmul.f32 1.0, %v1856
    %v1858 = vadd.f32 %v1730, %v394
    %v1859 = vadd.f32 %v1733, %v399
    %v1860 = vadd.f32 %v1736, %v404
    %v1861 = vmul.f32 %v1767, %v1858
    %v1862 = vmul.f32 %v1782, %v1859
    %v1863 = vmul.f32 %v1797, %v1860
    %v1864 = vadd.f32 %v1686, %v1861
    %v1865 = vadd.f32 %v1688, %v1862
    %v1866 = vadd.f32 %v1691, %v1863
    %v1867 = vtanh.pop %v1864
    %v1868 = vtanh.pop %v1865
    %v1869 = vtanh.pop %v1866
    %v1870 = vsub.f32 1.0, %v1827
    %v1871 = vsub.f32 1.0, %v1842
    %v1872 = vsub.f32 1.0, %v1857
    %v1873 = vmul.f32 %v1870, %v1867
    %v1874 = vmul.f32 %v1871, %v1868
    %v1875 = vmul.f32 %v1872, %v1869
    %v1876 = vmul.f32 %v1827, %v1596
    %v1877 = vmul.f32 %v1842, %v1597
    %v1878 = vmul.f32 %v1857, %v1598
    %v1879 = vadd.f32 %v1873, %v1876
    %v1880 = vadd.f32 %v1874, %v1877
    %v1881 = vadd.f32 %v1875, %v1878
    %s1882 = scalar_lea.vmem [#allocation2], 120
    %1883 = vst [vmem:[%s1882] sm:$0xff] %v1879
    %1884 = vst [vmem:[%s1882 + $0x8] sm:$0xff] %v1880
    %1885 = vst [vmem:[%s1882 + $0x10] sm:$0xff] %v1881
    %1886 = vmatpush.msra.mxu0 0.0
    %1887 = vmatpush.msra.mxu0 0.0
    %1888 = vmatpush.msra.mxu0 0.0
    %1889 = vmatpush.msra.mxu0 0.0
    %1890 = vmatpush.msra.mxu0 0.0
    %1891 = vmatpush.msra.mxu0 0.0
    %1892 = vmatpush.msra.mxu0 0.0
    %1893 = vmatpush.msra.mxu0 0.0
    %1894 = vmatpush.msra.mxu0 0.0
    %1895 = vmatpush.msra.mxu0 0.0
    %1896 = vmatpush.msra.mxu0 0.0
    %1897 = vmatpush.msra.mxu0 0.0
    %1898 = vmatpush.msra.mxu0 0.0
    %1899 = vmatpush.msra.mxu0 %v1881
    %1900 = vmatpush.msra.mxu0 %v1880
    %1901 = vmatpush.msra.mxu0 %v1879
    %1902 = vmatmul.f32.gmra.mxu0 %v449
    %v1903 = vpop.f32.mrf.mxu0
    %v1904 = vadd.f32 %v436, %v1903
    %1905 = vmatmul.f32.gmra.mxu0 %v452
    %v1906 = vpop.f32.mrf.mxu0
    %v1907 = vadd.f32 %v441, %v1906
    %1908 = vmatmul.f32.gmra.mxu0 %v455
    %v1909 = vpop.f32.mrf.mxu0
    %v1910 = vadd.f32 %v446, %v1909
    %1911 = vdwg.mxu0
    %v1912 = vtanh.pop %v1904
    %v1913 = vtanh.pop %v1907
    %v1914 = vtanh.pop %v1910
    %v1915 = vmul.f32 %v489, %v1912
    %v1916 = vmul.f32 %v494, %v1913
    %v1917 = vmul.f32 %v499, %v1914
    %v1918 = vadd.f32 %v1915, %v1916
    %v1919 = vadd.f32 %v1918, %v1917
    %v1920 = vrot.slane %v1919, 4
    %v1921 = vadd.f32 %v1919, %v1920
    %v1922 = vrot.slane %v1921, 2
    %v1923 = vadd.f32 %v1921, %v1922
    %v1924 = vrot.slane %v1923, 1
    %v1925 = vadd.f32 %v1923, %v1924
    %s1926 = scalar_lea.vmem [#allocation3], 5
    %1927 = vst [vmem:[%s1926] sm:$0x1] %v1925
    %s1928 = scalar_lea.vmem %s0, 72
    %v1929 = vld [vmem:[%s1928] sm:$0xf]
    %v1930 = vld [vmem:[%s1928 + $0x4] sm:$0xf]
    %v1931 = vld [vmem:[%s1928 + $0x8] sm:$0x3]
    %v1935 = vunpack.c.l.b16 %v1929
    %v1936 = vunpack.c.l.b16 %v1930
    %v1937 = vunpack.c.l.b16 %v1931
    %v1938 = vpack.c.b16 %v1936, %v1935
    %v1939 = vpack.c.b16 %v1937, %v1937
    %v1942 = vsel %vm162, %v1939, 0
    %1944 = vmatpush.bf16.msra.mxu0 0
    %1945 = vmatpush.bf16.msra.mxu0 0
    %1946 = vmatpush.bf16.msra.mxu0 0
    %1947 = vmatpush.bf16.msra.mxu0 0
    %1948 = vmatpush.bf16.msra.mxu0 0
    %1949 = vmatpush.bf16.msra.mxu0 0
    %1950 = vmatpush.bf16.msra.mxu0 %v1942
    %1951 = vmatpush.bf16.msra.mxu0 %v1938
    %1952 = vmatmul.bf16.gmra.mxu0 %v148
    %v1953 = vpop.f32.mrf.mxu0
    %v1954 = vadd.f32 %v72, %v1953
    %v1955 = vpop.f32.mrf.mxu0
    %v1956 = vadd.f32 %v77, %v1955
    %1957 = vmatmul.bf16.gmra.mxu0 %v151
    %v1958 = vpop.f32.mrf.mxu0
    %v1959 = vadd.f32 %v82, %v1958
    %v1960 = vpop.f32.mrf.mxu0
    %v1961 = vadd.f32 %v87, %v1960
    %1962 = vmatmul.bf16.gmra.mxu0 %v154
    %v1963 = vpop.f32.mrf.mxu0
    %v1964 = vadd.f32 %v92, %v1963
    %v1965 = vpop.f32.mrf.mxu0
    %v1966 = vadd.f32 %v97, %v1965
    %1967 = vmatmul.bf16.gmra.mxu0 %v157
    %v1968 = vpop.f32.mrf.mxu0
    %v1969 = vadd.f32 %v102, %v1968
    %v1970 = vpop.f32.mrf.mxu0
    %v1971 = vadd.f32 %v107, %v1970
    %1972 = vmatmul.bf16.gmra.mxu0 %v160
    %v1973 = vpop.f32.mrf.mxu0
    %v1974 = vadd.f32 %v112, %v1973
    %v1975 = vpop.f32.mrf.mxu0
    %1976 = vdwg.mxu0
    %1977 = vmatpush.msra.mxu0 0.0
    %1978 = vmatpush.msra.mxu0 0.0
    %1979 = vmatpush.msra.mxu0 0.0
    %1980 = vmatpush.msra.mxu0 0.0
    %1981 = vmatpush.msra.mxu0 0.0
    %1982 = vmatpush.msra.mxu0 0.0
    %1983 = vmatpush.msra.mxu0 0.0
    %1984 = vmatpush.msra.mxu0 0.0
    %1985 = vmatpush.msra.mxu0 0.0
    %1986 = vmatpush.msra.mxu0 0.0
    %1987 = vmatpush.msra.mxu0 0.0
    %1988 = vmatpush.msra.mxu0 0.0
    %1989 = vmatpush.msra.mxu0 0.0
    %1990 = vmatpush.msra.mxu0 %v1881
    %1991 = vmatpush.msra.mxu0 %v1880
    %1992 = vmatpush.msra.mxu0 %v1879
    %1993 = vmatmul.f32.gmra.mxu0 %v201
    %v1994 = vpop.f32.mrf.mxu0
    %v1995 = vadd.f32 0.0, %v1994
    %1996 = vmatmul.f32.gmra.mxu0 %v204
    %v1997 = vpop.f32.mrf.mxu0
    %v1998 = vadd.f32 0.0, %v1997
    %1999 = vmatmul.f32.gmra.mxu0 %v207
    %v2000 = vpop.f32.mrf.mxu0
    %v2001 = vadd.f32 0.0, %v2000
    %2002 = vmatmul.f32.gmra.mxu0 %v210
    %v2003 = vpop.f32.mrf.mxu0
    %v2004 = vadd.f32 0.0, %v2003
    %2005 = vmatmul.f32.gmra.mxu0 %v213
    %v2006 = vpop.f32.mrf.mxu0
    %v2007 = vadd.f32 0.0, %v2006
    %2008 = vmatmul.f32.gmra.mxu0 %v216
    %v2009 = vpop.f32.mrf.mxu0
    %v2010 = vadd.f32 0.0, %v2009
    %2011 = vmatmul.f32.gmra.mxu0 %v219
    %v2012 = vpop.f32.mrf.mxu0
    %v2013 = vadd.f32 0.0, %v2012
    %2014 = vmatmul.f32.gmra.mxu0 %v222
    %v2015 = vpop.f32.mrf.mxu0
    %v2016 = vadd.f32 0.0, %v2015
    %2017 = vmatmul.f32.gmra.mxu0 %v225
    %v2018 = vpop.f32.mrf.mxu0
    %v2019 = vadd.f32 0.0, %v2018
    %2020 = vdwg.mxu0
    %v2021 = vadd.f32 %v1954, %v1995
    %v2022 = vadd.f32 %v1956, %v1998
    %v2023 = vadd.f32 %v1959, %v2001
    %v2024 = vxor.u32 %v2021, 2147483648
    %v2025 = vxor.u32 %v2022, 2147483648
    %v2026 = vxor.u32 %v2023, 2147483648
    %v2027 = vmul.f32 %v2024, 1.442695
    %v2028 = vpow.pop %v2027
    %v2029 = vmul.f32 %v2025, 1.442695
    %v2030 = vpow.pop %v2029
    %v2031 = vmul.f32 %v2026, 1.442695
    %v2032 = vpow.pop %v2031
    %v2033 = vadd.f32 %v2028, 1.0
    %v2034 = vadd.f32 %v2030, 1.0
    %v2035 = vadd.f32 %v2032, 1.0
    %v2036 = vrcp.pop %v2033
    %v2037 = vmul.f32 %v2033, %v2036
    %v2038 = vsub.f32 1.0, %v2037
    %v2039 = vmul.f32 %v2036, %v2038
    %v2040 = vadd.f32 %v2036, %v2039
    %vm2041 = vweird.f32 %v2033
    %vm2042 = vweird.f32 %v2036
    %vm2043 = vmor %vm2041, %vm2042
    %v2044 = vsel %vm2043, %v2036, %v2040
    %v2045 = vand.u32 2147483647, %v2033
    %vm2046 = vcmp.eq.f32.partialorder %v2045, 8.507059e+37
    %v2047 = vand.u32 %v2033, 2147483648
    %v2048 = vor.u32 1.1754944e-38, %v2047
    %v2049 = vsel %vm2046, %v2048, %v2044
    %v2050 = vmul.f32 1.0, %v2049
    %v2051 = vrcp.pop %v2034
    %v2052 = vmul.f32 %v2034, %v2051
    %v2053 = vsub.f32 1.0, %v2052
    %v2054 = vmul.f32 %v2051, %v2053
    %v2055 = vadd.f32 %v2051, %v2054
    %vm2056 = vweird.f32 %v2034
    %vm2057 = vweird.f32 %v2051
    %vm2058 = vmor %vm2056, %vm2057
    %v2059 = vsel %vm2058, %v2051, %v2055
    %v2060 = vand.u32 2147483647, %v2034
    %vm2061 = vcmp.eq.f32.partialorder %v2060, 8.507059e+37
    %v2062 = vand.u32 %v2034, 2147483648
    %v2063 = vor.u32 1.1754944e-38, %v2062
    %v2064 = vsel %vm2061, %v2063, %v2059
    %v2065 = vmul.f32 1.0, %v2064
    %v2066 = vrcp.pop %v2035
    %v2067 = vmul.f32 %v2035, %v2066
    %v2068 = vsub.f32 1.0, %v2067
    %v2069 = vmul.f32 %v2066, %v2068
    %v2070 = vadd.f32 %v2066, %v2069
    %vm2071 = vweird.f32 %v2035
    %vm2072 = vweird.f32 %v2066
    %vm2073 = vmor %vm2071, %vm2072
    %v2074 = vsel %vm2073, %v2066, %v2070
    %v2075 = vand.u32 2147483647, %v2035
    %vm2076 = vcmp.eq.f32.partialorder %v2075, 8.507059e+37
    %v2077 = vand.u32 %v2035, 2147483648
    %v2078 = vor.u32 1.1754944e-38, %v2077
    %v2079 = vsel %vm2076, %v2078, %v2074
    %v2080 = vmul.f32 1.0, %v2079
    %v2081 = vadd.f32 %v1961, %v2004
    %v2082 = vadd.f32 %v1964, %v2007
    %v2083 = vadd.f32 %v1966, %v2010
    %v2084 = vxor.u32 %v2081, 2147483648
    %v2085 = vxor.u32 %v2082, 2147483648
    %v2086 = vxor.u32 %v2083, 2147483648
    %v2087 = vmul.f32 %v2084, 1.442695
    %v2088 = vpow.pop %v2087
    %v2089 = vmul.f32 %v2085, 1.442695
    %v2090 = vpow.pop %v2089
    %v2091 = vmul.f32 %v2086, 1.442695
    %v2092 = vpow.pop %v2091
    %v2093 = vadd.f32 %v2088, 1.0
    %v2094 = vadd.f32 %v2090, 1.0
    %v2095 = vadd.f32 %v2092, 1.0
    %v2096 = vrcp.pop %v2093
    %v2097 = vmul.f32 %v2093, %v2096
    %v2098 = vsub.f32 1.0, %v2097
    %v2099 = vmul.f32 %v2096, %v2098
    %v2100 = vadd.f32 %v2096, %v2099
    %vm2101 = vweird.f32 %v2093
    %vm2102 = vweird.f32 %v2096
    %vm2103 = vmor %vm2101, %vm2102
    %v2104 = vsel %vm2103, %v2096, %v2100
    %v2105 = vand.u32 2147483647, %v2093
    %vm2106 = vcmp.eq.f32.partialorder %v2105, 8.507059e+37
    %v2107 = vand.u32 %v2093, 2147483648
    %v2108 = vor.u32 1.1754944e-38, %v2107
    %v2109 = vsel %vm2106, %v2108, %v2104
    %v2110 = vmul.f32 1.0, %v2109
    %v2111 = vrcp.pop %v2094
    %v2112 = vmul.f32 %v2094, %v2111
    %v2113 = vsub.f32 1.0, %v2112
    %v2114 = vmul.f32 %v2111, %v2113
    %v2115 = vadd.f32 %v2111, %v2114
    %vm2116 = vweird.f32 %v2094
    %vm2117 = vweird.f32 %v2111
    %vm2118 = vmor %vm2116, %vm2117
    %v2119 = vsel %vm2118, %v2111, %v2115
    %v2120 = vand.u32 2147483647, %v2094
    %vm2121 = vcmp.eq.f32.partialorder %v2120, 8.507059e+37
    %v2122 = vand.u32 %v2094, 2147483648
    %v2123 = vor.u32 1.1754944e-38, %v2122
    %v2124 = vsel %vm2121, %v2123, %v2119
    %v2125 = vmul.f32 1.0, %v2124
    %v2126 = vrcp.pop %v2095
    %v2127 = vmul.f32 %v2095, %v2126
    %v2128 = vsub.f32 1.0, %v2127
    %v2129 = vmul.f32 %v2126, %v2128
    %v2130 = vadd.f32 %v2126, %v2129
    %vm2131 = vweird.f32 %v2095
    %vm2132 = vweird.f32 %v2126
    %vm2133 = vmor %vm2131, %vm2132
    %v2134 = vsel %vm2133, %v2126, %v2130
    %v2135 = vand.u32 2147483647, %v2095
    %vm2136 = vcmp.eq.f32.partialorder %v2135, 8.507059e+37
    %v2137 = vand.u32 %v2095, 2147483648
    %v2138 = vor.u32 1.1754944e-38, %v2137
    %v2139 = vsel %vm2136, %v2138, %v2134
    %v2140 = vmul.f32 1.0, %v2139
    %v2141 = vadd.f32 %v2013, %v394
    %v2142 = vadd.f32 %v2016, %v399
    %v2143 = vadd.f32 %v2019, %v404
    %v2144 = vmul.f32 %v2050, %v2141
    %v2145 = vmul.f32 %v2065, %v2142
    %v2146 = vmul.f32 %v2080, %v2143
    %v2147 = vadd.f32 %v1969, %v2144
    %v2148 = vadd.f32 %v1971, %v2145
    %v2149 = vadd.f32 %v1974, %v2146
    %v2150 = vtanh.pop %v2147
    %v2151 = vtanh.pop %v2148
    %v2152 = vtanh.pop %v2149
    %v2153 = vsub.f32 1.0, %v2110
    %v2154 = vsub.f32 1.0, %v2125
    %v2155 = vsub.f32 1.0, %v2140
    %v2156 = vmul.f32 %v2153, %v2150
    %v2157 = vmul.f32 %v2154, %v2151
    %v2158 = vmul.f32 %v2155, %v2152
    %v2159 = vmul.f32 %v2110, %v1879
    %v2160 = vmul.f32 %v2125, %v1880
    %v2161 = vmul.f32 %v2140, %v1881
    %v2162 = vadd.f32 %v2156, %v2159
    %v2163 = vadd.f32 %v2157, %v2160
    %v2164 = vadd.f32 %v2158, %v2161
    %s2165 = scalar_lea.vmem [#allocation2], 144
    %2166 = vst [vmem:[%s2165] sm:$0xff] %v2162
    %2167 = vst [vmem:[%s2165 + $0x8] sm:$0xff] %v2163
    %2168 = vst [vmem:[%s2165 + $0x10] sm:$0xff] %v2164
    %2169 = vmatpush.msra.mxu0 0.0
    %2170 = vmatpush.msra.mxu0 0.0
    %2171 = vmatpush.msra.mxu0 0.0
    %2172 = vmatpush.msra.mxu0 0.0
    %2173 = vmatpush.msra.mxu0 0.0
    %2174 = vmatpush.msra.mxu0 0.0
    %2175 = vmatpush.msra.mxu0 0.0
    %2176 = vmatpush.msra.mxu0 0.0
    %2177 = vmatpush.msra.mxu0 0.0
    %2178 = vmatpush.msra.mxu0 0.0
    %2179 = vmatpush.msra.mxu0 0.0
    %2180 = vmatpush.msra.mxu0 0.0
    %2181 = vmatpush.msra.mxu0 0.0
    %2182 = vmatpush.msra.mxu0 %v2164
    %2183 = vmatpush.msra.mxu0 %v2163
    %2184 = vmatpush.msra.mxu0 %v2162
    %2185 = vmatmul.f32.gmra.mxu0 %v449
    %v2186 = vpop.f32.mrf.mxu0
    %v2187 = vadd.f32 %v436, %v2186
    %2188 = vmatmul.f32.gmra.mxu0 %v452
    %v2189 = vpop.f32.mrf.mxu0
    %v2190 = vadd.f32 %v441, %v2189
    %2191 = vmatmul.f32.gmra.mxu0 %v455
    %v2192 = vpop.f32.mrf.mxu0
    %v2193 = vadd.f32 %v446, %v2192
    %2194 = vdwg.mxu0
    %v2195 = vtanh.pop %v2187
    %v2196 = vtanh.pop %v2190
    %v2197 = vtanh.pop %v2193
    %v2198 = vmul.f32 %v489, %v2195
    %v2199 = vmul.f32 %v494, %v2196
    %v2200 = vmul.f32 %v499, %v2197
    %v2201 = vadd.f32 %v2198, %v2199
    %v2202 = vadd.f32 %v2201, %v2200
    %v2203 = vrot.slane %v2202, 4
    %v2204 = vadd.f32 %v2202, %v2203
    %v2205 = vrot.slane %v2204, 2
    %v2206 = vadd.f32 %v2204, %v2205
    %v2207 = vrot.slane %v2206, 1
    %v2208 = vadd.f32 %v2206, %v2207
    %s2209 = scalar_lea.vmem [#allocation3], 6
    %2210 = vst [vmem:[%s2209] sm:$0x1] %v2208
    %s2211 = scalar_lea.vmem %s0, 84
    %v2212 = vld [vmem:[%s2211] sm:$0xf]
    %v2213 = vld [vmem:[%s2211 + $0x4] sm:$0xf]
    %v2214 = vld [vmem:[%s2211 + $0x8] sm:$0x3]
    %v2218 = vunpack.c.l.b16 %v2212
    %v2219 = vunpack.c.l.b16 %v2213
    %v2220 = vunpack.c.l.b16 %v2214
    %v2221 = vpack.c.b16 %v2219, %v2218
    %v2222 = vpack.c.b16 %v2220, %v2220
    %v2225 = vsel %vm162, %v2222, 0
    %2227 = vmatpush.bf16.msra.mxu0 0
    %2228 = vmatpush.bf16.msra.mxu0 0
    %2229 = vmatpush.bf16.msra.mxu0 0
    %2230 = vmatpush.bf16.msra.mxu0 0
    %2231 = vmatpush.bf16.msra.mxu0 0
    %2232 = vmatpush.bf16.msra.mxu0 0
    %2233 = vmatpush.bf16.msra.mxu0 %v2225
    %2234 = vmatpush.bf16.msra.mxu0 %v2221
    %2235 = vmatmul.bf16.gmra.mxu0 %v148
    %v2236 = vpop.f32.mrf.mxu0
    %v2237 = vadd.f32 %v72, %v2236
    %v2238 = vpop.f32.mrf.mxu0
    %v2239 = vadd.f32 %v77, %v2238
    %2240 = vmatmul.bf16.gmra.mxu0 %v151
    %v2241 = vpop.f32.mrf.mxu0
    %v2242 = vadd.f32 %v82, %v2241
    %v2243 = vpop.f32.mrf.mxu0
    %v2244 = vadd.f32 %v87, %v2243
    %2245 = vmatmul.bf16.gmra.mxu0 %v154
    %v2246 = vpop.f32.mrf.mxu0
    %v2247 = vadd.f32 %v92, %v2246
    %v2248 = vpop.f32.mrf.mxu0
    %v2249 = vadd.f32 %v97, %v2248
    %2250 = vmatmul.bf16.gmra.mxu0 %v157
    %v2251 = vpop.f32.mrf.mxu0
    %v2252 = vadd.f32 %v102, %v2251
    %v2253 = vpop.f32.mrf.mxu0
    %v2254 = vadd.f32 %v107, %v2253
    %2255 = vmatmul.bf16.gmra.mxu0 %v160
    %v2256 = vpop.f32.mrf.mxu0
    %v2257 = vadd.f32 %v112, %v2256
    %v2258 = vpop.f32.mrf.mxu0
    %2259 = vdwg.mxu0
    %2260 = vmatpush.msra.mxu0 0.0
    %2261 = vmatpush.msra.mxu0 0.0
    %2262 = vmatpush.msra.mxu0 0.0
    %2263 = vmatpush.msra.mxu0 0.0
    %2264 = vmatpush.msra.mxu0 0.0
    %2265 = vmatpush.msra.mxu0 0.0
    %2266 = vmatpush.msra.mxu0 0.0
    %2267 = vmatpush.msra.mxu0 0.0
    %2268 = vmatpush.msra.mxu0 0.0
    %2269 = vmatpush.msra.mxu0 0.0
    %2270 = vmatpush.msra.mxu0 0.0
    %2271 = vmatpush.msra.mxu0 0.0
    %2272 = vmatpush.msra.mxu0 0.0
    %2273 = vmatpush.msra.mxu0 %v2164
    %2274 = vmatpush.msra.mxu0 %v2163
    %2275 = vmatpush.msra.mxu0 %v2162
    %2276 = vmatmul.f32.gmra.mxu0 %v201
    %v2277 = vpop.f32.mrf.mxu0
    %v2278 = vadd.f32 0.0, %v2277
    %2279 = vmatmul.f32.gmra.mxu0 %v204
    %v2280 = vpop.f32.mrf.mxu0
    %v2281 = vadd.f32 0.0, %v2280
    %2282 = vmatmul.f32.gmra.mxu0 %v207
    %v2283 = vpop.f32.mrf.mxu0
    %v2284 = vadd.f32 0.0, %v2283
    %2285 = vmatmul.f32.gmra.mxu0 %v210
    %v2286 = vpop.f32.mrf.mxu0
    %v2287 = vadd.f32 0.0, %v2286
    %2288 = vmatmul.f32.gmra.mxu0 %v213
    %v2289 = vpop.f32.mrf.mxu0
    %v2290 = vadd.f32 0.0, %v2289
    %2291 = vmatmul.f32.gmra.mxu0 %v216
    %v2292 = vpop.f32.mrf.mxu0
    %v2293 = vadd.f32 0.0, %v2292
    %2294 = vmatmul.f32.gmra.mxu0 %v219
    %v2295 = vpop.f32.mrf.mxu0
    %v2296 = vadd.f32 0.0, %v2295
    %2297 = vmatmul.f32.gmra.mxu0 %v222
    %v2298 = vpop.f32.mrf.mxu0
    %v2299 = vadd.f32 0.0, %v2298
    %2300 = vmatmul.f32.gmra.mxu0 %v225
    %v2301 = vpop.f32.mrf.mxu0
    %v2302 = vadd.f32 0.0, %v2301
    %2303 = vdwg.mxu0
    %v2304 = vadd.f32 %v2237, %v2278
    %v2305 = vadd.f32 %v2239, %v2281
    %v2306 = vadd.f32 %v2242, %v2284
    %v2307 = vxor.u32 %v2304, 2147483648
    %v2308 = vxor.u32 %v2305, 2147483648
    %v2309 = vxor.u32 %v2306, 2147483648
    %v2310 = vmul.f32 %v2307, 1.442695
    %v2311 = vpow.pop %v2310
    %v2312 = vmul.f32 %v2308, 1.442695
    %v2313 = vpow.pop %v2312
    %v2314 = vmul.f32 %v2309, 1.442695
    %v2315 = vpow.pop %v2314
    %v2316 = vadd.f32 %v2311, 1.0
    %v2317 = vadd.f32 %v2313, 1.0
    %v2318 = vadd.f32 %v2315, 1.0
    %v2319 = vrcp.pop %v2316
    %v2320 = vmul.f32 %v2316, %v2319
    %v2321 = vsub.f32 1.0, %v2320
    %v2322 = vmul.f32 %v2319, %v2321
    %v2323 = vadd.f32 %v2319, %v2322
    %vm2324 = vweird.f32 %v2316
    %vm2325 = vweird.f32 %v2319
    %vm2326 = vmor %vm2324, %vm2325
    %v2327 = vsel %vm2326, %v2319, %v2323
    %v2328 = vand.u32 2147483647, %v2316
    %vm2329 = vcmp.eq.f32.partialorder %v2328, 8.507059e+37
    %v2330 = vand.u32 %v2316, 2147483648
    %v2331 = vor.u32 1.1754944e-38, %v2330
    %v2332 = vsel %vm2329, %v2331, %v2327
    %v2333 = vmul.f32 1.0, %v2332
    %v2334 = vrcp.pop %v2317
    %v2335 = vmul.f32 %v2317, %v2334
    %v2336 = vsub.f32 1.0, %v2335
    %v2337 = vmul.f32 %v2334, %v2336
    %v2338 = vadd.f32 %v2334, %v2337
    %vm2339 = vweird.f32 %v2317
    %vm2340 = vweird.f32 %v2334
    %vm2341 = vmor %vm2339, %vm2340
    %v2342 = vsel %vm2341, %v2334, %v2338
    %v2343 = vand.u32 2147483647, %v2317
    %vm2344 = vcmp.eq.f32.partialorder %v2343, 8.507059e+37
    %v2345 = vand.u32 %v2317, 2147483648
    %v2346 = vor.u32 1.1754944e-38, %v2345
    %v2347 = vsel %vm2344, %v2346, %v2342
    %v2348 = vmul.f32 1.0, %v2347
    %v2349 = vrcp.pop %v2318
    %v2350 = vmul.f32 %v2318, %v2349
    %v2351 = vsub.f32 1.0, %v2350
    %v2352 = vmul.f32 %v2349, %v2351
    %v2353 = vadd.f32 %v2349, %v2352
    %vm2354 = vweird.f32 %v2318
    %vm2355 = vweird.f32 %v2349
    %vm2356 = vmor %vm2354, %vm2355
    %v2357 = vsel %vm2356, %v2349, %v2353
    %v2358 = vand.u32 2147483647, %v2318
    %vm2359 = vcmp.eq.f32.partialorder %v2358, 8.507059e+37
    %v2360 = vand.u32 %v2318, 2147483648
    %v2361 = vor.u32 1.1754944e-38, %v2360
    %v2362 = vsel %vm2359, %v2361, %v2357
    %v2363 = vmul.f32 1.0, %v2362
    %v2364 = vadd.f32 %v2244, %v2287
    %v2365 = vadd.f32 %v2247, %v2290
    %v2366 = vadd.f32 %v2249, %v2293
    %v2367 = vxor.u32 %v2364, 2147483648
    %v2368 = vxor.u32 %v2365, 2147483648
    %v2369 = vxor.u32 %v2366, 2147483648
    %v2370 = vmul.f32 %v2367, 1.442695
    %v2371 = vpow.pop %v2370
    %v2372 = vmul.f32 %v2368, 1.442695
    %v2373 = vpow.pop %v2372
    %v2374 = vmul.f32 %v2369, 1.442695
    %v2375 = vpow.pop %v2374
    %v2376 = vadd.f32 %v2371, 1.0
    %v2377 = vadd.f32 %v2373, 1.0
    %v2378 = vadd.f32 %v2375, 1.0
    %v2379 = vrcp.pop %v2376
    %v2380 = vmul.f32 %v2376, %v2379
    %v2381 = vsub.f32 1.0, %v2380
    %v2382 = vmul.f32 %v2379, %v2381
    %v2383 = vadd.f32 %v2379, %v2382
    %vm2384 = vweird.f32 %v2376
    %vm2385 = vweird.f32 %v2379
    %vm2386 = vmor %vm2384, %vm2385
    %v2387 = vsel %vm2386, %v2379, %v2383
    %v2388 = vand.u32 2147483647, %v2376
    %vm2389 = vcmp.eq.f32.partialorder %v2388, 8.507059e+37
    %v2390 = vand.u32 %v2376, 2147483648
    %v2391 = vor.u32 1.1754944e-38, %v2390
    %v2392 = vsel %vm2389, %v2391, %v2387
    %v2393 = vmul.f32 1.0, %v2392
    %v2394 = vrcp.pop %v2377
    %v2395 = vmul.f32 %v2377, %v2394
    %v2396 = vsub.f32 1.0, %v2395
    %v2397 = vmul.f32 %v2394, %v2396
    %v2398 = vadd.f32 %v2394, %v2397
    %vm2399 = vweird.f32 %v2377
    %vm2400 = vweird.f32 %v2394
    %vm2401 = vmor %vm2399, %vm2400
    %v2402 = vsel %vm2401, %v2394, %v2398
    %v2403 = vand.u32 2147483647, %v2377
    %vm2404 = vcmp.eq.f32.partialorder %v2403, 8.507059e+37
    %v2405 = vand.u32 %v2377, 2147483648
    %v2406 = vor.u32 1.1754944e-38, %v2405
    %v2407 = vsel %vm2404, %v2406, %v2402
    %v2408 = vmul.f32 1.0, %v2407
    %v2409 = vrcp.pop %v2378
    %v2410 = vmul.f32 %v2378, %v2409
    %v2411 = vsub.f32 1.0, %v2410
    %v2412 = vmul.f32 %v2409, %v2411
    %v2413 = vadd.f32 %v2409, %v2412
    %vm2414 = vweird.f32 %v2378
    %vm2415 = vweird.f32 %v2409
    %vm2416 = vmor %vm2414, %vm2415
    %v2417 = vsel %vm2416, %v2409, %v2413
    %v2418 = vand.u32 2147483647, %v2378
    %vm2419 = vcmp.eq.f32.partialorder %v2418, 8.507059e+37
    %v2420 = vand.u32 %v2378, 2147483648
    %v2421 = vor.u32 1.1754944e-38, %v2420
    %v2422 = vsel %vm2419, %v2421, %v2417
    %v2423 = vmul.f32 1.0, %v2422
    %v2424 = vadd.f32 %v2296, %v394
    %v2425 = vadd.f32 %v2299, %v399
    %v2426 = vadd.f32 %v2302, %v404
    %v2427 = vmul.f32 %v2333, %v2424
    %v2428 = vmul.f32 %v2348, %v2425
    %v2429 = vmul.f32 %v2363, %v2426
    %v2430 = vadd.f32 %v2252, %v2427
    %v2431 = vadd.f32 %v2254, %v2428
    %v2432 = vadd.f32 %v2257, %v2429
    %v2433 = vtanh.pop %v2430
    %v2434 = vtanh.pop %v2431
    %v2435 = vtanh.pop %v2432
    %v2436 = vsub.f32 1.0, %v2393
    %v2437 = vsub.f32 1.0, %v2408
    %v2438 = vsub.f32 1.0, %v2423
    %v2439 = vmul.f32 %v2436, %v2433
    %v2440 = vmul.f32 %v2437, %v2434
    %v2441 = vmul.f32 %v2438, %v2435
    %v2442 = vmul.f32 %v2393, %v2162
    %v2443 = vmul.f32 %v2408, %v2163
    %v2444 = vmul.f32 %v2423, %v2164
    %v2445 = vadd.f32 %v2439, %v2442
    %v2446 = vadd.f32 %v2440, %v2443
    %v2447 = vadd.f32 %v2441, %v2444
    %s2448 = scalar_lea.vmem [#allocation2], 168
    %2449 = vst [vmem:[%s2448] sm:$0xff] %v2445
    %2450 = vst [vmem:[%s2448 + $0x8] sm:$0xff] %v2446
    %2451 = vst [vmem:[%s2448 + $0x10] sm:$0xff] %v2447
    %2452 = vmatpush.msra.mxu0 0.0
    %2453 = vmatpush.msra.mxu0 0.0
    %2454 = vmatpush.msra.mxu0 0.0
    %2455 = vmatpush.msra.mxu0 0.0
    %2456 = vmatpush.msra.mxu0 0.0
    %2457 = vmatpush.msra.mxu0 0.0
    %2458 = vmatpush.msra.mxu0 0.0
    %2459 = vmatpush.msra.mxu0 0.0
    %2460 = vmatpush.msra.mxu0 0.0
    %2461 = vmatpush.msra.mxu0 0.0
    %2462 = vmatpush.msra.mxu0 0.0
    %2463 = vmatpush.msra.mxu0 0.0
    %2464 = vmatpush.msra.mxu0 0.0
    %2465 = vmatpush.msra.mxu0 %v2447
    %2466 = vmatpush.msra.mxu0 %v2446
    %2467 = vmatpush.msra.mxu0 %v2445
    %2468 = vmatmul.f32.gmra.mxu0 %v449
    %v2469 = vpop.f32.mrf.mxu0
    %v2470 = vadd.f32 %v436, %v2469
    %2471 = vmatmul.f32.gmra.mxu0 %v452
    %v2472 = vpop.f32.mrf.mxu0
    %v2473 = vadd.f32 %v441, %v2472
    %2474 = vmatmul.f32.gmra.mxu0 %v455
    %v2475 = vpop.f32.mrf.mxu0
    %v2476 = vadd.f32 %v446, %v2475
    %2477 = vdwg.mxu0
    %v2478 = vtanh.pop %v2470
    %v2479 = vtanh.pop %v2473
    %v2480 = vtanh.pop %v2476
    %v2481 = vmul.f32 %v489, %v2478
    %v2482 = vmul.f32 %v494, %v2479
    %v2483 = vmul.f32 %v499, %v2480
    %v2484 = vadd.f32 %v2481, %v2482
    %v2485 = vadd.f32 %v2484, %v2483
    %v2486 = vrot.slane %v2485, 4
    %v2487 = vadd.f32 %v2485, %v2486
    %v2488 = vrot.slane %v2487, 2
    %v2489 = vadd.f32 %v2487, %v2488
    %v2490 = vrot.slane %v2489, 1
    %v2491 = vadd.f32 %v2489, %v2490
    %s2492 = scalar_lea.vmem [#allocation3], 7
    %2493 = vst [vmem:[%s2492] sm:$0x1] %v2491
    %v2494 = vld [vmem:[#allocation3] sm:$0x1]
    %v2495 = vld [vmem:[#allocation3 + $0x1] sm:$0x1]
    %v2496 = vld [vmem:[#allocation3 + $0x2] sm:$0x1]
    %v2497 = vld [vmem:[#allocation3 + $0x3] sm:$0x1]
    %v2498 = vld [vmem:[#allocation3 + $0x4] sm:$0x1]
    %v2499 = vld [vmem:[#allocation3 + $0x5] sm:$0x1]
    %v2500 = vld [vmem:[#allocation3 + $0x6] sm:$0x1]
    %v2501 = vld [vmem:[#allocation3 + $0x7] sm:$0x1]
    %v2502 = vlaneseq
    %vm2503 = vcmp.ge.s32.totalorder %v2502, 0
    %vm2504 = vcmp.lt.s32.totalorder %v2502, 128
    %vm2505 = vmand %vm2503, %vm2504
    %v2506 = vsel %vm2505, %v2494, -inf
    %v2507 = vsel %vm2505, %v2495, -inf
    %v2508 = vsel %vm2505, %v2496, -inf
    %v2509 = vsel %vm2505, %v2497, -inf
    %v2510 = vsel %vm2505, %v2498, -inf
    %v2511 = vmax.f32 %v2506, %v2510
    %v2512 = vsel %vm2505, %v2499, -inf
    %v2513 = vmax.f32 %v2507, %v2512
    %v2514 = vsel %vm2505, %v2500, -inf
    %v2515 = vmax.f32 %v2508, %v2514
    %v2516 = vsel %vm2505, %v2501, -inf
    %v2517 = vmax.f32 %v2509, %v2516
    %v2518 = vmax.f32 %v2511, %v2513
    %v2519 = vmax.f32 %v2515, %v2517
    %v2520 = vmax.f32 %v2518, %v2519
    %v2521 = vsub.f32 %v2494, %v2520
    %v2522 = vsub.f32 %v2495, %v2520
    %v2523 = vsub.f32 %v2496, %v2520
    %v2524 = vsub.f32 %v2497, %v2520
    %v2525 = vsub.f32 %v2498, %v2520
    %v2526 = vsub.f32 %v2499, %v2520
    %v2527 = vsub.f32 %v2500, %v2520
    %v2528 = vsub.f32 %v2501, %v2520
    %v2529 = vmul.f32 %v2521, 1.442695
    %v2530 = vpow.pop %v2529
    %v2531 = vmul.f32 %v2522, 1.442695
    %v2532 = vpow.pop %v2531
    %v2533 = vmul.f32 %v2523, 1.442695
    %v2534 = vpow.pop %v2533
    %v2535 = vmul.f32 %v2524, 1.442695
    %v2536 = vpow.pop %v2535
    %v2537 = vmul.f32 %v2525, 1.442695
    %v2538 = vpow.pop %v2537
    %v2539 = vmul.f32 %v2526, 1.442695
    %v2540 = vpow.pop %v2539
    %v2541 = vmul.f32 %v2527, 1.442695
    %v2542 = vpow.pop %v2541
    %v2543 = vmul.f32 %v2528, 1.442695
    %v2544 = vpow.pop %v2543
    %vm2545 = vcmask 1040384
    %v2546 = vsel %vm2545, %v2530, 0.0
    %v2547 = vsel %vm2545, %v2532, 0.0
    %v2548 = vadd.f32 %v2546, %v2547
    %v2549 = vsel %vm2545, %v2534, 0.0
    %v2550 = vadd.f32 %v2548, %v2549
    %v2551 = vsel %vm2545, %v2536, 0.0
    %v2552 = vadd.f32 %v2550, %v2551
    %v2553 = vsel %vm2545, %v2538, 0.0
    %v2554 = vadd.f32 %v2552, %v2553
    %v2555 = vsel %vm2545, %v2540, 0.0
    %v2556 = vadd.f32 %v2554, %v2555
    %v2557 = vsel %vm2545, %v2542, 0.0
    %v2558 = vadd.f32 %v2556, %v2557
    %v2559 = vsel %vm2545, %v2544, 0.0
    %v2560 = vadd.f32 %v2558, %v2559
    %v2561 = vrcp.pop %v2560
    %v2562 = vmul.f32 %v2560, %v2561
    %v2563 = vsub.f32 1.0, %v2562
    %v2564 = vmul.f32 %v2561, %v2563
    %v2565 = vadd.f32 %v2561, %v2564
    %vm2566 = vweird.f32 %v2560
    %vm2567 = vweird.f32 %v2561
    %vm2568 = vmor %vm2566, %vm2567
    %v2569 = vsel %vm2568, %v2561, %v2565
    %v2570 = vand.u32 2147483647, %v2560
    %vm2571 = vcmp.eq.f32.partialorder %v2570, 8.507059e+37
    %v2572 = vand.u32 %v2560, 2147483648
    %v2573 = vor.u32 1.1754944e-38, %v2572
    %v2574 = vsel %vm2571, %v2573, %v2569
    %v2575 = vmul.f32 %v2530, %v2574
    %v2576 = vmul.f32 %v2532, %v2574
    %v2577 = vmul.f32 %v2534, %v2574
    %v2578 = vmul.f32 %v2536, %v2574
    %v2579 = vmul.f32 %v2538, %v2574
    %v2580 = vmul.f32 %v2540, %v2574
    %v2581 = vmul.f32 %v2542, %v2574
    %v2582 = vmul.f32 %v2544, %v2574
    %v2583 = vld [vmem:[#allocation2] sm:$0xff]
    %v2584 = vld [vmem:[#allocation2 + $0x8] sm:$0xff]
    %v2585 = vld [vmem:[#allocation2 + $0x10] sm:$0xff]
    %v2586 = vld [vmem:[#allocation2 + $0x18] sm:$0xff]
    %v2587 = vld [vmem:[#allocation2 + $0x20] sm:$0xff]
    %v2588 = vld [vmem:[#allocation2 + $0x28] sm:$0xff]
    %v2589 = vld [vmem:[#allocation2 + $0x30] sm:$0xff]
    %v2590 = vld [vmem:[#allocation2 + $0x38] sm:$0xff]
    %v2591 = vld [vmem:[#allocation2 + $0x40] sm:$0xff]
    %v2592 = vld [vmem:[#allocation2 + $0x48] sm:$0xff]
    %v2593 = vld [vmem:[#allocation2 + $0x50] sm:$0xff]
    %v2594 = vld [vmem:[#allocation2 + $0x58] sm:$0xff]
    %v2595 = vld [vmem:[#allocation2 + $0x60] sm:$0xff]
    %v2596 = vld [vmem:[#allocation2 + $0x68] sm:$0xff]
    %v2597 = vld [vmem:[#allocation2 + $0x70] sm:$0xff]
    %v2598 = vld [vmem:[#allocation2 + $0x78] sm:$0xff]
    %v2599 = vld [vmem:[#allocation2 + $0x80] sm:$0xff]
    %v2600 = vld [vmem:[#allocation2 + $0x88] sm:$0xff]
    %v2601 = vld [vmem:[#allocation2 + $0x90] sm:$0xff]
    %v2602 = vld [vmem:[#allocation2 + $0x98] sm:$0xff]
    %v2603 = vld [vmem:[#allocation2 + $0xa0] sm:$0xff]
    %v2604 = vld [vmem:[#allocation2 + $0xa8] sm:$0xff]
    %v2605 = vld [vmem:[#allocation2 + $0xb0] sm:$0xff]
    %v2606 = vld [vmem:[#allocation2 + $0xb8] sm:$0xff]
    %v2615 = vperm.slane %v2575, 0
    %v2616 = vperm.slane %v2576, 0
    %v2617 = vperm.slane %v2577, 0
    %v2618 = vperm.slane %v2578, 0
    %v2619 = vperm.slane %v2579, 0
    %v2620 = vperm.slane %v2580, 0
    %v2621 = vperm.slane %v2581, 0
    %v2622 = vperm.slane %v2582, 0
    %v2631 = vmul.f32 %v2615, %v2583
    %v2632 = vmul.f32 %v2615, %v2584
    %v2633 = vmul.f32 %v2615, %v2585
    %v2634 = vmul.f32 %v2616, %v2586
    %v2635 = vmul.f32 %v2616, %v2587
    %v2636 = vmul.f32 %v2616, %v2588
    %v2637 = vmul.f32 %v2617, %v2589
    %v2638 = vmul.f32 %v2617, %v2590
    %v2639 = vmul.f32 %v2617, %v2591
    %v2640 = vmul.f32 %v2618, %v2592
    %v2641 = vmul.f32 %v2618, %v2593
    %v2642 = vmul.f32 %v2618, %v2594
    %v2643 = vmul.f32 %v2619, %v2595
    %v2644 = vmul.f32 %v2619, %v2596
    %v2645 = vmul.f32 %v2619, %v2597
    %v2646 = vmul.f32 %v2620, %v2598
    %v2647 = vmul.f32 %v2620, %v2599
    %v2648 = vmul.f32 %v2620, %v2600
    %v2649 = vmul.f32 %v2621, %v2601
    %v2650 = vmul.f32 %v2621, %v2602
    %v2651 = vmul.f32 %v2621, %v2603
    %v2652 = vmul.f32 %v2622, %v2604
    %v2653 = vmul.f32 %v2622, %v2605
    %v2654 = vmul.f32 %v2622, %v2606
    %v2655 = vadd.f32 %v2631, %v2634
    %v2656 = vadd.f32 %v2655, %v2637
    %v2657 = vadd.f32 %v2656, %v2640
    %v2658 = vadd.f32 %v2657, %v2643
    %v2659 = vadd.f32 %v2658, %v2646
    %v2660 = vadd.f32 %v2659, %v2649
    %v2661 = vadd.f32 %v2660, %v2652
    %v2662 = vadd.f32 %v2632, %v2635
    %v2663 = vadd.f32 %v2662, %v2638
    %v2664 = vadd.f32 %v2663, %v2641
    %v2665 = vadd.f32 %v2664, %v2644
    %v2666 = vadd.f32 %v2665, %v2647
    %v2667 = vadd.f32 %v2666, %v2650
    %v2668 = vadd.f32 %v2667, %v2653
    %v2669 = vadd.f32 %v2633, %v2636
    %v2670 = vadd.f32 %v2669, %v2639
    %v2671 = vadd.f32 %v2670, %v2642
    %v2672 = vadd.f32 %v2671, %v2645
    %v2673 = vadd.f32 %v2672, %v2648
    %v2674 = vadd.f32 %v2673, %v2651
    %v2675 = vadd.f32 %v2674, %v2654
    %2677 = vset.pattern.permute.xlu0 0
    %2678 = vperm.xlu0 %2677, %v62
    %v2679 = vpop.permute.xlu0 %2678
    %2682 = vset.pattern.permute.xlu0 0
    %2683 = vperm.xlu0 %2682, %v63
    %v2684 = vpop.permute.xlu0 %2683
    %2687 = vset.pattern.permute.xlu0 0
    %2688 = vperm.xlu0 %2687, %v64
    %v2689 = vpop.permute.xlu0 %2688
    %v2692 = vsel %vm199, %v40, 0
    %v2695 = vsel %vm199, %v41, 0
    %v2698 = vsel %vm199, %v42, 0
    %2700 = vmatpush.msra.mxu0 0.0
    %2701 = vmatpush.msra.mxu0 0.0
    %2702 = vmatpush.msra.mxu0 0.0
    %2703 = vmatpush.msra.mxu0 0.0
    %2704 = vmatpush.msra.mxu0 0.0
    %2705 = vmatpush.msra.mxu0 0.0
    %2706 = vmatpush.msra.mxu0 0.0
    %2707 = vmatpush.msra.mxu0 0.0
    %2708 = vmatpush.msra.mxu0 0.0
    %2709 = vmatpush.msra.mxu0 0.0
    %2710 = vmatpush.msra.mxu0 0.0
    %2711 = vmatpush.msra.mxu0 0.0
    %2712 = vmatpush.msra.mxu0 0.0
    %2713 = vmatpush.msra.mxu0 %v2675
    %2714 = vmatpush.msra.mxu0 %v2668
    %2715 = vmatpush.msra.mxu0 %v2661
    %2716 = vmatmul.f32.gmra.mxu0 %v2692
    %v2717 = vpop.f32.mrf.mxu0
    %v2718 = vadd.f32 %v2679, %v2717
    %2719 = vmatmul.f32.gmra.mxu0 %v2695
    %v2720 = vpop.f32.mrf.mxu0
    %v2721 = vadd.f32 %v2684, %v2720
    %2722 = vmatmul.f32.gmra.mxu0 %v2698
    %v2723 = vpop.f32.mrf.mxu0
    %v2724 = vadd.f32 %v2689, %v2723
    %2725 = vdwg.mxu0
    %v2726 = vmax.f32 %v2718, 0.0
    %v2727 = vmax.f32 %v2721, 0.0
    %v2728 = vmax.f32 %v2724, 0.0
    %2730 = vset.pattern.permute.xlu0 0
    %2731 = vperm.xlu0 %2730, %v65
    %v2732 = vpop.permute.xlu0 %2731
    %v2735 = vsel %vm199, %v43, 0
    %2737 = vmatpush.msra.mxu0 0.0
    %2738 = vmatpush.msra.mxu0 0.0
    %2739 = vmatpush.msra.mxu0 0.0
    %2740 = vmatpush.msra.mxu0 0.0
    %2741 = vmatpush.msra.mxu0 0.0
    %2742 = vmatpush.msra.mxu0 0.0
    %2743 = vmatpush.msra.mxu0 0.0
    %2744 = vmatpush.msra.mxu0 0.0
    %2745 = vmatpush.msra.mxu0 0.0
    %2746 = vmatpush.msra.mxu0 0.0
    %2747 = vmatpush.msra.mxu0 0.0
    %2748 = vmatpush.msra.mxu0 0.0
    %2749 = vmatpush.msra.mxu0 0.0
    %2750 = vmatpush.msra.mxu0 %v2728
    %2751 = vmatpush.msra.mxu0 %v2727
    %2752 = vmatpush.msra.mxu0 %v2726
    %2753 = vmatmul.f32.gmra.mxu0 %v2735
    %v2754 = vpop.f32.mrf.mxu0
    %v2755 = vadd.f32 %v2732, %v2754
    %2756 = vdwg.mxu0
    %2757 = vst [vmem:[#allocation4] sm:$0x3f] %v2755
    // Predicated region
    $region18: #{tpu_custom_call.1} parent=1 // pred_check
      _
    $region19: #{tpu_custom_call.1} parent=1 // pred_check_branch
      %2759 = sbr.rel (0) target = $region21
    $region20: #{tpu_custom_call.1} parent=1 // pred_region
      %2761 = vsyncadd [#allocation5], 0
      %s2763 = sshll.u32 [#allocation4], 4
      %s2764 = int_to_ptr.vmem [resolvable:$true] %s2763
      %s2765 = sshll.u32 %s4, 4
      %s2766 = int_to_ptr.hbm [resolvable:$true] %s2765
      %2768 = dma.vmem_to_hbm [thread:$0]  %s2764, 128, %s2766, [#allocation5]
    $region21: #{tpu_custom_call.1} parent=1 // pred_fallthru
      _
    // Predicated region
    $region22: #{tpu_custom_call.1} parent=1 // pred_check
      _
    $region23: #{tpu_custom_call.1} parent=1 // pred_check_branch
      %2770 = sbr.rel (0) target = $region25
    $region24: #{tpu_custom_call.1} parent=1 // pred_region
      %2772 = dma.done [#allocation5], 128
    $region25: #{tpu_custom_call.1} parent=1 // pred_fallthru
      _
    %2773 = vsyncpa [#allocation5], 1

</llo_original>
